<compile_context>
chip_gen: v5e
topology: v5e:2x2
jax: 0.10.0
libtpu: 0.0.40
codegen_flags: <defaults>
</compile_context>

<pallas_src>
import functools

import jax
import jax.numpy as jnp
from jax import lax
from jax.experimental import pallas as pl
from jax.experimental.pallas import tpu as pltpu

# Model hyperparameters (small, consistent with the module's forward).
VOCAB_SIZE = 64
EMBED_DIM = 32
HIDDEN_DIM = 32
NUM_LAYERS = 2
PAD_IDX = 0
BATCH = 2
SEQ = 8
EPS = 1e-5
BPAD = 8            # batch padded to a full (8, .) sublane tile
FC_PAD = 128        # lane-dense padded FC output width (multiple of 128)


# ---------------------------------------------------------------------------
# The fused kernel.
# Layout: activations are flat time-major blocks of BPAD=8 rows
# (row = t*8 + b, rows with b >= bsz are padding), channels on the lane axis.
# ---------------------------------------------------------------------------
def _poetry_kernel(ids_ref, valid_ref, fmask_ref, emb_ref, bn1g_ref, bn1b_ref,
                   win1_ref, whh1_ref, bias1_ref,
                   win2_ref, whh2_ref, bias2_ref,
                   bn2g_ref, bn2b_ref, watt_ref, batt_ref,
                   wfc_ref, bfc_ref,
                   out_ref, scr1, scr2, *, seq, bsz, hid):
    f32 = jnp.float32
    n = seq * BPAD
    h2 = 2 * hid

    valid = valid_ref[...]                       # (N, 1) 1.0 on real rows
    count = f32(seq * bsz)

    # ---- embedding lookup as a one-hot MXU matmul --------------------------
    ids = ids_ref[...]                                               # (N, 1) int32
    vocab = emb_ref.shape[0]
    onehot = (lax.broadcasted_iota(jnp.int32, (n, vocab), 1) == ids).astype(f32)
    emb = jnp.dot(onehot, emb_ref[...], preferred_element_type=f32)  # (N, E)

    # ---- BatchNorm1d (batch statistics over the seq*bsz REAL rows only) ----
    def batch_norm(x, gamma, beta):
        mu = jnp.sum(x * valid, axis=0, keepdims=True) / count
        var = jnp.sum(jnp.square(x - mu) * valid, axis=0, keepdims=True) / count
        return (x - mu) * lax.rsqrt(var + EPS) * gamma + beta

    x0 = batch_norm(emb, bn1g_ref[...], bn1b_ref[...])               # (N, E)

    # forward-lane selector (1.0 on the fwd half of each gate block)
    fmask = fmask_ref[...]                                           # (1, 8H) f32

    # ---- fused bidirectional LSTM layer ------------------------------------
    # Weight columns gate-major: [i_f i_b f_f f_b g_f g_b o_f o_b]; the
    # hidden/cell state is [h_fwd | h_bwd] of shape (8, 2H).
    def bidir_lstm(x_in, win_ref_, whh_ref_, bias_ref_, out_scr):
        # one dense hoisted input projection for BOTH directions
        gx_all = jnp.dot(x_in, win_ref_[...], preferred_element_type=f32)   # (N, 8H)
        # one-shot aligned time reversal of the 8-row blocks
        gx_rev = jnp.concatenate(
            [gx_all[(seq - 1 - t) * BPAD:(seq - t) * BPAD, :] for t in range(seq)],
            axis=0)
        # fwd lanes read block t, bwd lanes read block S-1-t; bias folded in.
        gx = gx_rev + fmask * (gx_all - gx_rev) + bias_ref_[...]            # (N, 8H)

        whh = whh_ref_[...]                                                  # (2H, 8H)
        # TODO(synk): keep Whh resident in the MXU across the unrolled loop
        # (pltpu.matmul_push_rhs / matmul_acc_lhs / matmul_pop) instead of
        # re-pushing it with jnp.dot on every serial step.
        # TODO(synk): optionally cast h/whh to bf16 (preferred_element_type
        # stays f32) for v5e/v6e once validated against an f32 reference.
        h = jnp.zeros((BPAD, h2), f32)
        c = jnp.zeros((BPAD, h2), f32)
        for t in range(seq):                       # fully unrolled recurrence
            rt = slice(t * BPAD, (t + 1) * BPAD)              # aligned 8-row block
            rrt = slice((seq - 1 - t) * BPAD, (seq - t) * BPAD)
            gates = gx[rt, :] + jnp.dot(h, whh, preferred_element_type=f32)  # (8, 8H)
            i_g = jax.nn.sigmoid(gates[:, 0 * h2:1 * h2])
            f_g = jax.nn.sigmoid(gates[:, 1 * h2:2 * h2])
            g_g = jnp.tanh(gates[:, 2 * h2:3 * h2])
            o_g = jax.nn.sigmoid(gates[:, 3 * h2:4 * h2])
            c = f_g * c + i_g * g_g
            h = o_g * jnp.tanh(c)
            # aligned per-step stores straight into VMEM scratch
            out_scr[rt, 0:hid] = h[:, 0:hid]                  # fwd hidden @ time t
            out_scr[rrt, hid:h2] = h[:, hid:h2]               # bwd hidden @ time S-1-t
        return out_scr[...]                                   # (N, 2H)

    x1 = bidir_lstm(x0, win1_ref, whh1_ref, bias1_ref, scr1)
    # TODO(synk): nn.LSTM inter-layer dropout (p=0.3) is identity (eval mode).
    x2 = bidir_lstm(x1, win2_ref, whh2_ref, bias2_ref, scr2)

    # ---- BatchNorm1d over (N, 2H) ------------------------------------------
    x3 = batch_norm(x2, bn2g_ref[...], bn2b_ref[...])                # (N, 2H)

    # ---- attention: softmax over seq per batch row (padded rows are
    # independent softmax groups; their rows are sliced off after the FC) ----
    scores = (jnp.sum(x3 * watt_ref[...], axis=1, keepdims=True)
              + batt_ref[...])                                       # (N, 1)
    blk = [slice(t * BPAD, (t + 1) * BPAD) for t in range(seq)]
    sc = [scores[blk[t], :] for t in range(seq)]                     # S x (8, 1)
    m = sc[0]
    for t in range(1, seq):
        m = jnp.maximum(m, sc[t])
    es = [jnp.exp(sc[t] - m) for t in range(seq)]
    den = es[0]
    ctx = es[0] * x3[blk[0], :]
    for t in range(1, seq):
        den = den + es[t]
        ctx = ctx + es[t] * x3[blk[t], :]
    context = ctx / den                                              # (8, 2H)
    # TODO(synk): nn.Dropout(0.3) on context is identity (eval mode).

    # ---- final FC, lane-padded output store ---------------------------------
    out_ref[...] = (jnp.dot(context, wfc_ref[...], preferred_element_type=f32)
                    + bfc_ref[...])                                  # (8, FC_PAD)


# ---------------------------------------------------------------------------
# Weight preparation: gate-major fused bidirectional matrices.
# PyTorch layout: w_ih (4H, Din), w_hh (4H, H), gate order i, f, g, o.
# Fused column order: [i_f i_b f_f f_b g_f g_b o_f o_b]  (8H lanes).
# ---------------------------------------------------------------------------
def _prep_bidir_weights(pf, pb):
    h = HIDDEN_DIM

    def gate_blocks(w):            # (4H, Din) -> [(Din, H)] * 4 in i,f,g,o order
        return [jnp.transpose(w[k * h:(k + 1) * h, :]) for k in range(4)]

    bf = gate_blocks(pf["w_ih"])
    bb = gate_blocks(pb["w_ih"])
    # one dense input projection covering both directions (no zero halves)
    w_in = jnp.concatenate([m for k in range(4) for m in (bf[k], bb[k])], axis=1)

    zh = jnp.zeros((h, h), jnp.float32)
    hf = gate_blocks(pf["w_hh"])
    hb = gate_blocks(pb["w_hh"])
    top = jnp.concatenate([m for k in range(4) for m in (hf[k], zh)], axis=1)  # rows = h_fwd
    bot = jnp.concatenate([m for k in range(4) for m in (zh, hb[k])], axis=1)  # rows = h_bwd
    w_hh = jnp.concatenate([top, bot], axis=0)                                 # (2H, 8H)

    cf = pf["b_ih"] + pf["b_hh"]
    cb = pb["b_ih"] + pb["b_hh"]
    bias = jnp.concatenate([v for k in range(4)
                            for v in (cf[k * h:(k + 1) * h], cb[k * h:(k + 1) * h])])
    return w_in, w_hh, bias.reshape(1, 8 * h)


# ---------------------------------------------------------------------------
# Parameters (deterministic synthetic init; shapes match PoetryRNN.__init__).
# ---------------------------------------------------------------------------
def init_params(key):
    keys = jax.random.split(key, 64)
    it = iter(keys)

    def p(shape, scale=0.1):
        return scale * jax.random.normal(next(it), shape, dtype=jnp.float32)

    params = {}
    emb = p((VOCAB_SIZE, EMBED_DIM))
    params["embedding"] = emb.at[PAD_IDX].set(0.0)        # padding_idx row = 0
    params["bn_emb_gamma"] = jnp.ones((EMBED_DIM,), jnp.float32)
    params["bn_emb_beta"] = jnp.zeros((EMBED_DIM,), jnp.float32)

    lstm = []
    for layer in range(NUM_LAYERS):
        in_dim = EMBED_DIM if layer == 0 else 2 * HIDDEN_DIM
        per_dir = []
        for _direction in range(2):                        # forward, backward
            per_dir.append(dict(
                w_ih=p((4 * HIDDEN_DIM, in_dim)),
                w_hh=p((4 * HIDDEN_DIM, HIDDEN_DIM)),
                b_ih=p((4 * HIDDEN_DIM,)),
                b_hh=p((4 * HIDDEN_DIM,)),
            ))
        lstm.append(per_dir)
    params["lstm"] = lstm

    params["bn_lstm_gamma"] = jnp.ones((2 * HIDDEN_DIM,), jnp.float32)
    params["bn_lstm_beta"] = jnp.zeros((2 * HIDDEN_DIM,), jnp.float32)
    params["w_att"] = p((1, 2 * HIDDEN_DIM))
    params["b_att"] = p((1,))
    params["w_fc"] = p((VOCAB_SIZE, 2 * HIDDEN_DIM))
    params["b_fc"] = p((VOCAB_SIZE,))
    return params


# ---------------------------------------------------------------------------
# Full forward pass: a single fused pallas_call.
# ---------------------------------------------------------------------------
def poetry_rnn_forward(params, x_tokens):
    bsz, seq = x_tokens.shape
    assert bsz <= BPAD
    n = seq * BPAD

    # time-major, batch padded to 8 sublanes (padded rows use PAD_IDX).
    ids = jnp.full((seq, BPAD), PAD_IDX, jnp.int32)
    ids = ids.at[:, :bsz].set(jnp.transpose(x_tokens).astype(jnp.int32))
    ids = ids.reshape(n, 1)

    # row-validity mask (1.0 for real rows) and fwd-lane mask of the fused gates.
    valid = jnp.zeros((seq, BPAD), jnp.float32).at[:, :bsz].set(1.0).reshape(n, 1)
    lanes = jnp.arange(8 * HIDDEN_DIM) % (2 * HIDDEN_DIM)
    fmask = (lanes < HIDDEN_DIM).astype(jnp.float32).reshape(1, -1)   # (1, 8H)

    win1, whh1, b1 = _prep_bidir_weights(params["lstm"][0][0], params["lstm"][0][1])
    win2, whh2, b2 = _prep_bidir_weights(params["lstm"][1][0], params["lstm"][1][1])

    # FC weights transposed + lane-padded to 128 for a lane-dense output store.
    wfc = jnp.zeros((2 * HIDDEN_DIM, FC_PAD), jnp.float32)
    wfc = wfc.at[:, :VOCAB_SIZE].set(jnp.transpose(params["w_fc"]))
    bfc = jnp.zeros((1, FC_PAD), jnp.float32)
    bfc = bfc.at[:, :VOCAB_SIZE].set(params["b_fc"].reshape(1, -1))

    inputs = [
        ids,                                       # (N, 1)  int32
        valid,                                     # (N, 1)  f32
        fmask,                                     # (1, 8H) f32
        params["embedding"],                       # (V, E)
        params["bn_emb_gamma"].reshape(1, -1),     # (1, E)
        params["bn_emb_beta"].reshape(1, -1),      # (1, E)
        win1, whh1, b1,                            # layer-1 fused weights
        win2, whh2, b2,                            # layer-2 fused weights
        params["bn_lstm_gamma"].reshape(1, -1),    # (1, 2H)
        params["bn_lstm_beta"].reshape(1, -1),     # (1, 2H)
        params["w_att"],                           # (1, 2H)
        params["b_att"].reshape(1, 1),             # (1, 1)
        wfc,                                       # (2H, 128)
        bfc,                                       # (1, 128)
    ]
    in_specs = [pl.BlockSpec(a.shape, lambda i: (0, 0)) for a in inputs]

    kernel = functools.partial(_poetry_kernel, seq=seq, bsz=bsz, hid=HIDDEN_DIM)
    logits_pad = pl.pallas_call(
        kernel,
        out_shape=jax.ShapeDtypeStruct((BPAD, FC_PAD), jnp.float32),
        grid=(1,),                                 # single TC; far too small to split
        in_specs=in_specs,
        out_specs=pl.BlockSpec((BPAD, FC_PAD), lambda i: (0, 0)),
        scratch_shapes=[pltpu.VMEM((n, 2 * HIDDEN_DIM), jnp.float32),
                        pltpu.VMEM((n, 2 * HIDDEN_DIM), jnp.float32)],
        compiler_params=pltpu.CompilerParams(
            dimension_semantics=("arbitrary",)),
    )(*inputs)

    return logits_pad[:bsz, :VOCAB_SIZE]           # (B, V)


if __name__ == "__main__":
    key = jax.random.PRNGKey(0)
    pkey, xkey = jax.random.split(key)
    params = init_params(pkey)
    x = jax.random.randint(xkey, (BATCH, SEQ), 0, VOCAB_SIZE, dtype=jnp.int32)

    fwd_fn = jax.jit(functools.partial(poetry_rnn_forward, params))
    out = fwd_fn(x)
    jax.block_until_ready(out)
    assert out.shape == (BATCH, VOCAB_SIZE), out.shape
    assert out.dtype == jnp.float32
    assert bool(jnp.all(jnp.isfinite(out)))
    print("KERNEL_OK")
</pallas_src>

<mosaic_0001>
module attributes {stable_mosaic.version = 11 : i64} {
  func.func @_poetry_kernel(%arg0: i32, %arg1: memref<64x1xi32, #tpu.memory_space<vmem>>, %arg2: memref<64x1xf32, #tpu.memory_space<vmem>>, %arg3: memref<1x256xf32, #tpu.memory_space<vmem>>, %arg4: memref<64x32xf32, #tpu.memory_space<vmem>>, %arg5: memref<1x32xf32, #tpu.memory_space<vmem>>, %arg6: memref<1x32xf32, #tpu.memory_space<vmem>>, %arg7: memref<32x256xf32, #tpu.memory_space<vmem>>, %arg8: memref<64x256xf32, #tpu.memory_space<vmem>>, %arg9: memref<1x256xf32, #tpu.memory_space<vmem>>, %arg10: memref<64x256xf32, #tpu.memory_space<vmem>>, %arg11: memref<64x256xf32, #tpu.memory_space<vmem>>, %arg12: memref<1x256xf32, #tpu.memory_space<vmem>>, %arg13: memref<1x64xf32, #tpu.memory_space<vmem>>, %arg14: memref<1x64xf32, #tpu.memory_space<vmem>>, %arg15: memref<1x64xf32, #tpu.memory_space<vmem>>, %arg16: memref<1x1xf32, #tpu.memory_space<vmem>>, %arg17: memref<64x128xf32, #tpu.memory_space<vmem>>, %arg18: memref<1x128xf32, #tpu.memory_space<vmem>>, %arg19: memref<8x128xf32, #tpu.memory_space<vmem>>, %arg20: memref<64x64xf32, #tpu.memory_space<vmem>>, %arg21: memref<64x64xf32, #tpu.memory_space<vmem>>) attributes {dimension_semantics = [#tpu.dimension_semantics<arbitrary>], iteration_bounds = array<i64: 1>, scalar_prefetch = 0 : i64, scratch_operands = 2 : i64, tpu.core_type = #tpu.core_type<tc>, window_params = [{pipeline_mode = #tpu.pipeline_mode<synchronous>, transform_indices = @transform_0, window_bounds = array<i64: 64, 1>}, {pipeline_mode = #tpu.pipeline_mode<synchronous>, transform_indices = @transform_1, window_bounds = array<i64: 64, 1>}, {pipeline_mode = #tpu.pipeline_mode<synchronous>, transform_indices = @transform_2, window_bounds = array<i64: 1, 256>}, {pipeline_mode = #tpu.pipeline_mode<synchronous>, transform_indices = @transform_3, window_bounds = array<i64: 64, 32>}, {pipeline_mode = #tpu.pipeline_mode<synchronous>, transform_indices = @transform_4, window_bounds = array<i64: 1, 32>}, {pipeline_mode = #tpu.pipeline_mode<synchronous>, transform_indices = @transform_5, window_bounds = array<i64: 1, 32>}, {pipeline_mode = #tpu.pipeline_mode<synchronous>, transform_indices = @transform_6, window_bounds = array<i64: 32, 256>}, {pipeline_mode = #tpu.pipeline_mode<synchronous>, transform_indices = @transform_7, window_bounds = array<i64: 64, 256>}, {pipeline_mode = #tpu.pipeline_mode<synchronous>, transform_indices = @transform_8, window_bounds = array<i64: 1, 256>}, {pipeline_mode = #tpu.pipeline_mode<synchronous>, transform_indices = @transform_9, window_bounds = array<i64: 64, 256>}, {pipeline_mode = #tpu.pipeline_mode<synchronous>, transform_indices = @transform_10, window_bounds = array<i64: 64, 256>}, {pipeline_mode = #tpu.pipeline_mode<synchronous>, transform_indices = @transform_11, window_bounds = array<i64: 1, 256>}, {pipeline_mode = #tpu.pipeline_mode<synchronous>, transform_indices = @transform_12, window_bounds = array<i64: 1, 64>}, {pipeline_mode = #tpu.pipeline_mode<synchronous>, transform_indices = @transform_13, window_bounds = array<i64: 1, 64>}, {pipeline_mode = #tpu.pipeline_mode<synchronous>, transform_indices = @transform_14, window_bounds = array<i64: 1, 64>}, {pipeline_mode = #tpu.pipeline_mode<synchronous>, transform_indices = @transform_15, window_bounds = array<i64: 1, 1>}, {pipeline_mode = #tpu.pipeline_mode<synchronous>, transform_indices = @transform_16, window_bounds = array<i64: 64, 128>}, {pipeline_mode = #tpu.pipeline_mode<synchronous>, transform_indices = @transform_17, window_bounds = array<i64: 1, 128>}, {pipeline_mode = #tpu.pipeline_mode<synchronous>, transform_indices = @transform_18, window_bounds = array<i64: 8, 128>}]} {
    %c0 = arith.constant 0 : index
    %c0_0 = arith.constant 0 : index
    %0 = vector.load %arg2[%c0, %c0_0] : memref<64x1xf32, #tpu.memory_space<vmem>>, vector<64x1xf32>
    %c0_1 = arith.constant 0 : index
    %c0_2 = arith.constant 0 : index
    %1 = vector.load %arg1[%c0_1, %c0_2] : memref<64x1xi32, #tpu.memory_space<vmem>>, vector<64x1xi32>
    %2 = tpu.iota {dimensions = array<i32: 1>} : vector<64x64xi32>
    %3 = vector.broadcast %1 : vector<64x1xi32> to vector<64x64xi32>
    %4 = arith.cmpi eq, %2, %3 : vector<64x64xi32>
    %5 = arith.extui %4 : vector<64x64xi1> to vector<64x64xi32>
    %6 = arith.sitofp %5 : vector<64x64xi32> to vector<64x64xf32>
    %c0_3 = arith.constant 0 : index
    %c0_4 = arith.constant 0 : index
    %7 = vector.load %arg4[%c0_3, %c0_4] : memref<64x32xf32, #tpu.memory_space<vmem>>, vector<64x32xf32>
    %cst = arith.constant dense<0.000000e+00> : vector<64x32xf32>
    %8 = tpu.matmul %6, %7, %cst {dimension_numbers = #tpu.dot_dimension_numbers<[1], [0], [0], [1], [0, 0, 1, 1], [], []>} : vector<64x64xf32>, vector<64x32xf32>, vector<64x32xf32> -> vector<64x32xf32>
    %c0_5 = arith.constant 0 : index
    %c0_6 = arith.constant 0 : index
    %9 = vector.load %arg5[%c0_5, %c0_6] : memref<1x32xf32, #tpu.memory_space<vmem>>, vector<1x32xf32>
    %c0_7 = arith.constant 0 : index
    %c0_8 = arith.constant 0 : index
    %10 = vector.load %arg6[%c0_7, %c0_8] : memref<1x32xf32, #tpu.memory_space<vmem>>, vector<1x32xf32>
    %11 = vector.broadcast %0 : vector<64x1xf32> to vector<64x32xf32>
    %12 = arith.mulf %8, %11 : vector<64x32xf32>
    %cst_9 = arith.constant dense<0.000000e+00> : vector<32xf32>
    %13 = vector.multi_reduction <add>, %12, %cst_9 [0] : vector<64x32xf32> to vector<32xf32>
    %14 = vector.shape_cast %13 : vector<32xf32> to vector<1x32xf32>
    %cst_10 = arith.constant 1.600000e+01 : f32
    %15 = vector.broadcast %cst_10 : f32 to vector<1x32xf32>
    %16 = arith.divf %14, %15 : vector<1x32xf32>
    %17 = vector.broadcast %16 : vector<1x32xf32> to vector<64x32xf32>
    %18 = arith.subf %8, %17 : vector<64x32xf32>
    %19 = arith.mulf %18, %18 : vector<64x32xf32>
    %20 = vector.broadcast %0 : vector<64x1xf32> to vector<64x32xf32>
    %21 = arith.mulf %19, %20 : vector<64x32xf32>
    %cst_11 = arith.constant dense<0.000000e+00> : vector<32xf32>
    %22 = vector.multi_reduction <add>, %21, %cst_11 [0] : vector<64x32xf32> to vector<32xf32>
    %23 = vector.shape_cast %22 : vector<32xf32> to vector<1x32xf32>
    %cst_12 = arith.constant 1.600000e+01 : f32
    %24 = vector.broadcast %cst_12 : f32 to vector<1x32xf32>
    %25 = arith.divf %23, %24 : vector<1x32xf32>
    %26 = vector.broadcast %16 : vector<1x32xf32> to vector<64x32xf32>
    %27 = arith.subf %8, %26 : vector<64x32xf32>
    %cst_13 = arith.constant 9.99999974E-6 : f32
    %28 = vector.broadcast %cst_13 : f32 to vector<1x32xf32>
    %29 = arith.addf %25, %28 : vector<1x32xf32>
    %30 = math.rsqrt %29 : vector<1x32xf32>
    %31 = vector.broadcast %30 : vector<1x32xf32> to vector<64x32xf32>
    %32 = arith.mulf %27, %31 : vector<64x32xf32>
    %33 = vector.broadcast %9 : vector<1x32xf32> to vector<64x32xf32>
    %34 = arith.mulf %32, %33 : vector<64x32xf32>
    %35 = vector.broadcast %10 : vector<1x32xf32> to vector<64x32xf32>
    %36 = arith.addf %34, %35 : vector<64x32xf32>
    %c0_14 = arith.constant 0 : index
    %c0_15 = arith.constant 0 : index
    %37 = vector.load %arg3[%c0_14, %c0_15] : memref<1x256xf32, #tpu.memory_space<vmem>>, vector<1x256xf32>
    %c0_16 = arith.constant 0 : index
    %c0_17 = arith.constant 0 : index
    %38 = vector.load %arg7[%c0_16, %c0_17] : memref<32x256xf32, #tpu.memory_space<vmem>>, vector<32x256xf32>
    %cst_18 = arith.constant dense<0.000000e+00> : vector<64x256xf32>
    %39 = tpu.matmul %36, %38, %cst_18 {dimension_numbers = #tpu.dot_dimension_numbers<[1], [0], [0], [1], [0, 0, 1, 1], [], []>} : vector<64x32xf32>, vector<32x256xf32>, vector<64x256xf32> -> vector<64x256xf32>
    %40 = vector.extract_strided_slice %39 {offsets = [56, 0], sizes = [8, 256], strides = [1, 1]} : vector<64x256xf32> to vector<8x256xf32>
    %41 = vector.extract_strided_slice %39 {offsets = [48, 0], sizes = [8, 256], strides = [1, 1]} : vector<64x256xf32> to vector<8x256xf32>
    %42 = vector.extract_strided_slice %39 {offsets = [40, 0], sizes = [8, 256], strides = [1, 1]} : vector<64x256xf32> to vector<8x256xf32>
    %43 = vector.extract_strided_slice %39 {offsets = [32, 0], sizes = [8, 256], strides = [1, 1]} : vector<64x256xf32> to vector<8x256xf32>
    %44 = vector.extract_strided_slice %39 {offsets = [24, 0], sizes = [8, 256], strides = [1, 1]} : vector<64x256xf32> to vector<8x256xf32>
    %45 = vector.extract_strided_slice %39 {offsets = [16, 0], sizes = [8, 256], strides = [1, 1]} : vector<64x256xf32> to vector<8x256xf32>
    %46 = vector.extract_strided_slice %39 {offsets = [8, 0], sizes = [8, 256], strides = [1, 1]} : vector<64x256xf32> to vector<8x256xf32>
    %47 = vector.extract_strided_slice %39 {offsets = [0, 0], sizes = [8, 256], strides = [1, 1]} : vector<64x256xf32> to vector<8x256xf32>
    %48 = tpu.concatenate %40, %41, %42, %43, %44, %45, %46, %47 in 0 : vector<8x256xf32>, vector<8x256xf32>, vector<8x256xf32>, vector<8x256xf32>, vector<8x256xf32>, vector<8x256xf32>, vector<8x256xf32>, vector<8x256xf32> -> vector<64x256xf32>
    %49 = arith.subf %39, %48 : vector<64x256xf32>
    %50 = vector.broadcast %37 : vector<1x256xf32> to vector<64x256xf32>
    %51 = arith.mulf %50, %49 : vector<64x256xf32>
    %52 = arith.addf %48, %51 : vector<64x256xf32>
    %c0_19 = arith.constant 0 : index
    %c0_20 = arith.constant 0 : index
    %53 = vector.load %arg9[%c0_19, %c0_20] : memref<1x256xf32, #tpu.memory_space<vmem>>, vector<1x256xf32>
    %54 = vector.broadcast %53 : vector<1x256xf32> to vector<64x256xf32>
    %55 = arith.addf %52, %54 : vector<64x256xf32>
    %c0_21 = arith.constant 0 : index
    %c0_22 = arith.constant 0 : index
    %56 = vector.load %arg8[%c0_21, %c0_22] : memref<64x256xf32, #tpu.memory_space<vmem>>, vector<64x256xf32>
    %cst_23 = arith.constant 0.000000e+00 : f32
    %57 = vector.broadcast %cst_23 : f32 to vector<8x64xf32>
    %cst_24 = arith.constant 0.000000e+00 : f32
    %58 = vector.broadcast %cst_24 : f32 to vector<8x64xf32>
    %59 = vector.extract_strided_slice %55 {offsets = [0, 0], sizes = [8, 256], strides = [1, 1]} : vector<64x256xf32> to vector<8x256xf32>
    %cst_25 = arith.constant dense<0.000000e+00> : vector<8x256xf32>
    %60 = tpu.matmul %57, %56, %cst_25 {dimension_numbers = #tpu.dot_dimension_numbers<[1], [0], [0], [1], [0, 0, 1, 1], [], []>} : vector<8x64xf32>, vector<64x256xf32>, vector<8x256xf32> -> vector<8x256xf32>
    %61 = arith.addf %59, %60 : vector<8x256xf32>
    %62 = vector.extract_strided_slice %61 {offsets = [0, 0], sizes = [8, 64], strides = [1, 1]} : vector<8x256xf32> to vector<8x64xf32>
    %63 = arith.negf %62 : vector<8x64xf32>
    %64 = math.exp %63 : vector<8x64xf32>
    %cst_26 = arith.constant 1.000000e+00 : f32
    %65 = vector.broadcast %cst_26 : f32 to vector<8x64xf32>
    %66 = arith.addf %65, %64 : vector<8x64xf32>
    %67 = arith.divf %65, %66 : vector<8x64xf32>
    %68 = vector.extract_strided_slice %61 {offsets = [0, 64], sizes = [8, 64], strides = [1, 1]} : vector<8x256xf32> to vector<8x64xf32>
    %69 = arith.negf %68 : vector<8x64xf32>
    %70 = math.exp %69 : vector<8x64xf32>
    %cst_27 = arith.constant 1.000000e+00 : f32
    %71 = vector.broadcast %cst_27 : f32 to vector<8x64xf32>
    %72 = arith.addf %71, %70 : vector<8x64xf32>
    %73 = arith.divf %71, %72 : vector<8x64xf32>
    %74 = vector.extract_strided_slice %61 {offsets = [0, 128], sizes = [8, 64], strides = [1, 1]} : vector<8x256xf32> to vector<8x64xf32>
    %75 = math.tanh %74 : vector<8x64xf32>
    %76 = vector.extract_strided_slice %61 {offsets = [0, 192], sizes = [8, 64], strides = [1, 1]} : vector<8x256xf32> to vector<8x64xf32>
    %77 = arith.negf %76 : vector<8x64xf32>
    %78 = math.exp %77 : vector<8x64xf32>
    %cst_28 = arith.constant 1.000000e+00 : f32
    %79 = vector.broadcast %cst_28 : f32 to vector<8x64xf32>
    %80 = arith.addf %79, %78 : vector<8x64xf32>
    %81 = arith.divf %79, %80 : vector<8x64xf32>
    %82 = arith.mulf %73, %58 : vector<8x64xf32>
    %83 = arith.mulf %67, %75 : vector<8x64xf32>
    %84 = arith.addf %82, %83 : vector<8x64xf32>
    %85 = math.tanh %84 : vector<8x64xf32>
    %86 = arith.mulf %81, %85 : vector<8x64xf32>
    %87 = vector.extract_strided_slice %86 {offsets = [0, 0], sizes = [8, 32], strides = [1, 1]} : vector<8x64xf32> to vector<8x32xf32>
    %c0_29 = arith.constant 0 : index
    %c0_30 = arith.constant 0 : index
    %88 = vector.load %arg20[%c0_29, %c0_30] : memref<64x64xf32, #tpu.memory_space<vmem>>, vector<8x32xf32>
    tpu.vector_store %arg20[%c0_29, %c0_30], %87 {strides = array<i32>} : memref<64x64xf32, #tpu.memory_space<vmem>>, vector<8x32xf32>,
    %89 = vector.extract_strided_slice %86 {offsets = [0, 32], sizes = [8, 32], strides = [1, 1]} : vector<8x64xf32> to vector<8x32xf32>
    %c56 = arith.constant 56 : index
    %c32 = arith.constant 32 : index
    %90 = vector.load %arg20[%c56, %c32] : memref<64x64xf32, #tpu.memory_space<vmem>>, vector<8x32xf32>
    tpu.vector_store %arg20[%c56, %c32], %89 {strides = array<i32>} : memref<64x64xf32, #tpu.memory_space<vmem>>, vector<8x32xf32>,
    %91 = vector.extract_strided_slice %55 {offsets = [8, 0], sizes = [8, 256], strides = [1, 1]} : vector<64x256xf32> to vector<8x256xf32>
    %cst_31 = arith.constant dense<0.000000e+00> : vector<8x256xf32>
    %92 = tpu.matmul %86, %56, %cst_31 {dimension_numbers = #tpu.dot_dimension_numbers<[1], [0], [0], [1], [0, 0, 1, 1], [], []>} : vector<8x64xf32>, vector<64x256xf32>, vector<8x256xf32> -> vector<8x256xf32>
    %93 = arith.addf %91, %92 : vector<8x256xf32>
    %94 = vector.extract_strided_slice %93 {offsets = [0, 0], sizes = [8, 64], strides = [1, 1]} : vector<8x256xf32> to vector<8x64xf32>
    %95 = arith.negf %94 : vector<8x64xf32>
    %96 = math.exp %95 : vector<8x64xf32>
    %cst_32 = arith.constant 1.000000e+00 : f32
    %97 = vector.broadcast %cst_32 : f32 to vector<8x64xf32>
    %98 = arith.addf %97, %96 : vector<8x64xf32>
    %99 = arith.divf %97, %98 : vector<8x64xf32>
    %100 = vector.extract_strided_slice %93 {offsets = [0, 64], sizes = [8, 64], strides = [1, 1]} : vector<8x256xf32> to vector<8x64xf32>
    %101 = arith.negf %100 : vector<8x64xf32>
    %102 = math.exp %101 : vector<8x64xf32>
    %cst_33 = arith.constant 1.000000e+00 : f32
    %103 = vector.broadcast %cst_33 : f32 to vector<8x64xf32>
    %104 = arith.addf %103, %102 : vector<8x64xf32>
    %105 = arith.divf %103, %104 : vector<8x64xf32>
    %106 = vector.extract_strided_slice %93 {offsets = [0, 128], sizes = [8, 64], strides = [1, 1]} : vector<8x256xf32> to vector<8x64xf32>
    %107 = math.tanh %106 : vector<8x64xf32>
    %108 = vector.extract_strided_slice %93 {offsets = [0, 192], sizes = [8, 64], strides = [1, 1]} : vector<8x256xf32> to vector<8x64xf32>
    %109 = arith.negf %108 : vector<8x64xf32>
    %110 = math.exp %109 : vector<8x64xf32>
    %cst_34 = arith.constant 1.000000e+00 : f32
    %111 = vector.broadcast %cst_34 : f32 to vector<8x64xf32>
    %112 = arith.addf %111, %110 : vector<8x64xf32>
    %113 = arith.divf %111, %112 : vector<8x64xf32>
    %114 = arith.mulf %105, %84 : vector<8x64xf32>
    %115 = arith.mulf %99, %107 : vector<8x64xf32>
    %116 = arith.addf %114, %115 : vector<8x64xf32>
    %117 = math.tanh %116 : vector<8x64xf32>
    %118 = arith.mulf %113, %117 : vector<8x64xf32>
    %119 = vector.extract_strided_slice %118 {offsets = [0, 0], sizes = [8, 32], strides = [1, 1]} : vector<8x64xf32> to vector<8x32xf32>
    %c8 = arith.constant 8 : index
    %c0_35 = arith.constant 0 : index
    %120 = vector.load %arg20[%c8, %c0_35] : memref<64x64xf32, #tpu.memory_space<vmem>>, vector<8x32xf32>
    tpu.vector_store %arg20[%c8, %c0_35], %119 {strides = array<i32>} : memref<64x64xf32, #tpu.memory_space<vmem>>, vector<8x32xf32>,
    %121 = vector.extract_strided_slice %118 {offsets = [0, 32], sizes = [8, 32], strides = [1, 1]} : vector<8x64xf32> to vector<8x32xf32>
    %c48 = arith.constant 48 : index
    %c32_36 = arith.constant 32 : index
    %122 = vector.load %arg20[%c48, %c32_36] : memref<64x64xf32, #tpu.memory_space<vmem>>, vector<8x32xf32>
    tpu.vector_store %arg20[%c48, %c32_36], %121 {strides = array<i32>} : memref<64x64xf32, #tpu.memory_space<vmem>>, vector<8x32xf32>,
    %123 = vector.extract_strided_slice %55 {offsets = [16, 0], sizes = [8, 256], strides = [1, 1]} : vector<64x256xf32> to vector<8x256xf32>
    %cst_37 = arith.constant dense<0.000000e+00> : vector<8x256xf32>
    %124 = tpu.matmul %118, %56, %cst_37 {dimension_numbers = #tpu.dot_dimension_numbers<[1], [0], [0], [1], [0, 0, 1, 1], [], []>} : vector<8x64xf32>, vector<64x256xf32>, vector<8x256xf32> -> vector<8x256xf32>
    %125 = arith.addf %123, %124 : vector<8x256xf32>
    %126 = vector.extract_strided_slice %125 {offsets = [0, 0], sizes = [8, 64], strides = [1, 1]} : vector<8x256xf32> to vector<8x64xf32>
    %127 = arith.negf %126 : vector<8x64xf32>
    %128 = math.exp %127 : vector<8x64xf32>
    %cst_38 = arith.constant 1.000000e+00 : f32
    %129 = vector.broadcast %cst_38 : f32 to vector<8x64xf32>
    %130 = arith.addf %129, %128 : vector<8x64xf32>
    %131 = arith.divf %129, %130 : vector<8x64xf32>
    %132 = vector.extract_strided_slice %125 {offsets = [0, 64], sizes = [8, 64], strides = [1, 1]} : vector<8x256xf32> to vector<8x64xf32>
    %133 = arith.negf %132 : vector<8x64xf32>
    %134 = math.exp %133 : vector<8x64xf32>
    %cst_39 = arith.constant 1.000000e+00 : f32
    %135 = vector.broadcast %cst_39 : f32 to vector<8x64xf32>
    %136 = arith.addf %135, %134 : vector<8x64xf32>
    %137 = arith.divf %135, %136 : vector<8x64xf32>
    %138 = vector.extract_strided_slice %125 {offsets = [0, 128], sizes = [8, 64], strides = [1, 1]} : vector<8x256xf32> to vector<8x64xf32>
    %139 = math.tanh %138 : vector<8x64xf32>
    %140 = vector.extract_strided_slice %125 {offsets = [0, 192], sizes = [8, 64], strides = [1, 1]} : vector<8x256xf32> to vector<8x64xf32>
    %141 = arith.negf %140 : vector<8x64xf32>
    %142 = math.exp %141 : vector<8x64xf32>
    %cst_40 = arith.constant 1.000000e+00 : f32
    %143 = vector.broadcast %cst_40 : f32 to vector<8x64xf32>
    %144 = arith.addf %143, %142 : vector<8x64xf32>
    %145 = arith.divf %143, %144 : vector<8x64xf32>
    %146 = arith.mulf %137, %116 : vector<8x64xf32>
    %147 = arith.mulf %131, %139 : vector<8x64xf32>
    %148 = arith.addf %146, %147 : vector<8x64xf32>
    %149 = math.tanh %148 : vector<8x64xf32>
    %150 = arith.mulf %145, %149 : vector<8x64xf32>
    %151 = vector.extract_strided_slice %150 {offsets = [0, 0], sizes = [8, 32], strides = [1, 1]} : vector<8x64xf32> to vector<8x32xf32>
    %c16 = arith.constant 16 : index
    %c0_41 = arith.constant 0 : index
    %152 = vector.load %arg20[%c16, %c0_41] : memref<64x64xf32, #tpu.memory_space<vmem>>, vector<8x32xf32>
    tpu.vector_store %arg20[%c16, %c0_41], %151 {strides = array<i32>} : memref<64x64xf32, #tpu.memory_space<vmem>>, vector<8x32xf32>,
    %153 = vector.extract_strided_slice %150 {offsets = [0, 32], sizes = [8, 32], strides = [1, 1]} : vector<8x64xf32> to vector<8x32xf32>
    %c40 = arith.constant 40 : index
    %c32_42 = arith.constant 32 : index
    %154 = vector.load %arg20[%c40, %c32_42] : memref<64x64xf32, #tpu.memory_space<vmem>>, vector<8x32xf32>
    tpu.vector_store %arg20[%c40, %c32_42], %153 {strides = array<i32>} : memref<64x64xf32, #tpu.memory_space<vmem>>, vector<8x32xf32>,
    %155 = vector.extract_strided_slice %55 {offsets = [24, 0], sizes = [8, 256], strides = [1, 1]} : vector<64x256xf32> to vector<8x256xf32>
    %cst_43 = arith.constant dense<0.000000e+00> : vector<8x256xf32>
    %156 = tpu.matmul %150, %56, %cst_43 {dimension_numbers = #tpu.dot_dimension_numbers<[1], [0], [0], [1], [0, 0, 1, 1], [], []>} : vector<8x64xf32>, vector<64x256xf32>, vector<8x256xf32> -> vector<8x256xf32>
    %157 = arith.addf %155, %156 : vector<8x256xf32>
    %158 = vector.extract_strided_slice %157 {offsets = [0, 0], sizes = [8, 64], strides = [1, 1]} : vector<8x256xf32> to vector<8x64xf32>
    %159 = arith.negf %158 : vector<8x64xf32>
    %160 = math.exp %159 : vector<8x64xf32>
    %cst_44 = arith.constant 1.000000e+00 : f32
    %161 = vector.broadcast %cst_44 : f32 to vector<8x64xf32>
    %162 = arith.addf %161, %160 : vector<8x64xf32>
    %163 = arith.divf %161, %162 : vector<8x64xf32>
    %164 = vector.extract_strided_slice %157 {offsets = [0, 64], sizes = [8, 64], strides = [1, 1]} : vector<8x256xf32> to vector<8x64xf32>
    %165 = arith.negf %164 : vector<8x64xf32>
    %166 = math.exp %165 : vector<8x64xf32>
    %cst_45 = arith.constant 1.000000e+00 : f32
    %167 = vector.broadcast %cst_45 : f32 to vector<8x64xf32>
    %168 = arith.addf %167, %166 : vector<8x64xf32>
    %169 = arith.divf %167, %168 : vector<8x64xf32>
    %170 = vector.extract_strided_slice %157 {offsets = [0, 128], sizes = [8, 64], strides = [1, 1]} : vector<8x256xf32> to vector<8x64xf32>
    %171 = math.tanh %170 : vector<8x64xf32>
    %172 = vector.extract_strided_slice %157 {offsets = [0, 192], sizes = [8, 64], strides = [1, 1]} : vector<8x256xf32> to vector<8x64xf32>
    %173 = arith.negf %172 : vector<8x64xf32>
    %174 = math.exp %173 : vector<8x64xf32>
    %cst_46 = arith.constant 1.000000e+00 : f32
    %175 = vector.broadcast %cst_46 : f32 to vector<8x64xf32>
    %176 = arith.addf %175, %174 : vector<8x64xf32>
    %177 = arith.divf %175, %176 : vector<8x64xf32>
    %178 = arith.mulf %169, %148 : vector<8x64xf32>
    %179 = arith.mulf %163, %171 : vector<8x64xf32>
    %180 = arith.addf %178, %179 : vector<8x64xf32>
    %181 = math.tanh %180 : vector<8x64xf32>
    %182 = arith.mulf %177, %181 : vector<8x64xf32>
    %183 = vector.extract_strided_slice %182 {offsets = [0, 0], sizes = [8, 32], strides = [1, 1]} : vector<8x64xf32> to vector<8x32xf32>
    %c24 = arith.constant 24 : index
    %c0_47 = arith.constant 0 : index
    %184 = vector.load %arg20[%c24, %c0_47] : memref<64x64xf32, #tpu.memory_space<vmem>>, vector<8x32xf32>
    tpu.vector_store %arg20[%c24, %c0_47], %183 {strides = array<i32>} : memref<64x64xf32, #tpu.memory_space<vmem>>, vector<8x32xf32>,
    %185 = vector.extract_strided_slice %182 {offsets = [0, 32], sizes = [8, 32], strides = [1, 1]} : vector<8x64xf32> to vector<8x32xf32>
    %c32_48 = arith.constant 32 : index
    %c32_49 = arith.constant 32 : index
    %186 = vector.load %arg20[%c32_48, %c32_49] : memref<64x64xf32, #tpu.memory_space<vmem>>, vector<8x32xf32>
    tpu.vector_store %arg20[%c32_48, %c32_49], %185 {strides = array<i32>} : memref<64x64xf32, #tpu.memory_space<vmem>>, vector<8x32xf32>,
    %187 = vector.extract_strided_slice %55 {offsets = [32, 0], sizes = [8, 256], strides = [1, 1]} : vector<64x256xf32> to vector<8x256xf32>
    %cst_50 = arith.constant dense<0.000000e+00> : vector<8x256xf32>
    %188 = tpu.matmul %182, %56, %cst_50 {dimension_numbers = #tpu.dot_dimension_numbers<[1], [0], [0], [1], [0, 0, 1, 1], [], []>} : vector<8x64xf32>, vector<64x256xf32>, vector<8x256xf32> -> vector<8x256xf32>
    %189 = arith.addf %187, %188 : vector<8x256xf32>
    %190 = vector.extract_strided_slice %189 {offsets = [0, 0], sizes = [8, 64], strides = [1, 1]} : vector<8x256xf32> to vector<8x64xf32>
    %191 = arith.negf %190 : vector<8x64xf32>
    %192 = math.exp %191 : vector<8x64xf32>
    %cst_51 = arith.constant 1.000000e+00 : f32
    %193 = vector.broadcast %cst_51 : f32 to vector<8x64xf32>
    %194 = arith.addf %193, %192 : vector<8x64xf32>
    %195 = arith.divf %193, %194 : vector<8x64xf32>
    %196 = vector.extract_strided_slice %189 {offsets = [0, 64], sizes = [8, 64], strides = [1, 1]} : vector<8x256xf32> to vector<8x64xf32>
    %197 = arith.negf %196 : vector<8x64xf32>
    %198 = math.exp %197 : vector<8x64xf32>
    %cst_52 = arith.constant 1.000000e+00 : f32
    %199 = vector.broadcast %cst_52 : f32 to vector<8x64xf32>
    %200 = arith.addf %199, %198 : vector<8x64xf32>
    %201 = arith.divf %199, %200 : vector<8x64xf32>
    %202 = vector.extract_strided_slice %189 {offsets = [0, 128], sizes = [8, 64], strides = [1, 1]} : vector<8x256xf32> to vector<8x64xf32>
    %203 = math.tanh %202 : vector<8x64xf32>
    %204 = vector.extract_strided_slice %189 {offsets = [0, 192], sizes = [8, 64], strides = [1, 1]} : vector<8x256xf32> to vector<8x64xf32>
    %205 = arith.negf %204 : vector<8x64xf32>
    %206 = math.exp %205 : vector<8x64xf32>
    %cst_53 = arith.constant 1.000000e+00 : f32
    %207 = vector.broadcast %cst_53 : f32 to vector<8x64xf32>
    %208 = arith.addf %207, %206 : vector<8x64xf32>
    %209 = arith.divf %207, %208 : vector<8x64xf32>
    %210 = arith.mulf %201, %180 : vector<8x64xf32>
    %211 = arith.mulf %195, %203 : vector<8x64xf32>
    %212 = arith.addf %210, %211 : vector<8x64xf32>
    %213 = math.tanh %212 : vector<8x64xf32>
    %214 = arith.mulf %209, %213 : vector<8x64xf32>
    %215 = vector.extract_strided_slice %214 {offsets = [0, 0], sizes = [8, 32], strides = [1, 1]} : vector<8x64xf32> to vector<8x32xf32>
    %c32_54 = arith.constant 32 : index
    %c0_55 = arith.constant 0 : index
    %216 = vector.load %arg20[%c32_54, %c0_55] : memref<64x64xf32, #tpu.memory_space<vmem>>, vector<8x32xf32>
    tpu.vector_store %arg20[%c32_54, %c0_55], %215 {strides = array<i32>} : memref<64x64xf32, #tpu.memory_space<vmem>>, vector<8x32xf32>,
    %217 = vector.extract_strided_slice %214 {offsets = [0, 32], sizes = [8, 32], strides = [1, 1]} : vector<8x64xf32> to vector<8x32xf32>
    %c24_56 = arith.constant 24 : index
    %c32_57 = arith.constant 32 : index
    %218 = vector.load %arg20[%c24_56, %c32_57] : memref<64x64xf32, #tpu.memory_space<vmem>>, vector<8x32xf32>
    tpu.vector_store %arg20[%c24_56, %c32_57], %217 {strides = array<i32>} : memref<64x64xf32, #tpu.memory_space<vmem>>, vector<8x32xf32>,
    %219 = vector.extract_strided_slice %55 {offsets = [40, 0], sizes = [8, 256], strides = [1, 1]} : vector<64x256xf32> to vector<8x256xf32>
    %cst_58 = arith.constant dense<0.000000e+00> : vector<8x256xf32>
    %220 = tpu.matmul %214, %56, %cst_58 {dimension_numbers = #tpu.dot_dimension_numbers<[1], [0], [0], [1], [0, 0, 1, 1], [], []>} : vector<8x64xf32>, vector<64x256xf32>, vector<8x256xf32> -> vector<8x256xf32>
    %221 = arith.addf %219, %220 : vector<8x256xf32>
    %222 = vector.extract_strided_slice %221 {offsets = [0, 0], sizes = [8, 64], strides = [1, 1]} : vector<8x256xf32> to vector<8x64xf32>
    %223 = arith.negf %222 : vector<8x64xf32>
    %224 = math.exp %223 : vector<8x64xf32>
    %cst_59 = arith.constant 1.000000e+00 : f32
    %225 = vector.broadcast %cst_59 : f32 to vector<8x64xf32>
    %226 = arith.addf %225, %224 : vector<8x64xf32>
    %227 = arith.divf %225, %226 : vector<8x64xf32>
    %228 = vector.extract_strided_slice %221 {offsets = [0, 64], sizes = [8, 64], strides = [1, 1]} : vector<8x256xf32> to vector<8x64xf32>
    %229 = arith.negf %228 : vector<8x64xf32>
    %230 = math.exp %229 : vector<8x64xf32>
    %cst_60 = arith.constant 1.000000e+00 : f32
    %231 = vector.broadcast %cst_60 : f32 to vector<8x64xf32>
    %232 = arith.addf %231, %230 : vector<8x64xf32>
    %233 = arith.divf %231, %232 : vector<8x64xf32>
    %234 = vector.extract_strided_slice %221 {offsets = [0, 128], sizes = [8, 64], strides = [1, 1]} : vector<8x256xf32> to vector<8x64xf32>
    %235 = math.tanh %234 : vector<8x64xf32>
    %236 = vector.extract_strided_slice %221 {offsets = [0, 192], sizes = [8, 64], strides = [1, 1]} : vector<8x256xf32> to vector<8x64xf32>
    %237 = arith.negf %236 : vector<8x64xf32>
    %238 = math.exp %237 : vector<8x64xf32>
    %cst_61 = arith.constant 1.000000e+00 : f32
    %239 = vector.broadcast %cst_61 : f32 to vector<8x64xf32>
    %240 = arith.addf %239, %238 : vector<8x64xf32>
    %241 = arith.divf %239, %240 : vector<8x64xf32>
    %242 = arith.mulf %233, %212 : vector<8x64xf32>
    %243 = arith.mulf %227, %235 : vector<8x64xf32>
    %244 = arith.addf %242, %243 : vector<8x64xf32>
    %245 = math.tanh %244 : vector<8x64xf32>
    %246 = arith.mulf %241, %245 : vector<8x64xf32>
    %247 = vector.extract_strided_slice %246 {offsets = [0, 0], sizes = [8, 32], strides = [1, 1]} : vector<8x64xf32> to vector<8x32xf32>
    %c40_62 = arith.constant 40 : index
    %c0_63 = arith.constant 0 : index
    %248 = vector.load %arg20[%c40_62, %c0_63] : memref<64x64xf32, #tpu.memory_space<vmem>>, vector<8x32xf32>
    tpu.vector_store %arg20[%c40_62, %c0_63], %247 {strides = array<i32>} : memref<64x64xf32, #tpu.memory_space<vmem>>, vector<8x32xf32>,
    %249 = vector.extract_strided_slice %246 {offsets = [0, 32], sizes = [8, 32], strides = [1, 1]} : vector<8x64xf32> to vector<8x32xf32>
    %c16_64 = arith.constant 16 : index
    %c32_65 = arith.constant 32 : index
    %250 = vector.load %arg20[%c16_64, %c32_65] : memref<64x64xf32, #tpu.memory_space<vmem>>, vector<8x32xf32>
    tpu.vector_store %arg20[%c16_64, %c32_65], %249 {strides = array<i32>} : memref<64x64xf32, #tpu.memory_space<vmem>>, vector<8x32xf32>,
    %251 = vector.extract_strided_slice %55 {offsets = [48, 0], sizes = [8, 256], strides = [1, 1]} : vector<64x256xf32> to vector<8x256xf32>
    %cst_66 = arith.constant dense<0.000000e+00> : vector<8x256xf32>
    %252 = tpu.matmul %246, %56, %cst_66 {dimension_numbers = #tpu.dot_dimension_numbers<[1], [0], [0], [1], [0, 0, 1, 1], [], []>} : vector<8x64xf32>, vector<64x256xf32>, vector<8x256xf32> -> vector<8x256xf32>
    %253 = arith.addf %251, %252 : vector<8x256xf32>
    %254 = vector.extract_strided_slice %253 {offsets = [0, 0], sizes = [8, 64], strides = [1, 1]} : vector<8x256xf32> to vector<8x64xf32>
    %255 = arith.negf %254 : vector<8x64xf32>
    %256 = math.exp %255 : vector<8x64xf32>
    %cst_67 = arith.constant 1.000000e+00 : f32
    %257 = vector.broadcast %cst_67 : f32 to vector<8x64xf32>
    %258 = arith.addf %257, %256 : vector<8x64xf32>
    %259 = arith.divf %257, %258 : vector<8x64xf32>
    %260 = vector.extract_strided_slice %253 {offsets = [0, 64], sizes = [8, 64], strides = [1, 1]} : vector<8x256xf32> to vector<8x64xf32>
    %261 = arith.negf %260 : vector<8x64xf32>
    %262 = math.exp %261 : vector<8x64xf32>
    %cst_68 = arith.constant 1.000000e+00 : f32
    %263 = vector.broadcast %cst_68 : f32 to vector<8x64xf32>
    %264 = arith.addf %263, %262 : vector<8x64xf32>
    %265 = arith.divf %263, %264 : vector<8x64xf32>
    %266 = vector.extract_strided_slice %253 {offsets = [0, 128], sizes = [8, 64], strides = [1, 1]} : vector<8x256xf32> to vector<8x64xf32>
    %267 = math.tanh %266 : vector<8x64xf32>
    %268 = vector.extract_strided_slice %253 {offsets = [0, 192], sizes = [8, 64], strides = [1, 1]} : vector<8x256xf32> to vector<8x64xf32>
    %269 = arith.negf %268 : vector<8x64xf32>
    %270 = math.exp %269 : vector<8x64xf32>
    %cst_69 = arith.constant 1.000000e+00 : f32
    %271 = vector.broadcast %cst_69 : f32 to vector<8x64xf32>
    %272 = arith.addf %271, %270 : vector<8x64xf32>
    %273 = arith.divf %271, %272 : vector<8x64xf32>
    %274 = arith.mulf %265, %244 : vector<8x64xf32>
    %275 = arith.mulf %259, %267 : vector<8x64xf32>
    %276 = arith.addf %274, %275 : vector<8x64xf32>
    %277 = math.tanh %276 : vector<8x64xf32>
    %278 = arith.mulf %273, %277 : vector<8x64xf32>
    %279 = vector.extract_strided_slice %278 {offsets = [0, 0], sizes = [8, 32], strides = [1, 1]} : vector<8x64xf32> to vector<8x32xf32>
    %c48_70 = arith.constant 48 : index
    %c0_71 = arith.constant 0 : index
    %280 = vector.load %arg20[%c48_70, %c0_71] : memref<64x64xf32, #tpu.memory_space<vmem>>, vector<8x32xf32>
    tpu.vector_store %arg20[%c48_70, %c0_71], %279 {strides = array<i32>} : memref<64x64xf32, #tpu.memory_space<vmem>>, vector<8x32xf32>,
    %281 = vector.extract_strided_slice %278 {offsets = [0, 32], sizes = [8, 32], strides = [1, 1]} : vector<8x64xf32> to vector<8x32xf32>
    %c8_72 = arith.constant 8 : index
    %c32_73 = arith.constant 32 : index
    %282 = vector.load %arg20[%c8_72, %c32_73] : memref<64x64xf32, #tpu.memory_space<vmem>>, vector<8x32xf32>
    tpu.vector_store %arg20[%c8_72, %c32_73], %281 {strides = array<i32>} : memref<64x64xf32, #tpu.memory_space<vmem>>, vector<8x32xf32>,
    %283 = vector.extract_strided_slice %55 {offsets = [56, 0], sizes = [8, 256], strides = [1, 1]} : vector<64x256xf32> to vector<8x256xf32>
    %cst_74 = arith.constant dense<0.000000e+00> : vector<8x256xf32>
    %284 = tpu.matmul %278, %56, %cst_74 {dimension_numbers = #tpu.dot_dimension_numbers<[1], [0], [0], [1], [0, 0, 1, 1], [], []>} : vector<8x64xf32>, vector<64x256xf32>, vector<8x256xf32> -> vector<8x256xf32>
    %285 = arith.addf %283, %284 : vector<8x256xf32>
    %286 = vector.extract_strided_slice %285 {offsets = [0, 0], sizes = [8, 64], strides = [1, 1]} : vector<8x256xf32> to vector<8x64xf32>
    %287 = arith.negf %286 : vector<8x64xf32>
    %288 = math.exp %287 : vector<8x64xf32>
    %cst_75 = arith.constant 1.000000e+00 : f32
    %289 = vector.broadcast %cst_75 : f32 to vector<8x64xf32>
    %290 = arith.addf %289, %288 : vector<8x64xf32>
    %291 = arith.divf %289, %290 : vector<8x64xf32>
    %292 = vector.extract_strided_slice %285 {offsets = [0, 64], sizes = [8, 64], strides = [1, 1]} : vector<8x256xf32> to vector<8x64xf32>
    %293 = arith.negf %292 : vector<8x64xf32>
    %294 = math.exp %293 : vector<8x64xf32>
    %cst_76 = arith.constant 1.000000e+00 : f32
    %295 = vector.broadcast %cst_76 : f32 to vector<8x64xf32>
    %296 = arith.addf %295, %294 : vector<8x64xf32>
    %297 = arith.divf %295, %296 : vector<8x64xf32>
    %298 = vector.extract_strided_slice %285 {offsets = [0, 128], sizes = [8, 64], strides = [1, 1]} : vector<8x256xf32> to vector<8x64xf32>
    %299 = math.tanh %298 : vector<8x64xf32>
    %300 = vector.extract_strided_slice %285 {offsets = [0, 192], sizes = [8, 64], strides = [1, 1]} : vector<8x256xf32> to vector<8x64xf32>
    %301 = arith.negf %300 : vector<8x64xf32>
    %302 = math.exp %301 : vector<8x64xf32>
    %cst_77 = arith.constant 1.000000e+00 : f32
    %303 = vector.broadcast %cst_77 : f32 to vector<8x64xf32>
    %304 = arith.addf %303, %302 : vector<8x64xf32>
    %305 = arith.divf %303, %304 : vector<8x64xf32>
    %306 = arith.mulf %297, %276 : vector<8x64xf32>
    %307 = arith.mulf %291, %299 : vector<8x64xf32>
    %308 = arith.addf %306, %307 : vector<8x64xf32>
    %309 = math.tanh %308 : vector<8x64xf32>
    %310 = arith.mulf %305, %309 : vector<8x64xf32>
    %311 = vector.extract_strided_slice %310 {offsets = [0, 0], sizes = [8, 32], strides = [1, 1]} : vector<8x64xf32> to vector<8x32xf32>
    %c56_78 = arith.constant 56 : index
    %c0_79 = arith.constant 0 : index
    %312 = vector.load %arg20[%c56_78, %c0_79] : memref<64x64xf32, #tpu.memory_space<vmem>>, vector<8x32xf32>
    tpu.vector_store %arg20[%c56_78, %c0_79], %311 {strides = array<i32>} : memref<64x64xf32, #tpu.memory_space<vmem>>, vector<8x32xf32>,
    %313 = vector.extract_strided_slice %310 {offsets = [0, 32], sizes = [8, 32], strides = [1, 1]} : vector<8x64xf32> to vector<8x32xf32>
    %c0_80 = arith.constant 0 : index
    %c32_81 = arith.constant 32 : index
    %314 = vector.load %arg20[%c0_80, %c32_81] : memref<64x64xf32, #tpu.memory_space<vmem>>, vector<8x32xf32>
    tpu.vector_store %arg20[%c0_80, %c32_81], %313 {strides = array<i32>} : memref<64x64xf32, #tpu.memory_space<vmem>>, vector<8x32xf32>,
    %c0_82 = arith.constant 0 : index
    %c0_83 = arith.constant 0 : index
    %315 = vector.load %arg20[%c0_82, %c0_83] : memref<64x64xf32, #tpu.memory_space<vmem>>, vector<64x64xf32>
    %c0_84 = arith.constant 0 : index
    %c0_85 = arith.constant 0 : index
    %316 = vector.load %arg10[%c0_84, %c0_85] : memref<64x256xf32, #tpu.memory_space<vmem>>, vector<64x256xf32>
    %cst_86 = arith.constant dense<0.000000e+00> : vector<64x256xf32>
    %317 = tpu.matmul %315, %316, %cst_86 {dimension_numbers = #tpu.dot_dimension_numbers<[1], [0], [0], [1], [0, 0, 1, 1], [], []>} : vector<64x64xf32>, vector<64x256xf32>, vector<64x256xf32> -> vector<64x256xf32>
    %318 = vector.extract_strided_slice %317 {offsets = [56, 0], sizes = [8, 256], strides = [1, 1]} : vector<64x256xf32> to vector<8x256xf32>
    %319 = vector.extract_strided_slice %317 {offsets = [48, 0], sizes = [8, 256], strides = [1, 1]} : vector<64x256xf32> to vector<8x256xf32>
    %320 = vector.extract_strided_slice %317 {offsets = [40, 0], sizes = [8, 256], strides = [1, 1]} : vector<64x256xf32> to vector<8x256xf32>
    %321 = vector.extract_strided_slice %317 {offsets = [32, 0], sizes = [8, 256], strides = [1, 1]} : vector<64x256xf32> to vector<8x256xf32>
    %322 = vector.extract_strided_slice %317 {offsets = [24, 0], sizes = [8, 256], strides = [1, 1]} : vector<64x256xf32> to vector<8x256xf32>
    %323 = vector.extract_strided_slice %317 {offsets = [16, 0], sizes = [8, 256], strides = [1, 1]} : vector<64x256xf32> to vector<8x256xf32>
    %324 = vector.extract_strided_slice %317 {offsets = [8, 0], sizes = [8, 256], strides = [1, 1]} : vector<64x256xf32> to vector<8x256xf32>
    %325 = vector.extract_strided_slice %317 {offsets = [0, 0], sizes = [8, 256], strides = [1, 1]} : vector<64x256xf32> to vector<8x256xf32>
    %326 = tpu.concatenate %318, %319, %320, %321, %322, %323, %324, %325 in 0 : vector<8x256xf32>, vector<8x256xf32>, vector<8x256xf32>, vector<8x256xf32>, vector<8x256xf32>, vector<8x256xf32>, vector<8x256xf32>, vector<8x256xf32> -> vector<64x256xf32>
    %327 = arith.subf %317, %326 : vector<64x256xf32>
    %328 = vector.broadcast %37 : vector<1x256xf32> to vector<64x256xf32>
    %329 = arith.mulf %328, %327 : vector<64x256xf32>
    %330 = arith.addf %326, %329 : vector<64x256xf32>
    %c0_87 = arith.constant 0 : index
    %c0_88 = arith.constant 0 : index
    %331 = vector.load %arg12[%c0_87, %c0_88] : memref<1x256xf32, #tpu.memory_space<vmem>>, vector<1x256xf32>
    %332 = vector.broadcast %331 : vector<1x256xf32> to vector<64x256xf32>
    %333 = arith.addf %330, %332 : vector<64x256xf32>
    %c0_89 = arith.constant 0 : index
    %c0_90 = arith.constant 0 : index
    %334 = vector.load %arg11[%c0_89, %c0_90] : memref<64x256xf32, #tpu.memory_space<vmem>>, vector<64x256xf32>
    %cst_91 = arith.constant 0.000000e+00 : f32
    %335 = vector.broadcast %cst_91 : f32 to vector<8x64xf32>
    %cst_92 = arith.constant 0.000000e+00 : f32
    %336 = vector.broadcast %cst_92 : f32 to vector<8x64xf32>
    %337 = vector.extract_strided_slice %333 {offsets = [0, 0], sizes = [8, 256], strides = [1, 1]} : vector<64x256xf32> to vector<8x256xf32>
    %cst_93 = arith.constant dense<0.000000e+00> : vector<8x256xf32>
    %338 = tpu.matmul %335, %334, %cst_93 {dimension_numbers = #tpu.dot_dimension_numbers<[1], [0], [0], [1], [0, 0, 1, 1], [], []>} : vector<8x64xf32>, vector<64x256xf32>, vector<8x256xf32> -> vector<8x256xf32>
    %339 = arith.addf %337, %338 : vector<8x256xf32>
    %340 = vector.extract_strided_slice %339 {offsets = [0, 0], sizes = [8, 64], strides = [1, 1]} : vector<8x256xf32> to vector<8x64xf32>
    %341 = arith.negf %340 : vector<8x64xf32>
    %342 = math.exp %341 : vector<8x64xf32>
    %cst_94 = arith.constant 1.000000e+00 : f32
    %343 = vector.broadcast %cst_94 : f32 to vector<8x64xf32>
    %344 = arith.addf %343, %342 : vector<8x64xf32>
    %345 = arith.divf %343, %344 : vector<8x64xf32>
    %346 = vector.extract_strided_slice %339 {offsets = [0, 64], sizes = [8, 64], strides = [1, 1]} : vector<8x256xf32> to vector<8x64xf32>
    %347 = arith.negf %346 : vector<8x64xf32>
    %348 = math.exp %347 : vector<8x64xf32>
    %cst_95 = arith.constant 1.000000e+00 : f32
    %349 = vector.broadcast %cst_95 : f32 to vector<8x64xf32>
    %350 = arith.addf %349, %348 : vector<8x64xf32>
    %351 = arith.divf %349, %350 : vector<8x64xf32>
    %352 = vector.extract_strided_slice %339 {offsets = [0, 128], sizes = [8, 64], strides = [1, 1]} : vector<8x256xf32> to vector<8x64xf32>
    %353 = math.tanh %352 : vector<8x64xf32>
    %354 = vector.extract_strided_slice %339 {offsets = [0, 192], sizes = [8, 64], strides = [1, 1]} : vector<8x256xf32> to vector<8x64xf32>
    %355 = arith.negf %354 : vector<8x64xf32>
    %356 = math.exp %355 : vector<8x64xf32>
    %cst_96 = arith.constant 1.000000e+00 : f32
    %357 = vector.broadcast %cst_96 : f32 to vector<8x64xf32>
    %358 = arith.addf %357, %356 : vector<8x64xf32>
    %359 = arith.divf %357, %358 : vector<8x64xf32>
    %360 = arith.mulf %351, %336 : vector<8x64xf32>
    %361 = arith.mulf %345, %353 : vector<8x64xf32>
    %362 = arith.addf %360, %361 : vector<8x64xf32>
    %363 = math.tanh %362 : vector<8x64xf32>
    %364 = arith.mulf %359, %363 : vector<8x64xf32>
    %365 = vector.extract_strided_slice %364 {offsets = [0, 0], sizes = [8, 32], strides = [1, 1]} : vector<8x64xf32> to vector<8x32xf32>
    %c0_97 = arith.constant 0 : index
    %c0_98 = arith.constant 0 : index
    %366 = vector.load %arg21[%c0_97, %c0_98] : memref<64x64xf32, #tpu.memory_space<vmem>>, vector<8x32xf32>
    tpu.vector_store %arg21[%c0_97, %c0_98], %365 {strides = array<i32>} : memref<64x64xf32, #tpu.memory_space<vmem>>, vector<8x32xf32>,
    %367 = vector.extract_strided_slice %364 {offsets = [0, 32], sizes = [8, 32], strides = [1, 1]} : vector<8x64xf32> to vector<8x32xf32>
    %c56_99 = arith.constant 56 : index
    %c32_100 = arith.constant 32 : index
    %368 = vector.load %arg21[%c56_99, %c32_100] : memref<64x64xf32, #tpu.memory_space<vmem>>, vector<8x32xf32>
    tpu.vector_store %arg21[%c56_99, %c32_100], %367 {strides = array<i32>} : memref<64x64xf32, #tpu.memory_space<vmem>>, vector<8x32xf32>,
    %369 = vector.extract_strided_slice %333 {offsets = [8, 0], sizes = [8, 256], strides = [1, 1]} : vector<64x256xf32> to vector<8x256xf32>
    %cst_101 = arith.constant dense<0.000000e+00> : vector<8x256xf32>
    %370 = tpu.matmul %364, %334, %cst_101 {dimension_numbers = #tpu.dot_dimension_numbers<[1], [0], [0], [1], [0, 0, 1, 1], [], []>} : vector<8x64xf32>, vector<64x256xf32>, vector<8x256xf32> -> vector<8x256xf32>
    %371 = arith.addf %369, %370 : vector<8x256xf32>
    %372 = vector.extract_strided_slice %371 {offsets = [0, 0], sizes = [8, 64], strides = [1, 1]} : vector<8x256xf32> to vector<8x64xf32>
    %373 = arith.negf %372 : vector<8x64xf32>
    %374 = math.exp %373 : vector<8x64xf32>
    %cst_102 = arith.constant 1.000000e+00 : f32
    %375 = vector.broadcast %cst_102 : f32 to vector<8x64xf32>
    %376 = arith.addf %375, %374 : vector<8x64xf32>
    %377 = arith.divf %375, %376 : vector<8x64xf32>
    %378 = vector.extract_strided_slice %371 {offsets = [0, 64], sizes = [8, 64], strides = [1, 1]} : vector<8x256xf32> to vector<8x64xf32>
    %379 = arith.negf %378 : vector<8x64xf32>
    %380 = math.exp %379 : vector<8x64xf32>
    %cst_103 = arith.constant 1.000000e+00 : f32
    %381 = vector.broadcast %cst_103 : f32 to vector<8x64xf32>
    %382 = arith.addf %381, %380 : vector<8x64xf32>
    %383 = arith.divf %381, %382 : vector<8x64xf32>
    %384 = vector.extract_strided_slice %371 {offsets = [0, 128], sizes = [8, 64], strides = [1, 1]} : vector<8x256xf32> to vector<8x64xf32>
    %385 = math.tanh %384 : vector<8x64xf32>
    %386 = vector.extract_strided_slice %371 {offsets = [0, 192], sizes = [8, 64], strides = [1, 1]} : vector<8x256xf32> to vector<8x64xf32>
    %387 = arith.negf %386 : vector<8x64xf32>
    %388 = math.exp %387 : vector<8x64xf32>
    %cst_104 = arith.constant 1.000000e+00 : f32
    %389 = vector.broadcast %cst_104 : f32 to vector<8x64xf32>
    %390 = arith.addf %389, %388 : vector<8x64xf32>
    %391 = arith.divf %389, %390 : vector<8x64xf32>
    %392 = arith.mulf %383, %362 : vector<8x64xf32>
    %393 = arith.mulf %377, %385 : vector<8x64xf32>
    %394 = arith.addf %392, %393 : vector<8x64xf32>
    %395 = math.tanh %394 : vector<8x64xf32>
    %396 = arith.mulf %391, %395 : vector<8x64xf32>
    %397 = vector.extract_strided_slice %396 {offsets = [0, 0], sizes = [8, 32], strides = [1, 1]} : vector<8x64xf32> to vector<8x32xf32>
    %c8_105 = arith.constant 8 : index
    %c0_106 = arith.constant 0 : index
    %398 = vector.load %arg21[%c8_105, %c0_106] : memref<64x64xf32, #tpu.memory_space<vmem>>, vector<8x32xf32>
    tpu.vector_store %arg21[%c8_105, %c0_106], %397 {strides = array<i32>} : memref<64x64xf32, #tpu.memory_space<vmem>>, vector<8x32xf32>,
    %399 = vector.extract_strided_slice %396 {offsets = [0, 32], sizes = [8, 32], strides = [1, 1]} : vector<8x64xf32> to vector<8x32xf32>
    %c48_107 = arith.constant 48 : index
    %c32_108 = arith.constant 32 : index
    %400 = vector.load %arg21[%c48_107, %c32_108] : memref<64x64xf32, #tpu.memory_space<vmem>>, vector<8x32xf32>
    tpu.vector_store %arg21[%c48_107, %c32_108], %399 {strides = array<i32>} : memref<64x64xf32, #tpu.memory_space<vmem>>, vector<8x32xf32>,
    %401 = vector.extract_strided_slice %333 {offsets = [16, 0], sizes = [8, 256], strides = [1, 1]} : vector<64x256xf32> to vector<8x256xf32>
    %cst_109 = arith.constant dense<0.000000e+00> : vector<8x256xf32>
    %402 = tpu.matmul %396, %334, %cst_109 {dimension_numbers = #tpu.dot_dimension_numbers<[1], [0], [0], [1], [0, 0, 1, 1], [], []>} : vector<8x64xf32>, vector<64x256xf32>, vector<8x256xf32> -> vector<8x256xf32>
    %403 = arith.addf %401, %402 : vector<8x256xf32>
    %404 = vector.extract_strided_slice %403 {offsets = [0, 0], sizes = [8, 64], strides = [1, 1]} : vector<8x256xf32> to vector<8x64xf32>
    %405 = arith.negf %404 : vector<8x64xf32>
    %406 = math.exp %405 : vector<8x64xf32>
    %cst_110 = arith.constant 1.000000e+00 : f32
    %407 = vector.broadcast %cst_110 : f32 to vector<8x64xf32>
    %408 = arith.addf %407, %406 : vector<8x64xf32>
    %409 = arith.divf %407, %408 : vector<8x64xf32>
    %410 = vector.extract_strided_slice %403 {offsets = [0, 64], sizes = [8, 64], strides = [1, 1]} : vector<8x256xf32> to vector<8x64xf32>
    %411 = arith.negf %410 : vector<8x64xf32>
    %412 = math.exp %411 : vector<8x64xf32>
    %cst_111 = arith.constant 1.000000e+00 : f32
    %413 = vector.broadcast %cst_111 : f32 to vector<8x64xf32>
    %414 = arith.addf %413, %412 : vector<8x64xf32>
    %415 = arith.divf %413, %414 : vector<8x64xf32>
    %416 = vector.extract_strided_slice %403 {offsets = [0, 128], sizes = [8, 64], strides = [1, 1]} : vector<8x256xf32> to vector<8x64xf32>
    %417 = math.tanh %416 : vector<8x64xf32>
    %418 = vector.extract_strided_slice %403 {offsets = [0, 192], sizes = [8, 64], strides = [1, 1]} : vector<8x256xf32> to vector<8x64xf32>
    %419 = arith.negf %418 : vector<8x64xf32>
    %420 = math.exp %419 : vector<8x64xf32>
    %cst_112 = arith.constant 1.000000e+00 : f32
    %421 = vector.broadcast %cst_112 : f32 to vector<8x64xf32>
    %422 = arith.addf %421, %420 : vector<8x64xf32>
    %423 = arith.divf %421, %422 : vector<8x64xf32>
    %424 = arith.mulf %415, %394 : vector<8x64xf32>
    %425 = arith.mulf %409, %417 : vector<8x64xf32>
    %426 = arith.addf %424, %425 : vector<8x64xf32>
    %427 = math.tanh %426 : vector<8x64xf32>
    %428 = arith.mulf %423, %427 : vector<8x64xf32>
    %429 = vector.extract_strided_slice %428 {offsets = [0, 0], sizes = [8, 32], strides = [1, 1]} : vector<8x64xf32> to vector<8x32xf32>
    %c16_113 = arith.constant 16 : index
    %c0_114 = arith.constant 0 : index
    %430 = vector.load %arg21[%c16_113, %c0_114] : memref<64x64xf32, #tpu.memory_space<vmem>>, vector<8x32xf32>
    tpu.vector_store %arg21[%c16_113, %c0_114], %429 {strides = array<i32>} : memref<64x64xf32, #tpu.memory_space<vmem>>, vector<8x32xf32>,
    %431 = vector.extract_strided_slice %428 {offsets = [0, 32], sizes = [8, 32], strides = [1, 1]} : vector<8x64xf32> to vector<8x32xf32>
    %c40_115 = arith.constant 40 : index
    %c32_116 = arith.constant 32 : index
    %432 = vector.load %arg21[%c40_115, %c32_116] : memref<64x64xf32, #tpu.memory_space<vmem>>, vector<8x32xf32>
    tpu.vector_store %arg21[%c40_115, %c32_116], %431 {strides = array<i32>} : memref<64x64xf32, #tpu.memory_space<vmem>>, vector<8x32xf32>,
    %433 = vector.extract_strided_slice %333 {offsets = [24, 0], sizes = [8, 256], strides = [1, 1]} : vector<64x256xf32> to vector<8x256xf32>
    %cst_117 = arith.constant dense<0.000000e+00> : vector<8x256xf32>
    %434 = tpu.matmul %428, %334, %cst_117 {dimension_numbers = #tpu.dot_dimension_numbers<[1], [0], [0], [1], [0, 0, 1, 1], [], []>} : vector<8x64xf32>, vector<64x256xf32>, vector<8x256xf32> -> vector<8x256xf32>
    %435 = arith.addf %433, %434 : vector<8x256xf32>
    %436 = vector.extract_strided_slice %435 {offsets = [0, 0], sizes = [8, 64], strides = [1, 1]} : vector<8x256xf32> to vector<8x64xf32>
    %437 = arith.negf %436 : vector<8x64xf32>
    %438 = math.exp %437 : vector<8x64xf32>
    %cst_118 = arith.constant 1.000000e+00 : f32
    %439 = vector.broadcast %cst_118 : f32 to vector<8x64xf32>
    %440 = arith.addf %439, %438 : vector<8x64xf32>
    %441 = arith.divf %439, %440 : vector<8x64xf32>
    %442 = vector.extract_strided_slice %435 {offsets = [0, 64], sizes = [8, 64], strides = [1, 1]} : vector<8x256xf32> to vector<8x64xf32>
    %443 = arith.negf %442 : vector<8x64xf32>
    %444 = math.exp %443 : vector<8x64xf32>
    %cst_119 = arith.constant 1.000000e+00 : f32
    %445 = vector.broadcast %cst_119 : f32 to vector<8x64xf32>
    %446 = arith.addf %445, %444 : vector<8x64xf32>
    %447 = arith.divf %445, %446 : vector<8x64xf32>
    %448 = vector.extract_strided_slice %435 {offsets = [0, 128], sizes = [8, 64], strides = [1, 1]} : vector<8x256xf32> to vector<8x64xf32>
    %449 = math.tanh %448 : vector<8x64xf32>
    %450 = vector.extract_strided_slice %435 {offsets = [0, 192], sizes = [8, 64], strides = [1, 1]} : vector<8x256xf32> to vector<8x64xf32>
    %451 = arith.negf %450 : vector<8x64xf32>
    %452 = math.exp %451 : vector<8x64xf32>
    %cst_120 = arith.constant 1.000000e+00 : f32
    %453 = vector.broadcast %cst_120 : f32 to vector<8x64xf32>
    %454 = arith.addf %453, %452 : vector<8x64xf32>
    %455 = arith.divf %453, %454 : vector<8x64xf32>
    %456 = arith.mulf %447, %426 : vector<8x64xf32>
    %457 = arith.mulf %441, %449 : vector<8x64xf32>
    %458 = arith.addf %456, %457 : vector<8x64xf32>
    %459 = math.tanh %458 : vector<8x64xf32>
    %460 = arith.mulf %455, %459 : vector<8x64xf32>
    %461 = vector.extract_strided_slice %460 {offsets = [0, 0], sizes = [8, 32], strides = [1, 1]} : vector<8x64xf32> to vector<8x32xf32>
    %c24_121 = arith.constant 24 : index
    %c0_122 = arith.constant 0 : index
    %462 = vector.load %arg21[%c24_121, %c0_122] : memref<64x64xf32, #tpu.memory_space<vmem>>, vector<8x32xf32>
    tpu.vector_store %arg21[%c24_121, %c0_122], %461 {strides = array<i32>} : memref<64x64xf32, #tpu.memory_space<vmem>>, vector<8x32xf32>,
    %463 = vector.extract_strided_slice %460 {offsets = [0, 32], sizes = [8, 32], strides = [1, 1]} : vector<8x64xf32> to vector<8x32xf32>
    %c32_123 = arith.constant 32 : index
    %c32_124 = arith.constant 32 : index
    %464 = vector.load %arg21[%c32_123, %c32_124] : memref<64x64xf32, #tpu.memory_space<vmem>>, vector<8x32xf32>
    tpu.vector_store %arg21[%c32_123, %c32_124], %463 {strides = array<i32>} : memref<64x64xf32, #tpu.memory_space<vmem>>, vector<8x32xf32>,
    %465 = vector.extract_strided_slice %333 {offsets = [32, 0], sizes = [8, 256], strides = [1, 1]} : vector<64x256xf32> to vector<8x256xf32>
    %cst_125 = arith.constant dense<0.000000e+00> : vector<8x256xf32>
    %466 = tpu.matmul %460, %334, %cst_125 {dimension_numbers = #tpu.dot_dimension_numbers<[1], [0], [0], [1], [0, 0, 1, 1], [], []>} : vector<8x64xf32>, vector<64x256xf32>, vector<8x256xf32> -> vector<8x256xf32>
    %467 = arith.addf %465, %466 : vector<8x256xf32>
    %468 = vector.extract_strided_slice %467 {offsets = [0, 0], sizes = [8, 64], strides = [1, 1]} : vector<8x256xf32> to vector<8x64xf32>
    %469 = arith.negf %468 : vector<8x64xf32>
    %470 = math.exp %469 : vector<8x64xf32>
    %cst_126 = arith.constant 1.000000e+00 : f32
    %471 = vector.broadcast %cst_126 : f32 to vector<8x64xf32>
    %472 = arith.addf %471, %470 : vector<8x64xf32>
    %473 = arith.divf %471, %472 : vector<8x64xf32>
    %474 = vector.extract_strided_slice %467 {offsets = [0, 64], sizes = [8, 64], strides = [1, 1]} : vector<8x256xf32> to vector<8x64xf32>
    %475 = arith.negf %474 : vector<8x64xf32>
    %476 = math.exp %475 : vector<8x64xf32>
    %cst_127 = arith.constant 1.000000e+00 : f32
    %477 = vector.broadcast %cst_127 : f32 to vector<8x64xf32>
    %478 = arith.addf %477, %476 : vector<8x64xf32>
    %479 = arith.divf %477, %478 : vector<8x64xf32>
    %480 = vector.extract_strided_slice %467 {offsets = [0, 128], sizes = [8, 64], strides = [1, 1]} : vector<8x256xf32> to vector<8x64xf32>
    %481 = math.tanh %480 : vector<8x64xf32>
    %482 = vector.extract_strided_slice %467 {offsets = [0, 192], sizes = [8, 64], strides = [1, 1]} : vector<8x256xf32> to vector<8x64xf32>
    %483 = arith.negf %482 : vector<8x64xf32>
    %484 = math.exp %483 : vector<8x64xf32>
    %cst_128 = arith.constant 1.000000e+00 : f32
    %485 = vector.broadcast %cst_128 : f32 to vector<8x64xf32>
    %486 = arith.addf %485, %484 : vector<8x64xf32>
    %487 = arith.divf %485, %486 : vector<8x64xf32>
    %488 = arith.mulf %479, %458 : vector<8x64xf32>
    %489 = arith.mulf %473, %481 : vector<8x64xf32>
    %490 = arith.addf %488, %489 : vector<8x64xf32>
    %491 = math.tanh %490 : vector<8x64xf32>
    %492 = arith.mulf %487, %491 : vector<8x64xf32>
    %493 = vector.extract_strided_slice %492 {offsets = [0, 0], sizes = [8, 32], strides = [1, 1]} : vector<8x64xf32> to vector<8x32xf32>
    %c32_129 = arith.constant 32 : index
    %c0_130 = arith.constant 0 : index
    %494 = vector.load %arg21[%c32_129, %c0_130] : memref<64x64xf32, #tpu.memory_space<vmem>>, vector<8x32xf32>
    tpu.vector_store %arg21[%c32_129, %c0_130], %493 {strides = array<i32>} : memref<64x64xf32, #tpu.memory_space<vmem>>, vector<8x32xf32>,
    %495 = vector.extract_strided_slice %492 {offsets = [0, 32], sizes = [8, 32], strides = [1, 1]} : vector<8x64xf32> to vector<8x32xf32>
    %c24_131 = arith.constant 24 : index
    %c32_132 = arith.constant 32 : index
    %496 = vector.load %arg21[%c24_131, %c32_132] : memref<64x64xf32, #tpu.memory_space<vmem>>, vector<8x32xf32>
    tpu.vector_store %arg21[%c24_131, %c32_132], %495 {strides = array<i32>} : memref<64x64xf32, #tpu.memory_space<vmem>>, vector<8x32xf32>,
    %497 = vector.extract_strided_slice %333 {offsets = [40, 0], sizes = [8, 256], strides = [1, 1]} : vector<64x256xf32> to vector<8x256xf32>
    %cst_133 = arith.constant dense<0.000000e+00> : vector<8x256xf32>
    %498 = tpu.matmul %492, %334, %cst_133 {dimension_numbers = #tpu.dot_dimension_numbers<[1], [0], [0], [1], [0, 0, 1, 1], [], []>} : vector<8x64xf32>, vector<64x256xf32>, vector<8x256xf32> -> vector<8x256xf32>
    %499 = arith.addf %497, %498 : vector<8x256xf32>
    %500 = vector.extract_strided_slice %499 {offsets = [0, 0], sizes = [8, 64], strides = [1, 1]} : vector<8x256xf32> to vector<8x64xf32>
    %501 = arith.negf %500 : vector<8x64xf32>
    %502 = math.exp %501 : vector<8x64xf32>
    %cst_134 = arith.constant 1.000000e+00 : f32
    %503 = vector.broadcast %cst_134 : f32 to vector<8x64xf32>
    %504 = arith.addf %503, %502 : vector<8x64xf32>
    %505 = arith.divf %503, %504 : vector<8x64xf32>
    %506 = vector.extract_strided_slice %499 {offsets = [0, 64], sizes = [8, 64], strides = [1, 1]} : vector<8x256xf32> to vector<8x64xf32>
    %507 = arith.negf %506 : vector<8x64xf32>
    %508 = math.exp %507 : vector<8x64xf32>
    %cst_135 = arith.constant 1.000000e+00 : f32
    %509 = vector.broadcast %cst_135 : f32 to vector<8x64xf32>
    %510 = arith.addf %509, %508 : vector<8x64xf32>
    %511 = arith.divf %509, %510 : vector<8x64xf32>
    %512 = vector.extract_strided_slice %499 {offsets = [0, 128], sizes = [8, 64], strides = [1, 1]} : vector<8x256xf32> to vector<8x64xf32>
    %513 = math.tanh %512 : vector<8x64xf32>
    %514 = vector.extract_strided_slice %499 {offsets = [0, 192], sizes = [8, 64], strides = [1, 1]} : vector<8x256xf32> to vector<8x64xf32>
    %515 = arith.negf %514 : vector<8x64xf32>
    %516 = math.exp %515 : vector<8x64xf32>
    %cst_136 = arith.constant 1.000000e+00 : f32
    %517 = vector.broadcast %cst_136 : f32 to vector<8x64xf32>
    %518 = arith.addf %517, %516 : vector<8x64xf32>
    %519 = arith.divf %517, %518 : vector<8x64xf32>
    %520 = arith.mulf %511, %490 : vector<8x64xf32>
    %521 = arith.mulf %505, %513 : vector<8x64xf32>
    %522 = arith.addf %520, %521 : vector<8x64xf32>
    %523 = math.tanh %522 : vector<8x64xf32>
    %524 = arith.mulf %519, %523 : vector<8x64xf32>
    %525 = vector.extract_strided_slice %524 {offsets = [0, 0], sizes = [8, 32], strides = [1, 1]} : vector<8x64xf32> to vector<8x32xf32>
    %c40_137 = arith.constant 40 : index
    %c0_138 = arith.constant 0 : index
    %526 = vector.load %arg21[%c40_137, %c0_138] : memref<64x64xf32, #tpu.memory_space<vmem>>, vector<8x32xf32>
    tpu.vector_store %arg21[%c40_137, %c0_138], %525 {strides = array<i32>} : memref<64x64xf32, #tpu.memory_space<vmem>>, vector<8x32xf32>,
    %527 = vector.extract_strided_slice %524 {offsets = [0, 32], sizes = [8, 32], strides = [1, 1]} : vector<8x64xf32> to vector<8x32xf32>
    %c16_139 = arith.constant 16 : index
    %c32_140 = arith.constant 32 : index
    %528 = vector.load %arg21[%c16_139, %c32_140] : memref<64x64xf32, #tpu.memory_space<vmem>>, vector<8x32xf32>
    tpu.vector_store %arg21[%c16_139, %c32_140], %527 {strides = array<i32>} : memref<64x64xf32, #tpu.memory_space<vmem>>, vector<8x32xf32>,
    %529 = vector.extract_strided_slice %333 {offsets = [48, 0], sizes = [8, 256], strides = [1, 1]} : vector<64x256xf32> to vector<8x256xf32>
    %cst_141 = arith.constant dense<0.000000e+00> : vector<8x256xf32>
    %530 = tpu.matmul %524, %334, %cst_141 {dimension_numbers = #tpu.dot_dimension_numbers<[1], [0], [0], [1], [0, 0, 1, 1], [], []>} : vector<8x64xf32>, vector<64x256xf32>, vector<8x256xf32> -> vector<8x256xf32>
    %531 = arith.addf %529, %530 : vector<8x256xf32>
    %532 = vector.extract_strided_slice %531 {offsets = [0, 0], sizes = [8, 64], strides = [1, 1]} : vector<8x256xf32> to vector<8x64xf32>
    %533 = arith.negf %532 : vector<8x64xf32>
    %534 = math.exp %533 : vector<8x64xf32>
    %cst_142 = arith.constant 1.000000e+00 : f32
    %535 = vector.broadcast %cst_142 : f32 to vector<8x64xf32>
    %536 = arith.addf %535, %534 : vector<8x64xf32>
    %537 = arith.divf %535, %536 : vector<8x64xf32>
    %538 = vector.extract_strided_slice %531 {offsets = [0, 64], sizes = [8, 64], strides = [1, 1]} : vector<8x256xf32> to vector<8x64xf32>
    %539 = arith.negf %538 : vector<8x64xf32>
    %540 = math.exp %539 : vector<8x64xf32>
    %cst_143 = arith.constant 1.000000e+00 : f32
    %541 = vector.broadcast %cst_143 : f32 to vector<8x64xf32>
    %542 = arith.addf %541, %540 : vector<8x64xf32>
    %543 = arith.divf %541, %542 : vector<8x64xf32>
    %544 = vector.extract_strided_slice %531 {offsets = [0, 128], sizes = [8, 64], strides = [1, 1]} : vector<8x256xf32> to vector<8x64xf32>
    %545 = math.tanh %544 : vector<8x64xf32>
    %546 = vector.extract_strided_slice %531 {offsets = [0, 192], sizes = [8, 64], strides = [1, 1]} : vector<8x256xf32> to vector<8x64xf32>
    %547 = arith.negf %546 : vector<8x64xf32>
    %548 = math.exp %547 : vector<8x64xf32>
    %cst_144 = arith.constant 1.000000e+00 : f32
    %549 = vector.broadcast %cst_144 : f32 to vector<8x64xf32>
    %550 = arith.addf %549, %548 : vector<8x64xf32>
    %551 = arith.divf %549, %550 : vector<8x64xf32>
    %552 = arith.mulf %543, %522 : vector<8x64xf32>
    %553 = arith.mulf %537, %545 : vector<8x64xf32>
    %554 = arith.addf %552, %553 : vector<8x64xf32>
    %555 = math.tanh %554 : vector<8x64xf32>
    %556 = arith.mulf %551, %555 : vector<8x64xf32>
    %557 = vector.extract_strided_slice %556 {offsets = [0, 0], sizes = [8, 32], strides = [1, 1]} : vector<8x64xf32> to vector<8x32xf32>
    %c48_145 = arith.constant 48 : index
    %c0_146 = arith.constant 0 : index
    %558 = vector.load %arg21[%c48_145, %c0_146] : memref<64x64xf32, #tpu.memory_space<vmem>>, vector<8x32xf32>
    tpu.vector_store %arg21[%c48_145, %c0_146], %557 {strides = array<i32>} : memref<64x64xf32, #tpu.memory_space<vmem>>, vector<8x32xf32>,
    %559 = vector.extract_strided_slice %556 {offsets = [0, 32], sizes = [8, 32], strides = [1, 1]} : vector<8x64xf32> to vector<8x32xf32>
    %c8_147 = arith.constant 8 : index
    %c32_148 = arith.constant 32 : index
    %560 = vector.load %arg21[%c8_147, %c32_148] : memref<64x64xf32, #tpu.memory_space<vmem>>, vector<8x32xf32>
    tpu.vector_store %arg21[%c8_147, %c32_148], %559 {strides = array<i32>} : memref<64x64xf32, #tpu.memory_space<vmem>>, vector<8x32xf32>,
    %561 = vector.extract_strided_slice %333 {offsets = [56, 0], sizes = [8, 256], strides = [1, 1]} : vector<64x256xf32> to vector<8x256xf32>
    %cst_149 = arith.constant dense<0.000000e+00> : vector<8x256xf32>
    %562 = tpu.matmul %556, %334, %cst_149 {dimension_numbers = #tpu.dot_dimension_numbers<[1], [0], [0], [1], [0, 0, 1, 1], [], []>} : vector<8x64xf32>, vector<64x256xf32>, vector<8x256xf32> -> vector<8x256xf32>
    %563 = arith.addf %561, %562 : vector<8x256xf32>
    %564 = vector.extract_strided_slice %563 {offsets = [0, 0], sizes = [8, 64], strides = [1, 1]} : vector<8x256xf32> to vector<8x64xf32>
    %565 = arith.negf %564 : vector<8x64xf32>
    %566 = math.exp %565 : vector<8x64xf32>
    %cst_150 = arith.constant 1.000000e+00 : f32
    %567 = vector.broadcast %cst_150 : f32 to vector<8x64xf32>
    %568 = arith.addf %567, %566 : vector<8x64xf32>
    %569 = arith.divf %567, %568 : vector<8x64xf32>
    %570 = vector.extract_strided_slice %563 {offsets = [0, 64], sizes = [8, 64], strides = [1, 1]} : vector<8x256xf32> to vector<8x64xf32>
    %571 = arith.negf %570 : vector<8x64xf32>
    %572 = math.exp %571 : vector<8x64xf32>
    %cst_151 = arith.constant 1.000000e+00 : f32
    %573 = vector.broadcast %cst_151 : f32 to vector<8x64xf32>
    %574 = arith.addf %573, %572 : vector<8x64xf32>
    %575 = arith.divf %573, %574 : vector<8x64xf32>
    %576 = vector.extract_strided_slice %563 {offsets = [0, 128], sizes = [8, 64], strides = [1, 1]} : vector<8x256xf32> to vector<8x64xf32>
    %577 = math.tanh %576 : vector<8x64xf32>
    %578 = vector.extract_strided_slice %563 {offsets = [0, 192], sizes = [8, 64], strides = [1, 1]} : vector<8x256xf32> to vector<8x64xf32>
    %579 = arith.negf %578 : vector<8x64xf32>
    %580 = math.exp %579 : vector<8x64xf32>
    %cst_152 = arith.constant 1.000000e+00 : f32
    %581 = vector.broadcast %cst_152 : f32 to vector<8x64xf32>
    %582 = arith.addf %581, %580 : vector<8x64xf32>
    %583 = arith.divf %581, %582 : vector<8x64xf32>
    %584 = arith.mulf %575, %554 : vector<8x64xf32>
    %585 = arith.mulf %569, %577 : vector<8x64xf32>
    %586 = arith.addf %584, %585 : vector<8x64xf32>
    %587 = math.tanh %586 : vector<8x64xf32>
    %588 = arith.mulf %583, %587 : vector<8x64xf32>
    %589 = vector.extract_strided_slice %588 {offsets = [0, 0], sizes = [8, 32], strides = [1, 1]} : vector<8x64xf32> to vector<8x32xf32>
    %c56_153 = arith.constant 56 : index
    %c0_154 = arith.constant 0 : index
    %590 = vector.load %arg21[%c56_153, %c0_154] : memref<64x64xf32, #tpu.memory_space<vmem>>, vector<8x32xf32>
    tpu.vector_store %arg21[%c56_153, %c0_154], %589 {strides = array<i32>} : memref<64x64xf32, #tpu.memory_space<vmem>>, vector<8x32xf32>,
    %591 = vector.extract_strided_slice %588 {offsets = [0, 32], sizes = [8, 32], strides = [1, 1]} : vector<8x64xf32> to vector<8x32xf32>
    %c0_155 = arith.constant 0 : index
    %c32_156 = arith.constant 32 : index
    %592 = vector.load %arg21[%c0_155, %c32_156] : memref<64x64xf32, #tpu.memory_space<vmem>>, vector<8x32xf32>
    tpu.vector_store %arg21[%c0_155, %c32_156], %591 {strides = array<i32>} : memref<64x64xf32, #tpu.memory_space<vmem>>, vector<8x32xf32>,
    %c0_157 = arith.constant 0 : index
    %c0_158 = arith.constant 0 : index
    %593 = vector.load %arg21[%c0_157, %c0_158] : memref<64x64xf32, #tpu.memory_space<vmem>>, vector<64x64xf32>
    %c0_159 = arith.constant 0 : index
    %c0_160 = arith.constant 0 : index
    %594 = vector.load %arg13[%c0_159, %c0_160] : memref<1x64xf32, #tpu.memory_space<vmem>>, vector<1x64xf32>
    %c0_161 = arith.constant 0 : index
    %c0_162 = arith.constant 0 : index
    %595 = vector.load %arg14[%c0_161, %c0_162] : memref<1x64xf32, #tpu.memory_space<vmem>>, vector<1x64xf32>
    %596 = vector.broadcast %0 : vector<64x1xf32> to vector<64x64xf32>
    %597 = arith.mulf %593, %596 : vector<64x64xf32>
    %cst_163 = arith.constant dense<0.000000e+00> : vector<64xf32>
    %598 = vector.multi_reduction <add>, %597, %cst_163 [0] : vector<64x64xf32> to vector<64xf32>
    %599 = vector.shape_cast %598 : vector<64xf32> to vector<1x64xf32>
    %cst_164 = arith.constant 1.600000e+01 : f32
    %600 = vector.broadcast %cst_164 : f32 to vector<1x64xf32>
    %601 = arith.divf %599, %600 : vector<1x64xf32>
    %602 = vector.broadcast %601 : vector<1x64xf32> to vector<64x64xf32>
    %603 = arith.subf %593, %602 : vector<64x64xf32>
    %604 = arith.mulf %603, %603 : vector<64x64xf32>
    %605 = vector.broadcast %0 : vector<64x1xf32> to vector<64x64xf32>
    %606 = arith.mulf %604, %605 : vector<64x64xf32>
    %cst_165 = arith.constant dense<0.000000e+00> : vector<64xf32>
    %607 = vector.multi_reduction <add>, %606, %cst_165 [0] : vector<64x64xf32> to vector<64xf32>
    %608 = vector.shape_cast %607 : vector<64xf32> to vector<1x64xf32>
    %cst_166 = arith.constant 1.600000e+01 : f32
    %609 = vector.broadcast %cst_166 : f32 to vector<1x64xf32>
    %610 = arith.divf %608, %609 : vector<1x64xf32>
    %611 = vector.broadcast %601 : vector<1x64xf32> to vector<64x64xf32>
    %612 = arith.subf %593, %611 : vector<64x64xf32>
    %cst_167 = arith.constant 9.99999974E-6 : f32
    %613 = vector.broadcast %cst_167 : f32 to vector<1x64xf32>
    %614 = arith.addf %610, %613 : vector<1x64xf32>
    %615 = math.rsqrt %614 : vector<1x64xf32>
    %616 = vector.broadcast %615 : vector<1x64xf32> to vector<64x64xf32>
    %617 = arith.mulf %612, %616 : vector<64x64xf32>
    %618 = vector.broadcast %594 : vector<1x64xf32> to vector<64x64xf32>
    %619 = arith.mulf %617, %618 : vector<64x64xf32>
    %620 = vector.broadcast %595 : vector<1x64xf32> to vector<64x64xf32>
    %621 = arith.addf %619, %620 : vector<64x64xf32>
    %c0_168 = arith.constant 0 : index
    %c0_169 = arith.constant 0 : index
    %622 = vector.load %arg15[%c0_168, %c0_169] : memref<1x64xf32, #tpu.memory_space<vmem>>, vector<1x64xf32>
    %623 = vector.broadcast %622 : vector<1x64xf32> to vector<64x64xf32>
    %624 = arith.mulf %621, %623 : vector<64x64xf32>
    %cst_170 = arith.constant dense<0.000000e+00> : vector<64xf32>
    %625 = vector.multi_reduction <add>, %624, %cst_170 [1] : vector<64x64xf32> to vector<64xf32>
    %626 = vector.shape_cast %625 : vector<64xf32> to vector<64x1xf32>
    %c0_171 = arith.constant 0 : index
    %c0_172 = arith.constant 0 : index
    %627 = vector.load %arg16[%c0_171, %c0_172] : memref<1x1xf32, #tpu.memory_space<vmem>>, vector<1x1xf32>
    %628 = vector.broadcast %627 : vector<1x1xf32> to vector<64x1xf32>
    %629 = arith.addf %626, %628 : vector<64x1xf32>
    %630 = vector.extract_strided_slice %629 {offsets = [0, 0], sizes = [8, 1], strides = [1, 1]} : vector<64x1xf32> to vector<8x1xf32>
    %631 = vector.extract_strided_slice %629 {offsets = [8, 0], sizes = [8, 1], strides = [1, 1]} : vector<64x1xf32> to vector<8x1xf32>
    %632 = vector.extract_strided_slice %629 {offsets = [16, 0], sizes = [8, 1], strides = [1, 1]} : vector<64x1xf32> to vector<8x1xf32>
    %633 = vector.extract_strided_slice %629 {offsets = [24, 0], sizes = [8, 1], strides = [1, 1]} : vector<64x1xf32> to vector<8x1xf32>
    %634 = vector.extract_strided_slice %629 {offsets = [32, 0], sizes = [8, 1], strides = [1, 1]} : vector<64x1xf32> to vector<8x1xf32>
    %635 = vector.extract_strided_slice %629 {offsets = [40, 0], sizes = [8, 1], strides = [1, 1]} : vector<64x1xf32> to vector<8x1xf32>
    %636 = vector.extract_strided_slice %629 {offsets = [48, 0], sizes = [8, 1], strides = [1, 1]} : vector<64x1xf32> to vector<8x1xf32>
    %637 = vector.extract_strided_slice %629 {offsets = [56, 0], sizes = [8, 1], strides = [1, 1]} : vector<64x1xf32> to vector<8x1xf32>
    %638 = arith.maximumf %630, %631 : vector<8x1xf32>
    %639 = arith.maximumf %638, %632 : vector<8x1xf32>
    %640 = arith.maximumf %639, %633 : vector<8x1xf32>
    %641 = arith.maximumf %640, %634 : vector<8x1xf32>
    %642 = arith.maximumf %641, %635 : vector<8x1xf32>
    %643 = arith.maximumf %642, %636 : vector<8x1xf32>
    %644 = arith.maximumf %643, %637 : vector<8x1xf32>
    %645 = arith.subf %630, %644 : vector<8x1xf32>
    %646 = math.exp %645 : vector<8x1xf32>
    %647 = arith.subf %631, %644 : vector<8x1xf32>
    %648 = math.exp %647 : vector<8x1xf32>
    %649 = arith.subf %632, %644 : vector<8x1xf32>
    %650 = math.exp %649 : vector<8x1xf32>
    %651 = arith.subf %633, %644 : vector<8x1xf32>
    %652 = math.exp %651 : vector<8x1xf32>
    %653 = arith.subf %634, %644 : vector<8x1xf32>
    %654 = math.exp %653 : vector<8x1xf32>
    %655 = arith.subf %635, %644 : vector<8x1xf32>
    %656 = math.exp %655 : vector<8x1xf32>
    %657 = arith.subf %636, %644 : vector<8x1xf32>
    %658 = math.exp %657 : vector<8x1xf32>
    %659 = arith.subf %637, %644 : vector<8x1xf32>
    %660 = math.exp %659 : vector<8x1xf32>
    %661 = vector.extract_strided_slice %621 {offsets = [0, 0], sizes = [8, 64], strides = [1, 1]} : vector<64x64xf32> to vector<8x64xf32>
    %662 = vector.broadcast %646 : vector<8x1xf32> to vector<8x64xf32>
    %663 = arith.mulf %662, %661 : vector<8x64xf32>
    %664 = arith.addf %646, %648 : vector<8x1xf32>
    %665 = vector.extract_strided_slice %621 {offsets = [8, 0], sizes = [8, 64], strides = [1, 1]} : vector<64x64xf32> to vector<8x64xf32>
    %666 = vector.broadcast %648 : vector<8x1xf32> to vector<8x64xf32>
    %667 = arith.mulf %666, %665 : vector<8x64xf32>
    %668 = arith.addf %663, %667 : vector<8x64xf32>
    %669 = arith.addf %664, %650 : vector<8x1xf32>
    %670 = vector.extract_strided_slice %621 {offsets = [16, 0], sizes = [8, 64], strides = [1, 1]} : vector<64x64xf32> to vector<8x64xf32>
    %671 = vector.broadcast %650 : vector<8x1xf32> to vector<8x64xf32>
    %672 = arith.mulf %671, %670 : vector<8x64xf32>
    %673 = arith.addf %668, %672 : vector<8x64xf32>
    %674 = arith.addf %669, %652 : vector<8x1xf32>
    %675 = vector.extract_strided_slice %621 {offsets = [24, 0], sizes = [8, 64], strides = [1, 1]} : vector<64x64xf32> to vector<8x64xf32>
    %676 = vector.broadcast %652 : vector<8x1xf32> to vector<8x64xf32>
    %677 = arith.mulf %676, %675 : vector<8x64xf32>
    %678 = arith.addf %673, %677 : vector<8x64xf32>
    %679 = arith.addf %674, %654 : vector<8x1xf32>
    %680 = vector.extract_strided_slice %621 {offsets = [32, 0], sizes = [8, 64], strides = [1, 1]} : vector<64x64xf32> to vector<8x64xf32>
    %681 = vector.broadcast %654 : vector<8x1xf32> to vector<8x64xf32>
    %682 = arith.mulf %681, %680 : vector<8x64xf32>
    %683 = arith.addf %678, %682 : vector<8x64xf32>
    %684 = arith.addf %679, %656 : vector<8x1xf32>
    %685 = vector.extract_strided_slice %621 {offsets = [40, 0], sizes = [8, 64], strides = [1, 1]} : vector<64x64xf32> to vector<8x64xf32>
    %686 = vector.broadcast %656 : vector<8x1xf32> to vector<8x64xf32>
    %687 = arith.mulf %686, %685 : vector<8x64xf32>
    %688 = arith.addf %683, %687 : vector<8x64xf32>
    %689 = arith.addf %684, %658 : vector<8x1xf32>
    %690 = vector.extract_strided_slice %621 {offsets = [48, 0], sizes = [8, 64], strides = [1, 1]} : vector<64x64xf32> to vector<8x64xf32>
    %691 = vector.broadcast %658 : vector<8x1xf32> to vector<8x64xf32>
    %692 = arith.mulf %691, %690 : vector<8x64xf32>
    %693 = arith.addf %688, %692 : vector<8x64xf32>
    %694 = arith.addf %689, %660 : vector<8x1xf32>
    %695 = vector.extract_strided_slice %621 {offsets = [56, 0], sizes = [8, 64], strides = [1, 1]} : vector<64x64xf32> to vector<8x64xf32>
    %696 = vector.broadcast %660 : vector<8x1xf32> to vector<8x64xf32>
    %697 = arith.mulf %696, %695 : vector<8x64xf32>
    %698 = arith.addf %693, %697 : vector<8x64xf32>
    %699 = vector.broadcast %694 : vector<8x1xf32> to vector<8x64xf32>
    %700 = arith.divf %698, %699 : vector<8x64xf32>
    %c0_173 = arith.constant 0 : index
    %c0_174 = arith.constant 0 : index
    %701 = vector.load %arg17[%c0_173, %c0_174] : memref<64x128xf32, #tpu.memory_space<vmem>>, vector<64x128xf32>
    %cst_175 = arith.constant dense<0.000000e+00> : vector<8x128xf32>
    %702 = tpu.matmul %700, %701, %cst_175 {dimension_numbers = #tpu.dot_dimension_numbers<[1], [0], [0], [1], [0, 0, 1, 1], [], []>} : vector<8x64xf32>, vector<64x128xf32>, vector<8x128xf32> -> vector<8x128xf32>
    %c0_176 = arith.constant 0 : index
    %c0_177 = arith.constant 0 : index
    %703 = vector.load %arg18[%c0_176, %c0_177] : memref<1x128xf32, #tpu.memory_space<vmem>>, vector<1x128xf32>
    %704 = vector.broadcast %703 : vector<1x128xf32> to vector<8x128xf32>
    %705 = arith.addf %702, %704 : vector<8x128xf32>
    %c0_178 = arith.constant 0 : index
    %c0_179 = arith.constant 0 : index
    %706 = vector.load %arg19[%c0_178, %c0_179] : memref<8x128xf32, #tpu.memory_space<vmem>>, vector<8x128xf32>
    tpu.vector_store %arg19[%c0_178, %c0_179], %705 {strides = array<i32>} : memref<8x128xf32, #tpu.memory_space<vmem>>, vector<8x128xf32>,
    return
  }
  func.func @transform_0(%arg0: i32) -> (i32, i32) {
    %c0_i32 = arith.constant 0 : i32
    %c0_i32_0 = arith.constant 0 : i32
    %c0_i32_1 = arith.constant 0 : i32
    return %c0_i32, %c0_i32_0 : i32, i32
  }
  func.func @transform_1(%arg0: i32) -> (i32, i32) {
    %c0_i32 = arith.constant 0 : i32
    %c0_i32_0 = arith.constant 0 : i32
    %c0_i32_1 = arith.constant 0 : i32
    return %c0_i32, %c0_i32_0 : i32, i32
  }
  func.func @transform_2(%arg0: i32) -> (i32, i32) {
    %c0_i32 = arith.constant 0 : i32
    %c0_i32_0 = arith.constant 0 : i32
    %c0_i32_1 = arith.constant 0 : i32
    return %c0_i32, %c0_i32_0 : i32, i32
  }
  func.func @transform_3(%arg0: i32) -> (i32, i32) {
    %c0_i32 = arith.constant 0 : i32
    %c0_i32_0 = arith.constant 0 : i32
    %c0_i32_1 = arith.constant 0 : i32
    return %c0_i32, %c0_i32_0 : i32, i32
  }
  func.func @transform_4(%arg0: i32) -> (i32, i32) {
    %c0_i32 = arith.constant 0 : i32
    %c0_i32_0 = arith.constant 0 : i32
    %c0_i32_1 = arith.constant 0 : i32
    return %c0_i32, %c0_i32_0 : i32, i32
  }
  func.func @transform_5(%arg0: i32) -> (i32, i32) {
    %c0_i32 = arith.constant 0 : i32
    %c0_i32_0 = arith.constant 0 : i32
    %c0_i32_1 = arith.constant 0 : i32
    return %c0_i32, %c0_i32_0 : i32, i32
  }
  func.func @transform_6(%arg0: i32) -> (i32, i32) {
    %c0_i32 = arith.constant 0 : i32
    %c0_i32_0 = arith.constant 0 : i32
    %c0_i32_1 = arith.constant 0 : i32
    return %c0_i32, %c0_i32_0 : i32, i32
  }
  func.func @transform_7(%arg0: i32) -> (i32, i32) {
    %c0_i32 = arith.constant 0 : i32
    %c0_i32_0 = arith.constant 0 : i32
    %c0_i32_1 = arith.constant 0 : i32
    return %c0_i32, %c0_i32_0 : i32, i32
  }
  func.func @transform_8(%arg0: i32) -> (i32, i32) {
    %c0_i32 = arith.constant 0 : i32
    %c0_i32_0 = arith.constant 0 : i32
    %c0_i32_1 = arith.constant 0 : i32
    return %c0_i32, %c0_i32_0 : i32, i32
  }
  func.func @transform_9(%arg0: i32) -> (i32, i32) {
    %c0_i32 = arith.constant 0 : i32
    %c0_i32_0 = arith.constant 0 : i32
    %c0_i32_1 = arith.constant 0 : i32
    return %c0_i32, %c0_i32_0 : i32, i32
  }
  func.func @transform_10(%arg0: i32) -> (i32, i32) {
    %c0_i32 = arith.constant 0 : i32
    %c0_i32_0 = arith.constant 0 : i32
    %c0_i32_1 = arith.constant 0 : i32
    return %c0_i32, %c0_i32_0 : i32, i32
  }
  func.func @transform_11(%arg0: i32) -> (i32, i32) {
    %c0_i32 = arith.constant 0 : i32
    %c0_i32_0 = arith.constant 0 : i32
    %c0_i32_1 = arith.constant 0 : i32
    return %c0_i32, %c0_i32_0 : i32, i32
  }
  func.func @transform_12(%arg0: i32) -> (i32, i32) {
    %c0_i32 = arith.constant 0 : i32
    %c0_i32_0 = arith.constant 0 : i32
    %c0_i32_1 = arith.constant 0 : i32
    return %c0_i32, %c0_i32_0 : i32, i32
  }
  func.func @transform_13(%arg0: i32) -> (i32, i32) {
    %c0_i32 = arith.constant 0 : i32
    %c0_i32_0 = arith.constant 0 : i32
    %c0_i32_1 = arith.constant 0 : i32
    return %c0_i32, %c0_i32_0 : i32, i32
  }
  func.func @transform_14(%arg0: i32) -> (i32, i32) {
    %c0_i32 = arith.constant 0 : i32
    %c0_i32_0 = arith.constant 0 : i32
    %c0_i32_1 = arith.constant 0 : i32
    return %c0_i32, %c0_i32_0 : i32, i32
  }
  func.func @transform_15(%arg0: i32) -> (i32, i32) {
    %c0_i32 = arith.constant 0 : i32
    %c0_i32_0 = arith.constant 0 : i32
    %c0_i32_1 = arith.constant 0 : i32
    return %c0_i32, %c0_i32_0 : i32, i32
  }
  func.func @transform_16(%arg0: i32) -> (i32, i32) {
    %c0_i32 = arith.constant 0 : i32
    %c0_i32_0 = arith.constant 0 : i32
    %c0_i32_1 = arith.constant 0 : i32
    return %c0_i32, %c0_i32_0 : i32, i32
  }
  func.func @transform_17(%arg0: i32) -> (i32, i32) {
    %c0_i32 = arith.constant 0 : i32
    %c0_i32_0 = arith.constant 0 : i32
    %c0_i32_1 = arith.constant 0 : i32
    return %c0_i32, %c0_i32_0 : i32, i32
  }
  func.func @transform_18(%arg0: i32) -> (i32, i32) {
    %c0_i32 = arith.constant 0 : i32
    %c0_i32_0 = arith.constant 0 : i32
    %c0_i32_1 = arith.constant 0 : i32
    return %c0_i32, %c0_i32_0 : i32, i32
  }
}

</mosaic_0001>

<llo_original>
// kernel: poetry_rnn_forward.1
$region0: #{poetry_rnn_forward.1}
  #allocation0 [shape = 'u32[]', space=smem, size = 0x4, offset = 0x4, fixed_abs, tag = 'smem constant byte address 0x4 - core index']
  #allocation1 [shape = 'u32[72,128]{1,0:T(1,128)}', space=vmem, size = 0x9000, scoped, tag = 'internal scratch']
  #allocation2 [shape = 'f32[64,64]{1,0:T(8,128)}', space=vmem, size = 0x8000, scoped, tag = 'scratch operand']
  #allocation3 [shape = 'f32[64,64]{1,0:T(8,128)}', space=vmem, size = 0x8000, scoped, tag = 'scratch operand']
  #allocation4 [shape = 'f32[1,1]{1,0:T(1,128)S(1)}', space=vmem, size = 0x200, scoped, tag = 'scoped memory for poetry_rnn_forward.1']
  %s0 = inlined_call_operand.vmem [shape: s32[64,1], index: 0, kind: input, shape index: {}]
  %s1 = inlined_call_operand.vmem [shape: f32[64,1], index: 1, kind: input, shape index: {}]
  %s2 = inlined_call_operand.vmem [shape: f32[1,256], index: 2, kind: input, shape index: {}]
  %s3 = inlined_call_operand.hbm [shape: f32[64,32], index: 3, kind: input, shape index: {}]
  %s4 = inlined_call_operand.vmem [shape: f32[1,32], index: 4, kind: input, shape index: {}]
  %s5 = inlined_call_operand.vmem [shape: f32[1,32], index: 5, kind: input, shape index: {}]
  %s6 = inlined_call_operand.vmem [shape: f32[32,256], index: 6, kind: input, shape index: {}]
  %s7 = inlined_call_operand.vmem [shape: f32[64,256], index: 7, kind: input, shape index: {}]
  %s8 = inlined_call_operand.vmem [shape: f32[1,256], index: 8, kind: input, shape index: {}]
  %s9 = inlined_call_operand.vmem [shape: f32[64,256], index: 9, kind: input, shape index: {}]
  %s10 = inlined_call_operand.vmem [shape: f32[64,256], index: 10, kind: input, shape index: {}]
  %s11 = inlined_call_operand.vmem [shape: f32[1,256], index: 11, kind: input, shape index: {}]
  %s12 = inlined_call_operand.vmem [shape: f32[1,64], index: 12, kind: input, shape index: {}]
  %s13 = inlined_call_operand.vmem [shape: f32[1,64], index: 13, kind: input, shape index: {}]
  %s14 = inlined_call_operand.vmem [shape: f32[1,64], index: 14, kind: input, shape index: {}]
  %s15 = inlined_call_operand.<no memory space> [shape: f32[1,1], index: 15, kind: input, shape index: {}]
  %s16 = inlined_call_operand.vmem [shape: f32[64,128], index: 16, kind: input, shape index: {}]
  %s17 = inlined_call_operand.vmem [shape: f32[1,128], index: 17, kind: input, shape index: {}]
  %s18 = inlined_call_operand.vmem [shape: f32[8,128], index: 18, kind: output, shape index: {}]
  %s19 = sld [smem:[#allocation0]]
  $region86: #{poetry_rnn_forward.1} parent=0
    _
  %s21 = ssub.s32 1, %s19
  %s22 = scalar_select 0, %s21, %s19
  %v23 = vstv %s15
  %24 = vst [vmem:[#allocation4] sm:$0x1] %v23
  $region1: #{poetry_rnn_forward.1} parent=0
    #allocation5 [shape = 'u8[32768]{0}', space=vmem, size = 0x8000, scoped, tag = 'input window, operand 3, single buffered']
    #allocation6 [shape = 's32[1]{0}', space=sflag, size = 0x4, scoped, tag = 'scoped memory for poetry_rnn_forward.1']
    %25 = vsyncpa [#allocation6], 0
    // Predicated region
    $region2: #{poetry_rnn_forward.1} parent=1 // pred_check
      _
    $region3: #{poetry_rnn_forward.1} parent=1 // pred_check_branch
      %27 = sbr.rel (0) target = $region5
    $region4: #{poetry_rnn_forward.1} parent=1 // pred_region
      _
    $region5: #{poetry_rnn_forward.1} parent=1 // pred_fallthru
      _
    // Predicated region
    $region6: #{poetry_rnn_forward.1} parent=1 // pred_check
      _
    $region7: #{poetry_rnn_forward.1} parent=1 // pred_check_branch
      %29 = sbr.rel (0) target = $region9
    $region8: #{poetry_rnn_forward.1} parent=1 // pred_region
      _
    $region9: #{poetry_rnn_forward.1} parent=1 // pred_fallthru
      _
    // Predicated region
    $region10: #{poetry_rnn_forward.1} parent=1 // pred_check
      _
    $region11: #{poetry_rnn_forward.1} parent=1 // pred_check_branch
      %31 = sbr.rel (0) target = $region13
    $region12: #{poetry_rnn_forward.1} parent=1 // pred_region
      _
    $region13: #{poetry_rnn_forward.1} parent=1 // pred_fallthru
      _
    // Predicated region
    $region14: #{poetry_rnn_forward.1} parent=1 // pred_check
      _
    $region15: #{poetry_rnn_forward.1} parent=1 // pred_check_branch
      %33 = sbr.rel (0) target = $region17
    $region16: #{poetry_rnn_forward.1} parent=1 // pred_region
      %35 = vsyncadd [#allocation6], 0
      %s36 = sshll.u32 %s3, 4
      %s37 = int_to_ptr.hbm [resolvable:$true] %s36
      %s38 = sshll.u32 [#allocation5], 4
      %s39 = int_to_ptr.vmem [resolvable:$true] %s38
      %44 = dma.hbm_to_vmem [thread:$0]  %s37, 1024, %s39, [#allocation6], 128, 128, 8
    $region17: #{poetry_rnn_forward.1} parent=1 // pred_fallthru
      _
    // Predicated region
    $region18: #{poetry_rnn_forward.1} parent=1 // pred_check
      _
    $region19: #{poetry_rnn_forward.1} parent=1 // pred_check_branch
      %46 = sbr.rel (0) target = $region21
    $region20: #{poetry_rnn_forward.1} parent=1 // pred_region
      _
    $region21: #{poetry_rnn_forward.1} parent=1 // pred_fallthru
      _
    // Predicated region
    $region22: #{poetry_rnn_forward.1} parent=1 // pred_check
      _
    $region23: #{poetry_rnn_forward.1} parent=1 // pred_check_branch
      %48 = sbr.rel (0) target = $region25
    $region24: #{poetry_rnn_forward.1} parent=1 // pred_region
      _
    $region25: #{poetry_rnn_forward.1} parent=1 // pred_fallthru
      _
    // Predicated region
    $region26: #{poetry_rnn_forward.1} parent=1 // pred_check
      _
    $region27: #{poetry_rnn_forward.1} parent=1 // pred_check_branch
      %50 = sbr.rel (0) target = $region29
    $region28: #{poetry_rnn_forward.1} parent=1 // pred_region
      _
    $region29: #{poetry_rnn_forward.1} parent=1 // pred_fallthru
      _
    // Predicated region
    $region30: #{poetry_rnn_forward.1} parent=1 // pred_check
      _
    $region31: #{poetry_rnn_forward.1} parent=1 // pred_check_branch
      %52 = sbr.rel (0) target = $region33
    $region32: #{poetry_rnn_forward.1} parent=1 // pred_region
      _
    $region33: #{poetry_rnn_forward.1} parent=1 // pred_fallthru
      _
    // Predicated region
    $region34: #{poetry_rnn_forward.1} parent=1 // pred_check
      _
    $region35: #{poetry_rnn_forward.1} parent=1 // pred_check_branch
      %54 = sbr.rel (0) target = $region37
    $region36: #{poetry_rnn_forward.1} parent=1 // pred_region
      _
    $region37: #{poetry_rnn_forward.1} parent=1 // pred_fallthru
      _
    // Predicated region
    $region38: #{poetry_rnn_forward.1} parent=1 // pred_check
      _
    $region39: #{poetry_rnn_forward.1} parent=1 // pred_check_branch
      %56 = sbr.rel (0) target = $region41
    $region40: #{poetry_rnn_forward.1} parent=1 // pred_region
      _
    $region41: #{poetry_rnn_forward.1} parent=1 // pred_fallthru
      _
    // Predicated region
    $region42: #{poetry_rnn_forward.1} parent=1 // pred_check
      _
    $region43: #{poetry_rnn_forward.1} parent=1 // pred_check_branch
      %58 = sbr.rel (0) target = $region45
    $region44: #{poetry_rnn_forward.1} parent=1 // pred_region
      _
    $region45: #{poetry_rnn_forward.1} parent=1 // pred_fallthru
      _
    // Predicated region
    $region46: #{poetry_rnn_forward.1} parent=1 // pred_check
      _
    $region47: #{poetry_rnn_forward.1} parent=1 // pred_check_branch
      %60 = sbr.rel (0) target = $region49
    $region48: #{poetry_rnn_forward.1} parent=1 // pred_region
      _
    $region49: #{poetry_rnn_forward.1} parent=1 // pred_fallthru
      _
    // Predicated region
    $region50: #{poetry_rnn_forward.1} parent=1 // pred_check
      _
    $region51: #{poetry_rnn_forward.1} parent=1 // pred_check_branch
      %62 = sbr.rel (0) target = $region53
    $region52: #{poetry_rnn_forward.1} parent=1 // pred_region
      _
    $region53: #{poetry_rnn_forward.1} parent=1 // pred_fallthru
      _
    // Predicated region
    $region54: #{poetry_rnn_forward.1} parent=1 // pred_check
      _
    $region55: #{poetry_rnn_forward.1} parent=1 // pred_check_branch
      %64 = sbr.rel (0) target = $region57
    $region56: #{poetry_rnn_forward.1} parent=1 // pred_region
      _
    $region57: #{poetry_rnn_forward.1} parent=1 // pred_fallthru
      _
    // Predicated region
    $region58: #{poetry_rnn_forward.1} parent=1 // pred_check
      _
    $region59: #{poetry_rnn_forward.1} parent=1 // pred_check_branch
      %66 = sbr.rel (0) target = $region61
    $region60: #{poetry_rnn_forward.1} parent=1 // pred_region
      _
    $region61: #{poetry_rnn_forward.1} parent=1 // pred_fallthru
      _
    // Predicated region
    $region62: #{poetry_rnn_forward.1} parent=1 // pred_check
      _
    $region63: #{poetry_rnn_forward.1} parent=1 // pred_check_branch
      %68 = sbr.rel (0) target = $region65
    $region64: #{poetry_rnn_forward.1} parent=1 // pred_region
      _
    $region65: #{poetry_rnn_forward.1} parent=1 // pred_fallthru
      _
    // Predicated region
    $region66: #{poetry_rnn_forward.1} parent=1 // pred_check
      _
    $region67: #{poetry_rnn_forward.1} parent=1 // pred_check_branch
      %70 = sbr.rel (0) target = $region69
    $region68: #{poetry_rnn_forward.1} parent=1 // pred_region
      _
    $region69: #{poetry_rnn_forward.1} parent=1 // pred_fallthru
      _
    // Predicated region
    $region70: #{poetry_rnn_forward.1} parent=1 // pred_check
      _
    $region71: #{poetry_rnn_forward.1} parent=1 // pred_check_branch
      %72 = sbr.rel (0) target = $region73
    $region72: #{poetry_rnn_forward.1} parent=1 // pred_region
      _
    $region73: #{poetry_rnn_forward.1} parent=1 // pred_fallthru
      _
    // Predicated region
    $region74: #{poetry_rnn_forward.1} parent=1 // pred_check
      _
    $region75: #{poetry_rnn_forward.1} parent=1 // pred_check_branch
      %74 = sbr.rel (0) target = $region77
    $region76: #{poetry_rnn_forward.1} parent=1 // pred_region
      %76 = dma.done [#allocation6], 1024
    $region77: #{poetry_rnn_forward.1} parent=1 // pred_fallthru
      _
    %v77 = vld [vmem:[%s1] sm:$0xff]
    %v78 = vld [vmem:[%s1 + $0x8] sm:$0xff]
    %v79 = vld [vmem:[%s1 + $0x10] sm:$0xff]
    %v80 = vld [vmem:[%s1 + $0x18] sm:$0xff]
    %v81 = vld [vmem:[%s1 + $0x20] sm:$0xff]
    %v82 = vld [vmem:[%s1 + $0x28] sm:$0xff]
    %v83 = vld [vmem:[%s1 + $0x30] sm:$0xff]
    %v84 = vld [vmem:[%s1 + $0x38] sm:$0xff]
    %v85 = vld [vmem:[%s0] sm:$0xff]
    %v86 = vld [vmem:[%s0 + $0x8] sm:$0xff]
    %v87 = vld [vmem:[%s0 + $0x10] sm:$0xff]
    %v88 = vld [vmem:[%s0 + $0x18] sm:$0xff]
    %v89 = vld [vmem:[%s0 + $0x20] sm:$0xff]
    %v90 = vld [vmem:[%s0 + $0x28] sm:$0xff]
    %v91 = vld [vmem:[%s0 + $0x30] sm:$0xff]
    %v92 = vld [vmem:[%s0 + $0x38] sm:$0xff]
    %v93 = vlaneseq
    %v94 = vand.u32 %v93, 127
    %95 = vset.pattern.permute.xlu0 0
    %96 = vperm.xlu0 %95, %v85
    %v97 = vpop.permute.xlu0 %96
    %98 = vset.pattern.permute.xlu0 0
    %99 = vperm.xlu0 %98, %v86
    %v100 = vpop.permute.xlu0 %99
    %101 = vset.pattern.permute.xlu0 0
    %102 = vperm.xlu0 %101, %v87
    %v103 = vpop.permute.xlu0 %102
    %104 = vset.pattern.permute.xlu0 0
    %105 = vperm.xlu0 %104, %v88
    %v106 = vpop.permute.xlu0 %105
    %107 = vset.pattern.permute.xlu0 0
    %108 = vperm.xlu0 %107, %v89
    %v109 = vpop.permute.xlu0 %108
    %110 = vset.pattern.permute.xlu0 0
    %111 = vperm.xlu0 %110, %v90
    %v112 = vpop.permute.xlu0 %111
    %113 = vset.pattern.permute.xlu0 0
    %114 = vperm.xlu0 %113, %v91
    %v115 = vpop.permute.xlu0 %114
    %116 = vset.pattern.permute.xlu0 0
    %117 = vperm.xlu0 %116, %v92
    %v118 = vpop.permute.xlu0 %117
    %vm119 = vcmp.eq.s32.totalorder %v94, %v97
    %vm120 = vcmp.eq.s32.totalorder %v94, %v100
    %vm121 = vcmp.eq.s32.totalorder %v94, %v103
    %vm122 = vcmp.eq.s32.totalorder %v94, %v106
    %vm123 = vcmp.eq.s32.totalorder %v94, %v109
    %vm124 = vcmp.eq.s32.totalorder %v94, %v112
    %vm125 = vcmp.eq.s32.totalorder %v94, %v115
    %vm126 = vcmp.eq.s32.totalorder %v94, %v118
    %v127 = vsel %vm119, 1, 0
    %v128 = vsel %vm120, 1, 0
    %v129 = vsel %vm121, 1, 0
    %v130 = vsel %vm122, 1, 0
    %v131 = vsel %vm123, 1, 0
    %v132 = vsel %vm124, 1, 0
    %v133 = vsel %vm125, 1, 0
    %v134 = vsel %vm126, 1, 0
    %v135 = vcvt.s32.f32 %v127
    %v136 = vcvt.s32.f32 %v128
    %v137 = vcvt.s32.f32 %v129
    %v138 = vcvt.s32.f32 %v130
    %v139 = vcvt.s32.f32 %v131
    %v140 = vcvt.s32.f32 %v132
    %v141 = vcvt.s32.f32 %v133
    %v142 = vcvt.s32.f32 %v134
    %v143 = vld [vmem:[#allocation5] sm:$0xff]
    %v144 = vld [vmem:[#allocation5 + $0x8] sm:$0xff]
    %v145 = vld [vmem:[#allocation5 + $0x10] sm:$0xff]
    %v146 = vld [vmem:[#allocation5 + $0x18] sm:$0xff]
    %v147 = vld [vmem:[#allocation5 + $0x20] sm:$0xff]
    %v148 = vld [vmem:[#allocation5 + $0x28] sm:$0xff]
    %v149 = vld [vmem:[#allocation5 + $0x30] sm:$0xff]
    %v150 = vld [vmem:[#allocation5 + $0x38] sm:$0xff]
    %vm151 = vcmask 523264
    %v153 = vsel %vm151, %v135, 0
    %v156 = vsel %vm151, %v136, 0
    %v159 = vsel %vm151, %v137, 0
    %v162 = vsel %vm151, %v138, 0
    %v165 = vsel %vm151, %v139, 0
    %v168 = vsel %vm151, %v140, 0
    %v171 = vsel %vm151, %v141, 0
    %v174 = vsel %vm151, %v142, 0
    %176 = vmatpush.msra.mxu0 0.0
    %177 = vmatpush.msra.mxu0 0.0
    %178 = vmatpush.msra.mxu0 0.0
    %179 = vmatpush.msra.mxu0 0.0
    %180 = vmatpush.msra.mxu0 0.0
    %181 = vmatpush.msra.mxu0 0.0
    %182 = vmatpush.msra.mxu0 0.0
    %183 = vmatpush.msra.mxu0 0.0
    %184 = vmatpush.msra.mxu0 %v150
    %185 = vmatpush.msra.mxu0 %v149
    %186 = vmatpush.msra.mxu0 %v148
    %187 = vmatpush.msra.mxu0 %v147
    %188 = vmatpush.msra.mxu0 %v146
    %189 = vmatpush.msra.mxu0 %v145
    %190 = vmatpush.msra.mxu0 %v144
    %191 = vmatpush.msra.mxu0 %v143
    %192 = vmatmul.f32.gmra.mxu0 %v153
    %v193 = vpop.f32.mrf.mxu0
    %v194 = vadd.f32 0.0, %v193
    %195 = vmatmul.f32.gmra.mxu0 %v156
    %v196 = vpop.f32.mrf.mxu0
    %v197 = vadd.f32 0.0, %v196
    %198 = vmatmul.f32.gmra.mxu0 %v159
    %v199 = vpop.f32.mrf.mxu0
    %v200 = vadd.f32 0.0, %v199
    %201 = vmatmul.f32.gmra.mxu0 %v162
    %v202 = vpop.f32.mrf.mxu0
    %v203 = vadd.f32 0.0, %v202
    %204 = vmatmul.f32.gmra.mxu0 %v165
    %v205 = vpop.f32.mrf.mxu0
    %v206 = vadd.f32 0.0, %v205
    %207 = vmatmul.f32.gmra.mxu0 %v168
    %v208 = vpop.f32.mrf.mxu0
    %v209 = vadd.f32 0.0, %v208
    %210 = vmatmul.f32.gmra.mxu0 %v171
    %v211 = vpop.f32.mrf.mxu0
    %v212 = vadd.f32 0.0, %v211
    %213 = vmatmul.f32.gmra.mxu0 %v174
    %v214 = vpop.f32.mrf.mxu0
    %v215 = vadd.f32 0.0, %v214
    %216 = vdwg.mxu0
    %v217 = vld [vmem:[%s4] sm:$0x1]
    %v218 = vld [vmem:[%s5] sm:$0x1]
    %220 = vset.pattern.permute.xlu0 0
    %221 = vperm.xlu0 %220, %v77
    %v222 = vpop.permute.xlu0 %221
    %225 = vset.pattern.permute.xlu0 0
    %226 = vperm.xlu0 %225, %v78
    %v227 = vpop.permute.xlu0 %226
    %230 = vset.pattern.permute.xlu0 0
    %231 = vperm.xlu0 %230, %v79
    %v232 = vpop.permute.xlu0 %231
    %235 = vset.pattern.permute.xlu0 0
    %236 = vperm.xlu0 %235, %v80
    %v237 = vpop.permute.xlu0 %236
    %240 = vset.pattern.permute.xlu0 0
    %241 = vperm.xlu0 %240, %v81
    %v242 = vpop.permute.xlu0 %241
    %245 = vset.pattern.permute.xlu0 0
    %246 = vperm.xlu0 %245, %v82
    %v247 = vpop.permute.xlu0 %246
    %250 = vset.pattern.permute.xlu0 0
    %251 = vperm.xlu0 %250, %v83
    %v252 = vpop.permute.xlu0 %251
    %255 = vset.pattern.permute.xlu0 0
    %256 = vperm.xlu0 %255, %v84
    %v257 = vpop.permute.xlu0 %256
    %v259 = vmul.f32 %v194, %v222
    %v260 = vmul.f32 %v197, %v227
    %v261 = vmul.f32 %v200, %v232
    %v262 = vmul.f32 %v203, %v237
    %v263 = vmul.f32 %v206, %v242
    %v264 = vmul.f32 %v209, %v247
    %v265 = vmul.f32 %v212, %v252
    %v266 = vmul.f32 %v215, %v257
    %vm267 = vcmask 261120
    %v268 = vsel %vm267, %v259, 0.0
    %v269 = vsel %vm267, %v260, 0.0
    %v270 = vadd.f32 %v268, %v269
    %v271 = vsel %vm267, %v261, 0.0
    %v272 = vadd.f32 %v270, %v271
    %v273 = vsel %vm267, %v262, 0.0
    %v274 = vadd.f32 %v272, %v273
    %v275 = vsel %vm267, %v263, 0.0
    %v276 = vadd.f32 %v274, %v275
    %v277 = vsel %vm267, %v264, 0.0
    %v278 = vadd.f32 %v276, %v277
    %v279 = vsel %vm267, %v265, 0.0
    %v280 = vadd.f32 %v278, %v279
    %v281 = vsel %vm267, %v266, 0.0
    %v282 = vadd.f32 %v280, %v281
    %v283 = vrot.slane %v282, 4
    %v284 = vadd.f32 %v282, %v283
    %v285 = vrot.slane %v284, 2
    %v286 = vadd.f32 %v284, %v285
    %v287 = vrot.slane %v286, 1
    %v288 = vadd.f32 %v286, %v287
    %v289 = vrcp.pop 16.0
    %v290 = vmul.f32 16.0, %v289
    %v291 = vsub.f32 1.0, %v290
    %v292 = vmul.f32 %v289, %v291
    %v293 = vadd.f32 %v289, %v292
    %vm294 = vweird.f32 %v289
    %v295 = vsel %vm294, %v289, %v293
    %v296 = vmul.f32 %v288, %v295
    %v297 = vsub.f32 %v194, %v296
    %v298 = vsub.f32 %v197, %v296
    %v299 = vsub.f32 %v200, %v296
    %v300 = vsub.f32 %v203, %v296
    %v301 = vsub.f32 %v206, %v296
    %v302 = vsub.f32 %v209, %v296
    %v303 = vsub.f32 %v212, %v296
    %v304 = vsub.f32 %v215, %v296
    %v305 = vmul.f32 %v297, %v297
    %v306 = vmul.f32 %v298, %v298
    %v307 = vmul.f32 %v299, %v299
    %v308 = vmul.f32 %v300, %v300
    %v309 = vmul.f32 %v301, %v301
    %v310 = vmul.f32 %v302, %v302
    %v311 = vmul.f32 %v303, %v303
    %v312 = vmul.f32 %v304, %v304
    %v313 = vmul.f32 %v305, %v222
    %v314 = vmul.f32 %v306, %v227
    %v315 = vmul.f32 %v307, %v232
    %v316 = vmul.f32 %v308, %v237
    %v317 = vmul.f32 %v309, %v242
    %v318 = vmul.f32 %v310, %v247
    %v319 = vmul.f32 %v311, %v252
    %v320 = vmul.f32 %v312, %v257
    %v321 = vsel %vm267, %v313, 0.0
    %v322 = vsel %vm267, %v314, 0.0
    %v323 = vadd.f32 %v321, %v322
    %v324 = vsel %vm267, %v315, 0.0
    %v325 = vadd.f32 %v323, %v324
    %v326 = vsel %vm267, %v316, 0.0
    %v327 = vadd.f32 %v325, %v326
    %v328 = vsel %vm267, %v317, 0.0
    %v329 = vadd.f32 %v327, %v328
    %v330 = vsel %vm267, %v318, 0.0
    %v331 = vadd.f32 %v329, %v330
    %v332 = vsel %vm267, %v319, 0.0
    %v333 = vadd.f32 %v331, %v332
    %v334 = vsel %vm267, %v320, 0.0
    %v335 = vadd.f32 %v333, %v334
    %v336 = vrot.slane %v335, 4
    %v337 = vadd.f32 %v335, %v336
    %v338 = vrot.slane %v337, 2
    %v339 = vadd.f32 %v337, %v338
    %v340 = vrot.slane %v339, 1
    %v341 = vadd.f32 %v339, %v340
    %v342 = vmul.f32 %v341, %v295
    %v343 = vadd.f32 %v342, 1e-05
    %v344 = vrsqrt.pop %v343
    %v345 = vmul.f32 %v344, %v343
    %v346 = vmul.f32 %v345, %v344
    %v347 = vmul.f32 0.5, %v346
    %v348 = vsub.f32 1.5, %v347
    %v349 = vmul.f32 %v344, %v348
    %vm350 = vweird.f32 %v343
    %vm351 = vweird.f32 %v344
    %vm352 = vmor %vm350, %vm351
    %v353 = vsel %vm352, %v344, %v349
    %v354 = vmul.f32 %v297, %v353
    %v355 = vmul.f32 %v298, %v353
    %v356 = vmul.f32 %v299, %v353
    %v357 = vmul.f32 %v300, %v353
    %v358 = vmul.f32 %v301, %v353
    %v359 = vmul.f32 %v302, %v353
    %v360 = vmul.f32 %v303, %v353
    %v361 = vmul.f32 %v304, %v353
    %v363 = vperm.slane %v217, 0
    %v365 = vmul.f32 %v354, %v363
    %v366 = vmul.f32 %v355, %v363
    %v367 = vmul.f32 %v356, %v363
    %v368 = vmul.f32 %v357, %v363
    %v369 = vmul.f32 %v358, %v363
    %v370 = vmul.f32 %v359, %v363
    %v371 = vmul.f32 %v360, %v363
    %v372 = vmul.f32 %v361, %v363
    %v374 = vperm.slane %v218, 0
    %v376 = vadd.f32 %v365, %v374
    %v377 = vadd.f32 %v366, %v374
    %v378 = vadd.f32 %v367, %v374
    %v379 = vadd.f32 %v368, %v374
    %v380 = vadd.f32 %v369, %v374
    %v381 = vadd.f32 %v370, %v374
    %v382 = vadd.f32 %v371, %v374
    %v383 = vadd.f32 %v372, %v374
    %v384 = vld [vmem:[%s2] sm:$0x3]
    %v385 = vld [vmem:[%s6] sm:$0xff]
    %v386 = vld [vmem:[%s6 + $0x8] sm:$0xff]
    %v387 = vld [vmem:[%s6 + $0x10] sm:$0xff]
    %v388 = vld [vmem:[%s6 + $0x18] sm:$0xff]
    %v389 = vld [vmem:[%s6 + $0x20] sm:$0xff]
    %v390 = vld [vmem:[%s6 + $0x28] sm:$0xff]
    %v391 = vld [vmem:[%s6 + $0x30] sm:$0xff]
    %v392 = vld [vmem:[%s6 + $0x38] sm:$0xff]
    %v394 = vsel %vm267, %v376, 0
    %v397 = vsel %vm267, %v377, 0
    %v400 = vsel %vm267, %v378, 0
    %v403 = vsel %vm267, %v379, 0
    %v406 = vsel %vm267, %v380, 0
    %v409 = vsel %vm267, %v381, 0
    %v412 = vsel %vm267, %v382, 0
    %v415 = vsel %vm267, %v383, 0
    %417 = vmatpush.msra.mxu0 0.0
    %418 = vmatpush.msra.mxu0 0.0
    %419 = vmatpush.msra.mxu0 0.0
    %420 = vmatpush.msra.mxu0 0.0
    %421 = vmatpush.msra.mxu0 0.0
    %422 = vmatpush.msra.mxu0 0.0
    %423 = vmatpush.msra.mxu0 0.0
    %424 = vmatpush.msra.mxu0 0.0
    %425 = vmatpush.msra.mxu0 0.0
    %426 = vmatpush.msra.mxu0 0.0
    %427 = vmatpush.msra.mxu0 0.0
    %428 = vmatpush.msra.mxu0 0.0
    %429 = vmatpush.msra.mxu0 %v391
    %430 = vmatpush.msra.mxu0 %v389
    %431 = vmatpush.msra.mxu0 %v387
    %432 = vmatpush.msra.mxu0 %v385
    %433 = vmatmul.f32.gmra.mxu0 %v394
    %v434 = vpop.f32.mrf.mxu0
    %v435 = vadd.f32 0.0, %v434
    %436 = vmatmul.f32.gmra.mxu0 %v397
    %v437 = vpop.f32.mrf.mxu0
    %v438 = vadd.f32 0.0, %v437
    %439 = vmatmul.f32.gmra.mxu0 %v400
    %v440 = vpop.f32.mrf.mxu0
    %v441 = vadd.f32 0.0, %v440
    %442 = vmatmul.f32.gmra.mxu0 %v403
    %v443 = vpop.f32.mrf.mxu0
    %v444 = vadd.f32 0.0, %v443
    %445 = vmatmul.f32.gmra.mxu0 %v406
    %v446 = vpop.f32.mrf.mxu0
    %v447 = vadd.f32 0.0, %v446
    %448 = vmatmul.f32.gmra.mxu0 %v409
    %v449 = vpop.f32.mrf.mxu0
    %v450 = vadd.f32 0.0, %v449
    %451 = vmatmul.f32.gmra.mxu0 %v412
    %v452 = vpop.f32.mrf.mxu0
    %v453 = vadd.f32 0.0, %v452
    %454 = vmatmul.f32.gmra.mxu0 %v415
    %v455 = vpop.f32.mrf.mxu0
    %v456 = vadd.f32 0.0, %v455
    %457 = vdwg.mxu0
    %458 = vmatpush.msra.mxu0 0.0
    %459 = vmatpush.msra.mxu0 0.0
    %460 = vmatpush.msra.mxu0 0.0
    %461 = vmatpush.msra.mxu0 0.0
    %462 = vmatpush.msra.mxu0 0.0
    %463 = vmatpush.msra.mxu0 0.0
    %464 = vmatpush.msra.mxu0 0.0
    %465 = vmatpush.msra.mxu0 0.0
    %466 = vmatpush.msra.mxu0 0.0
    %467 = vmatpush.msra.mxu0 0.0
    %468 = vmatpush.msra.mxu0 0.0
    %469 = vmatpush.msra.mxu0 0.0
    %470 = vmatpush.msra.mxu0 %v392
    %471 = vmatpush.msra.mxu0 %v390
    %472 = vmatpush.msra.mxu0 %v388
    %473 = vmatpush.msra.mxu0 %v386
    %474 = vmatmul.f32.gmra.mxu0 %v394
    %v475 = vpop.f32.mrf.mxu0
    %v476 = vadd.f32 0.0, %v475
    %477 = vmatmul.f32.gmra.mxu0 %v397
    %v478 = vpop.f32.mrf.mxu0
    %v479 = vadd.f32 0.0, %v478
    %480 = vmatmul.f32.gmra.mxu0 %v400
    %v481 = vpop.f32.mrf.mxu0
    %v482 = vadd.f32 0.0, %v481
    %483 = vmatmul.f32.gmra.mxu0 %v403
    %v484 = vpop.f32.mrf.mxu0
    %v485 = vadd.f32 0.0, %v484
    %486 = vmatmul.f32.gmra.mxu0 %v406
    %v487 = vpop.f32.mrf.mxu0
    %v488 = vadd.f32 0.0, %v487
    %489 = vmatmul.f32.gmra.mxu0 %v409
    %v490 = vpop.f32.mrf.mxu0
    %v491 = vadd.f32 0.0, %v490
    %492 = vmatmul.f32.gmra.mxu0 %v412
    %v493 = vpop.f32.mrf.mxu0
    %v494 = vadd.f32 0.0, %v493
    %495 = vmatmul.f32.gmra.mxu0 %v415
    %v496 = vpop.f32.mrf.mxu0
    %v497 = vadd.f32 0.0, %v496
    %498 = vdwg.mxu0
    %v499 = vsub.f32 %v435, %v456
    %v500 = vsub.f32 %v476, %v497
    %v501 = vsub.f32 %v438, %v453
    %v502 = vsub.f32 %v479, %v494
    %v503 = vsub.f32 %v441, %v450
    %v504 = vsub.f32 %v482, %v491
    %v505 = vsub.f32 %v444, %v447
    %v506 = vsub.f32 %v485, %v488
    %v507 = vsub.f32 %v447, %v444
    %v508 = vsub.f32 %v488, %v485
    %v509 = vsub.f32 %v450, %v441
    %v510 = vsub.f32 %v491, %v482
    %v511 = vsub.f32 %v453, %v438
    %v512 = vsub.f32 %v494, %v479
    %v513 = vsub.f32 %v456, %v435
    %v514 = vsub.f32 %v497, %v476
    %v516 = vperm.slane %v384, 0
    %v517 = vperm.slane %v384, 1
    %v520 = vmul.f32 %v516, %v499
    %v521 = vmul.f32 %v517, %v500
    %v522 = vmul.f32 %v516, %v501
    %v523 = vmul.f32 %v517, %v502
    %v524 = vmul.f32 %v516, %v503
    %v525 = vmul.f32 %v517, %v504
    %v526 = vmul.f32 %v516, %v505
    %v527 = vmul.f32 %v517, %v506
    %v528 = vmul.f32 %v516, %v507
    %v529 = vmul.f32 %v517, %v508
    %v530 = vmul.f32 %v516, %v509
    %v531 = vmul.f32 %v517, %v510
    %v532 = vmul.f32 %v516, %v511
    %v533 = vmul.f32 %v517, %v512
    %v534 = vmul.f32 %v516, %v513
    %v535 = vmul.f32 %v517, %v514
    %v536 = vadd.f32 %v456, %v520
    %v537 = vadd.f32 %v497, %v521
    %v538 = vadd.f32 %v453, %v522
    %v539 = vadd.f32 %v494, %v523
    %v540 = vadd.f32 %v450, %v524
    %v541 = vadd.f32 %v491, %v525
    %v542 = vadd.f32 %v447, %v526
    %v543 = vadd.f32 %v488, %v527
    %v544 = vadd.f32 %v444, %v528
    %v545 = vadd.f32 %v485, %v529
    %v546 = vadd.f32 %v441, %v530
    %v547 = vadd.f32 %v482, %v531
    %v548 = vadd.f32 %v438, %v532
    %v549 = vadd.f32 %v479, %v533
    %v550 = vadd.f32 %v435, %v534
    %v551 = vadd.f32 %v476, %v535
    %v552 = vld [vmem:[%s8] sm:$0x3]
    %v554 = vperm.slane %v552, 0
    %v555 = vperm.slane %v552, 1
    %v558 = vadd.f32 %v536, %v554
    %v559 = vadd.f32 %v537, %v555
    %v560 = vadd.f32 %v538, %v554
    %v561 = vadd.f32 %v539, %v555
    %v562 = vadd.f32 %v540, %v554
    %v563 = vadd.f32 %v541, %v555
    %v564 = vadd.f32 %v542, %v554
    %v565 = vadd.f32 %v543, %v555
    %v566 = vadd.f32 %v544, %v554
    %v567 = vadd.f32 %v545, %v555
    %v568 = vadd.f32 %v546, %v554
    %v569 = vadd.f32 %v547, %v555
    %v570 = vadd.f32 %v548, %v554
    %v571 = vadd.f32 %v549, %v555
    %v572 = vadd.f32 %v550, %v554
    %v573 = vadd.f32 %v551, %v555
    %v574 = vld [vmem:[%s7] sm:$0xff]
    %v575 = vld [vmem:[%s7 + $0x8] sm:$0xff]
    %v576 = vld [vmem:[%s7 + $0x10] sm:$0xff]
    %v577 = vld [vmem:[%s7 + $0x18] sm:$0xff]
    %v578 = vld [vmem:[%s7 + $0x20] sm:$0xff]
    %v579 = vld [vmem:[%s7 + $0x28] sm:$0xff]
    %v580 = vld [vmem:[%s7 + $0x30] sm:$0xff]
    %v581 = vld [vmem:[%s7 + $0x38] sm:$0xff]
    %v582 = vld [vmem:[%s7 + $0x40] sm:$0xff]
    %v583 = vld [vmem:[%s7 + $0x48] sm:$0xff]
    %v584 = vld [vmem:[%s7 + $0x50] sm:$0xff]
    %v585 = vld [vmem:[%s7 + $0x58] sm:$0xff]
    %v586 = vld [vmem:[%s7 + $0x60] sm:$0xff]
    %v587 = vld [vmem:[%s7 + $0x68] sm:$0xff]
    %v588 = vld [vmem:[%s7 + $0x70] sm:$0xff]
    %v589 = vld [vmem:[%s7 + $0x78] sm:$0xff]
    %v591 = vsel %vm151, 0.0, 0
    %593 = vmatpush.msra.mxu0 0.0
    %594 = vmatpush.msra.mxu0 0.0
    %595 = vmatpush.msra.mxu0 0.0
    %596 = vmatpush.msra.mxu0 0.0
    %597 = vmatpush.msra.mxu0 0.0
    %598 = vmatpush.msra.mxu0 0.0
    %599 = vmatpush.msra.mxu0 0.0
    %600 = vmatpush.msra.mxu0 0.0
    %601 = vmatpush.msra.mxu0 %v588
    %602 = vmatpush.msra.mxu0 %v586
    %603 = vmatpush.msra.mxu0 %v584
    %604 = vmatpush.msra.mxu0 %v582
    %605 = vmatpush.msra.mxu0 %v580
    %606 = vmatpush.msra.mxu0 %v578
    %607 = vmatpush.msra.mxu0 %v576
    %608 = vmatpush.msra.mxu0 %v574
    %609 = vmatmul.f32.gmra.mxu0 %v591
    %v610 = vpop.f32.mrf.mxu0
    %v611 = vadd.f32 0.0, %v610
    %612 = vdwg.mxu0
    %613 = vmatpush.msra.mxu0 0.0
    %614 = vmatpush.msra.mxu0 0.0
    %615 = vmatpush.msra.mxu0 0.0
    %616 = vmatpush.msra.mxu0 0.0
    %617 = vmatpush.msra.mxu0 0.0
    %618 = vmatpush.msra.mxu0 0.0
    %619 = vmatpush.msra.mxu0 0.0
    %620 = vmatpush.msra.mxu0 0.0
    %621 = vmatpush.msra.mxu0 %v589
    %622 = vmatpush.msra.mxu0 %v587
    %623 = vmatpush.msra.mxu0 %v585
    %624 = vmatpush.msra.mxu0 %v583
    %625 = vmatpush.msra.mxu0 %v581
    %626 = vmatpush.msra.mxu0 %v579
    %627 = vmatpush.msra.mxu0 %v577
    %628 = vmatpush.msra.mxu0 %v575
    %629 = vmatmul.f32.gmra.mxu0 %v591
    %v630 = vpop.f32.mrf.mxu0
    %v631 = vadd.f32 0.0, %v630
    %632 = vdwg.mxu0
    %v633 = vadd.f32 %v558, %v611
    %v634 = vadd.f32 %v559, %v631
    %v635 = vxor.u32 %v633, 2147483648
    %v636 = vmul.f32 %v635, 1.442695
    %v637 = vpow.pop %v636
    %v638 = vadd.f32 %v637, 1.0
    %v639 = vrcp.pop %v638
    %v640 = vmul.f32 %v638, %v639
    %v641 = vsub.f32 1.0, %v640
    %v642 = vmul.f32 %v639, %v641
    %v643 = vadd.f32 %v639, %v642
    %vm644 = vweird.f32 %v638
    %vm645 = vweird.f32 %v639
    %vm646 = vmor %vm644, %vm645
    %v647 = vsel %vm646, %v639, %v643
    %v648 = vand.u32 2147483647, %v638
    %vm649 = vcmp.eq.f32.partialorder %v648, 8.507059e+37
    %v650 = vand.u32 %v638, 2147483648
    %v651 = vor.u32 1.1754944e-38, %v650
    %v652 = vsel %vm649, %v651, %v647
    %v653 = vmul.f32 1.0, %v652
    %v654 = vtanh.pop %v634
    %v655 = vxor.u32 %v634, 2147483648
    %v656 = vmul.f32 %v655, 1.442695
    %v657 = vpow.pop %v656
    %v658 = vadd.f32 %v657, 1.0
    %v659 = vrcp.pop %v658
    %v660 = vmul.f32 %v658, %v659
    %v661 = vsub.f32 1.0, %v660
    %v662 = vmul.f32 %v659, %v661
    %v663 = vadd.f32 %v659, %v662
    %vm664 = vweird.f32 %v658
    %vm665 = vweird.f32 %v659
    %vm666 = vmor %vm664, %vm665
    %v667 = vsel %vm666, %v659, %v663
    %v668 = vand.u32 2147483647, %v658
    %vm669 = vcmp.eq.f32.partialorder %v668, 8.507059e+37
    %v670 = vand.u32 %v658, 2147483648
    %v671 = vor.u32 1.1754944e-38, %v670
    %v672 = vsel %vm669, %v671, %v667
    %v673 = vmul.f32 1.0, %v672
    %v674 = vmul.f32 %v653, 0.0
    %v675 = vmul.f32 %v653, %v654
    %677 = vrot.lane.b32.xlu0 %v675, 64
    %v678 = vpop.permute.xlu0 %677
    %v680 = vadd.f32 %v674, %v678
    %v681 = vtanh.pop %v680
    %v682 = vmul.f32 %v673, %v681
    %684 = vrot.lane.b32.xlu0 %v682, 64
    %v685 = vpop.permute.xlu0 %684
    %687 = vst.msk [vmem:[#allocation2] sm:$0xff] %vm267, %v685
    %vm688 = vcmask 523520
    %689 = vst.msk [vmem:[#allocation2 + $0x38] sm:$0xff] %vm688, %v685
    %v690 = vsel %vm151, %v685, 0
    %692 = vmatpush.msra.mxu0 0.0
    %693 = vmatpush.msra.mxu0 0.0
    %694 = vmatpush.msra.mxu0 0.0
    %695 = vmatpush.msra.mxu0 0.0
    %696 = vmatpush.msra.mxu0 0.0
    %697 = vmatpush.msra.mxu0 0.0
    %698 = vmatpush.msra.mxu0 0.0
    %699 = vmatpush.msra.mxu0 0.0
    %700 = vmatpush.msra.mxu0 %v588
    %701 = vmatpush.msra.mxu0 %v586
    %702 = vmatpush.msra.mxu0 %v584
    %703 = vmatpush.msra.mxu0 %v582
    %704 = vmatpush.msra.mxu0 %v580
    %705 = vmatpush.msra.mxu0 %v578
    %706 = vmatpush.msra.mxu0 %v576
    %707 = vmatpush.msra.mxu0 %v574
    %708 = vmatmul.f32.gmra.mxu0 %v690
    %v709 = vpop.f32.mrf.mxu0
    %v710 = vadd.f32 0.0, %v709
    %711 = vdwg.mxu0
    %712 = vmatpush.msra.mxu0 0.0
    %713 = vmatpush.msra.mxu0 0.0
    %714 = vmatpush.msra.mxu0 0.0
    %715 = vmatpush.msra.mxu0 0.0
    %716 = vmatpush.msra.mxu0 0.0
    %717 = vmatpush.msra.mxu0 0.0
    %718 = vmatpush.msra.mxu0 0.0
    %719 = vmatpush.msra.mxu0 0.0
    %720 = vmatpush.msra.mxu0 %v589
    %721 = vmatpush.msra.mxu0 %v587
    %722 = vmatpush.msra.mxu0 %v585
    %723 = vmatpush.msra.mxu0 %v583
    %724 = vmatpush.msra.mxu0 %v581
    %725 = vmatpush.msra.mxu0 %v579
    %726 = vmatpush.msra.mxu0 %v577
    %727 = vmatpush.msra.mxu0 %v575
    %728 = vmatmul.f32.gmra.mxu0 %v690
    %v729 = vpop.f32.mrf.mxu0
    %v730 = vadd.f32 0.0, %v729
    %731 = vdwg.mxu0
    %v732 = vadd.f32 %v560, %v710
    %v733 = vadd.f32 %v561, %v730
    %v734 = vxor.u32 %v732, 2147483648
    %v735 = vmul.f32 %v734, 1.442695
    %v736 = vpow.pop %v735
    %v737 = vadd.f32 %v736, 1.0
    %v738 = vrcp.pop %v737
    %v739 = vmul.f32 %v737, %v738
    %v740 = vsub.f32 1.0, %v739
    %v741 = vmul.f32 %v738, %v740
    %v742 = vadd.f32 %v738, %v741
    %vm743 = vweird.f32 %v737
    %vm744 = vweird.f32 %v738
    %vm745 = vmor %vm743, %vm744
    %v746 = vsel %vm745, %v738, %v742
    %v747 = vand.u32 2147483647, %v737
    %vm748 = vcmp.eq.f32.partialorder %v747, 8.507059e+37
    %v749 = vand.u32 %v737, 2147483648
    %v750 = vor.u32 1.1754944e-38, %v749
    %v751 = vsel %vm748, %v750, %v746
    %v752 = vmul.f32 1.0, %v751
    %v753 = vtanh.pop %v733
    %v754 = vxor.u32 %v733, 2147483648
    %v755 = vmul.f32 %v754, 1.442695
    %v756 = vpow.pop %v755
    %v757 = vadd.f32 %v756, 1.0
    %v758 = vrcp.pop %v757
    %v759 = vmul.f32 %v757, %v758
    %v760 = vsub.f32 1.0, %v759
    %v761 = vmul.f32 %v758, %v760
    %v762 = vadd.f32 %v758, %v761
    %vm763 = vweird.f32 %v757
    %vm764 = vweird.f32 %v758
    %vm765 = vmor %vm763, %vm764
    %v766 = vsel %vm765, %v758, %v762
    %v767 = vand.u32 2147483647, %v757
    %vm768 = vcmp.eq.f32.partialorder %v767, 8.507059e+37
    %v769 = vand.u32 %v757, 2147483648
    %v770 = vor.u32 1.1754944e-38, %v769
    %v771 = vsel %vm768, %v770, %v766
    %v772 = vmul.f32 1.0, %v771
    %v773 = vmul.f32 %v752, %v680
    %v774 = vmul.f32 %v752, %v753
    %776 = vrot.lane.b32.xlu0 %v774, 64
    %v777 = vpop.permute.xlu0 %776
    %v779 = vadd.f32 %v773, %v777
    %v780 = vtanh.pop %v779
    %v781 = vmul.f32 %v772, %v780
    %783 = vrot.lane.b32.xlu0 %v781, 64
    %v784 = vpop.permute.xlu0 %783
    %786 = vst.msk [vmem:[#allocation2 + $0x8] sm:$0xff] %vm267, %v784
    %787 = vst.msk [vmem:[#allocation2 + $0x30] sm:$0xff] %vm688, %v784
    %v788 = vsel %vm151, %v784, 0
    %790 = vmatpush.msra.mxu0 0.0
    %791 = vmatpush.msra.mxu0 0.0
    %792 = vmatpush.msra.mxu0 0.0
    %793 = vmatpush.msra.mxu0 0.0
    %794 = vmatpush.msra.mxu0 0.0
    %795 = vmatpush.msra.mxu0 0.0
    %796 = vmatpush.msra.mxu0 0.0
    %797 = vmatpush.msra.mxu0 0.0
    %798 = vmatpush.msra.mxu0 %v588
    %799 = vmatpush.msra.mxu0 %v586
    %800 = vmatpush.msra.mxu0 %v584
    %801 = vmatpush.msra.mxu0 %v582
    %802 = vmatpush.msra.mxu0 %v580
    %803 = vmatpush.msra.mxu0 %v578
    %804 = vmatpush.msra.mxu0 %v576
    %805 = vmatpush.msra.mxu0 %v574
    %806 = vmatmul.f32.gmra.mxu0 %v788
    %v807 = vpop.f32.mrf.mxu0
    %v808 = vadd.f32 0.0, %v807
    %809 = vdwg.mxu0
    %810 = vmatpush.msra.mxu0 0.0
    %811 = vmatpush.msra.mxu0 0.0
    %812 = vmatpush.msra.mxu0 0.0
    %813 = vmatpush.msra.mxu0 0.0
    %814 = vmatpush.msra.mxu0 0.0
    %815 = vmatpush.msra.mxu0 0.0
    %816 = vmatpush.msra.mxu0 0.0
    %817 = vmatpush.msra.mxu0 0.0
    %818 = vmatpush.msra.mxu0 %v589
    %819 = vmatpush.msra.mxu0 %v587
    %820 = vmatpush.msra.mxu0 %v585
    %821 = vmatpush.msra.mxu0 %v583
    %822 = vmatpush.msra.mxu0 %v581
    %823 = vmatpush.msra.mxu0 %v579
    %824 = vmatpush.msra.mxu0 %v577
    %825 = vmatpush.msra.mxu0 %v575
    %826 = vmatmul.f32.gmra.mxu0 %v788
    %v827 = vpop.f32.mrf.mxu0
    %v828 = vadd.f32 0.0, %v827
    %829 = vdwg.mxu0
    %v830 = vadd.f32 %v562, %v808
    %v831 = vadd.f32 %v563, %v828
    %v832 = vxor.u32 %v830, 2147483648
    %v833 = vmul.f32 %v832, 1.442695
    %v834 = vpow.pop %v833
    %v835 = vadd.f32 %v834, 1.0
    %v836 = vrcp.pop %v835
    %v837 = vmul.f32 %v835, %v836
    %v838 = vsub.f32 1.0, %v837
    %v839 = vmul.f32 %v836, %v838
    %v840 = vadd.f32 %v836, %v839
    %vm841 = vweird.f32 %v835
    %vm842 = vweird.f32 %v836
    %vm843 = vmor %vm841, %vm842
    %v844 = vsel %vm843, %v836, %v840
    %v845 = vand.u32 2147483647, %v835
    %vm846 = vcmp.eq.f32.partialorder %v845, 8.507059e+37
    %v847 = vand.u32 %v835, 2147483648
    %v848 = vor.u32 1.1754944e-38, %v847
    %v849 = vsel %vm846, %v848, %v844
    %v850 = vmul.f32 1.0, %v849
    %v851 = vtanh.pop %v831
    %v852 = vxor.u32 %v831, 2147483648
    %v853 = vmul.f32 %v852, 1.442695
    %v854 = vpow.pop %v853
    %v855 = vadd.f32 %v854, 1.0
    %v856 = vrcp.pop %v855
    %v857 = vmul.f32 %v855, %v856
    %v858 = vsub.f32 1.0, %v857
    %v859 = vmul.f32 %v856, %v858
    %v860 = vadd.f32 %v856, %v859
    %vm861 = vweird.f32 %v855
    %vm862 = vweird.f32 %v856
    %vm863 = vmor %vm861, %vm862
    %v864 = vsel %vm863, %v856, %v860
    %v865 = vand.u32 2147483647, %v855
    %vm866 = vcmp.eq.f32.partialorder %v865, 8.507059e+37
    %v867 = vand.u32 %v855, 2147483648
    %v868 = vor.u32 1.1754944e-38, %v867
    %v869 = vsel %vm866, %v868, %v864
    %v870 = vmul.f32 1.0, %v869
    %v871 = vmul.f32 %v850, %v779
    %v872 = vmul.f32 %v850, %v851
    %874 = vrot.lane.b32.xlu0 %v872, 64
    %v875 = vpop.permute.xlu0 %874
    %v877 = vadd.f32 %v871, %v875
    %v878 = vtanh.pop %v877
    %v879 = vmul.f32 %v870, %v878
    %881 = vrot.lane.b32.xlu0 %v879, 64
    %v882 = vpop.permute.xlu0 %881
    %884 = vst.msk [vmem:[#allocation2 + $0x10] sm:$0xff] %vm267, %v882
    %885 = vst.msk [vmem:[#allocation2 + $0x28] sm:$0xff] %vm688, %v882
    %v886 = vsel %vm151, %v882, 0
    %888 = vmatpush.msra.mxu0 0.0
    %889 = vmatpush.msra.mxu0 0.0
    %890 = vmatpush.msra.mxu0 0.0
    %891 = vmatpush.msra.mxu0 0.0
    %892 = vmatpush.msra.mxu0 0.0
    %893 = vmatpush.msra.mxu0 0.0
    %894 = vmatpush.msra.mxu0 0.0
    %895 = vmatpush.msra.mxu0 0.0
    %896 = vmatpush.msra.mxu0 %v588
    %897 = vmatpush.msra.mxu0 %v586
    %898 = vmatpush.msra.mxu0 %v584
    %899 = vmatpush.msra.mxu0 %v582
    %900 = vmatpush.msra.mxu0 %v580
    %901 = vmatpush.msra.mxu0 %v578
    %902 = vmatpush.msra.mxu0 %v576
    %903 = vmatpush.msra.mxu0 %v574
    %904 = vmatmul.f32.gmra.mxu0 %v886
    %v905 = vpop.f32.mrf.mxu0
    %v906 = vadd.f32 0.0, %v905
    %907 = vdwg.mxu0
    %908 = vmatpush.msra.mxu0 0.0
    %909 = vmatpush.msra.mxu0 0.0
    %910 = vmatpush.msra.mxu0 0.0
    %911 = vmatpush.msra.mxu0 0.0
    %912 = vmatpush.msra.mxu0 0.0
    %913 = vmatpush.msra.mxu0 0.0
    %914 = vmatpush.msra.mxu0 0.0
    %915 = vmatpush.msra.mxu0 0.0
    %916 = vmatpush.msra.mxu0 %v589
    %917 = vmatpush.msra.mxu0 %v587
    %918 = vmatpush.msra.mxu0 %v585
    %919 = vmatpush.msra.mxu0 %v583
    %920 = vmatpush.msra.mxu0 %v581
    %921 = vmatpush.msra.mxu0 %v579
    %922 = vmatpush.msra.mxu0 %v577
    %923 = vmatpush.msra.mxu0 %v575
    %924 = vmatmul.f32.gmra.mxu0 %v886
    %v925 = vpop.f32.mrf.mxu0
    %v926 = vadd.f32 0.0, %v925
    %927 = vdwg.mxu0
    %v928 = vadd.f32 %v564, %v906
    %v929 = vadd.f32 %v565, %v926
    %v930 = vxor.u32 %v928, 2147483648
    %v931 = vmul.f32 %v930, 1.442695
    %v932 = vpow.pop %v931
    %v933 = vadd.f32 %v932, 1.0
    %v934 = vrcp.pop %v933
    %v935 = vmul.f32 %v933, %v934
    %v936 = vsub.f32 1.0, %v935
    %v937 = vmul.f32 %v934, %v936
    %v938 = vadd.f32 %v934, %v937
    %vm939 = vweird.f32 %v933
    %vm940 = vweird.f32 %v934
    %vm941 = vmor %vm939, %vm940
    %v942 = vsel %vm941, %v934, %v938
    %v943 = vand.u32 2147483647, %v933
    %vm944 = vcmp.eq.f32.partialorder %v943, 8.507059e+37
    %v945 = vand.u32 %v933, 2147483648
    %v946 = vor.u32 1.1754944e-38, %v945
    %v947 = vsel %vm944, %v946, %v942
    %v948 = vmul.f32 1.0, %v947
    %v949 = vtanh.pop %v929
    %v950 = vxor.u32 %v929, 2147483648
    %v951 = vmul.f32 %v950, 1.442695
    %v952 = vpow.pop %v951
    %v953 = vadd.f32 %v952, 1.0
    %v954 = vrcp.pop %v953
    %v955 = vmul.f32 %v953, %v954
    %v956 = vsub.f32 1.0, %v955
    %v957 = vmul.f32 %v954, %v956
    %v958 = vadd.f32 %v954, %v957
    %vm959 = vweird.f32 %v953
    %vm960 = vweird.f32 %v954
    %vm961 = vmor %vm959, %vm960
    %v962 = vsel %vm961, %v954, %v958
    %v963 = vand.u32 2147483647, %v953
    %vm964 = vcmp.eq.f32.partialorder %v963, 8.507059e+37
    %v965 = vand.u32 %v953, 2147483648
    %v966 = vor.u32 1.1754944e-38, %v965
    %v967 = vsel %vm964, %v966, %v962
    %v968 = vmul.f32 1.0, %v967
    %v969 = vmul.f32 %v948, %v877
    %v970 = vmul.f32 %v948, %v949
    %972 = vrot.lane.b32.xlu0 %v970, 64
    %v973 = vpop.permute.xlu0 %972
    %v975 = vadd.f32 %v969, %v973
    %v976 = vtanh.pop %v975
    %v977 = vmul.f32 %v968, %v976
    %979 = vrot.lane.b32.xlu0 %v977, 64
    %v980 = vpop.permute.xlu0 %979
    %982 = vst.msk [vmem:[#allocation2 + $0x18] sm:$0xff] %vm267, %v980
    %983 = vst.msk [vmem:[#allocation2 + $0x20] sm:$0xff] %vm688, %v980
    %v984 = vsel %vm151, %v980, 0
    %986 = vmatpush.msra.mxu0 0.0
    %987 = vmatpush.msra.mxu0 0.0
    %988 = vmatpush.msra.mxu0 0.0
    %989 = vmatpush.msra.mxu0 0.0
    %990 = vmatpush.msra.mxu0 0.0
    %991 = vmatpush.msra.mxu0 0.0
    %992 = vmatpush.msra.mxu0 0.0
    %993 = vmatpush.msra.mxu0 0.0
    %994 = vmatpush.msra.mxu0 %v588
    %995 = vmatpush.msra.mxu0 %v586
    %996 = vmatpush.msra.mxu0 %v584
    %997 = vmatpush.msra.mxu0 %v582
    %998 = vmatpush.msra.mxu0 %v580
    %999 = vmatpush.msra.mxu0 %v578
    %1000 = vmatpush.msra.mxu0 %v576
    %1001 = vmatpush.msra.mxu0 %v574
    %1002 = vmatmul.f32.gmra.mxu0 %v984
    %v1003 = vpop.f32.mrf.mxu0
    %v1004 = vadd.f32 0.0, %v1003
    %1005 = vdwg.mxu0
    %1006 = vmatpush.msra.mxu0 0.0
    %1007 = vmatpush.msra.mxu0 0.0
    %1008 = vmatpush.msra.mxu0 0.0
    %1009 = vmatpush.msra.mxu0 0.0
    %1010 = vmatpush.msra.mxu0 0.0
    %1011 = vmatpush.msra.mxu0 0.0
    %1012 = vmatpush.msra.mxu0 0.0
    %1013 = vmatpush.msra.mxu0 0.0
    %1014 = vmatpush.msra.mxu0 %v589
    %1015 = vmatpush.msra.mxu0 %v587
    %1016 = vmatpush.msra.mxu0 %v585
    %1017 = vmatpush.msra.mxu0 %v583
    %1018 = vmatpush.msra.mxu0 %v581
    %1019 = vmatpush.msra.mxu0 %v579
    %1020 = vmatpush.msra.mxu0 %v577
    %1021 = vmatpush.msra.mxu0 %v575
    %1022 = vmatmul.f32.gmra.mxu0 %v984
    %v1023 = vpop.f32.mrf.mxu0
    %v1024 = vadd.f32 0.0, %v1023
    %1025 = vdwg.mxu0
    %v1026 = vadd.f32 %v566, %v1004
    %v1027 = vadd.f32 %v567, %v1024
    %v1028 = vxor.u32 %v1026, 2147483648
    %v1029 = vmul.f32 %v1028, 1.442695
    %v1030 = vpow.pop %v1029
    %v1031 = vadd.f32 %v1030, 1.0
    %v1032 = vrcp.pop %v1031
    %v1033 = vmul.f32 %v1031, %v1032
    %v1034 = vsub.f32 1.0, %v1033
    %v1035 = vmul.f32 %v1032, %v1034
    %v1036 = vadd.f32 %v1032, %v1035
    %vm1037 = vweird.f32 %v1031
    %vm1038 = vweird.f32 %v1032
    %vm1039 = vmor %vm1037, %vm1038
    %v1040 = vsel %vm1039, %v1032, %v1036
    %v1041 = vand.u32 2147483647, %v1031
    %vm1042 = vcmp.eq.f32.partialorder %v1041, 8.507059e+37
    %v1043 = vand.u32 %v1031, 2147483648
    %v1044 = vor.u32 1.1754944e-38, %v1043
    %v1045 = vsel %vm1042, %v1044, %v1040
    %v1046 = vmul.f32 1.0, %v1045
    %v1047 = vtanh.pop %v1027
    %v1048 = vxor.u32 %v1027, 2147483648
    %v1049 = vmul.f32 %v1048, 1.442695
    %v1050 = vpow.pop %v1049
    %v1051 = vadd.f32 %v1050, 1.0
    %v1052 = vrcp.pop %v1051
    %v1053 = vmul.f32 %v1051, %v1052
    %v1054 = vsub.f32 1.0, %v1053
    %v1055 = vmul.f32 %v1052, %v1054
    %v1056 = vadd.f32 %v1052, %v1055
    %vm1057 = vweird.f32 %v1051
    %vm1058 = vweird.f32 %v1052
    %vm1059 = vmor %vm1057, %vm1058
    %v1060 = vsel %vm1059, %v1052, %v1056
    %v1061 = vand.u32 2147483647, %v1051
    %vm1062 = vcmp.eq.f32.partialorder %v1061, 8.507059e+37
    %v1063 = vand.u32 %v1051, 2147483648
    %v1064 = vor.u32 1.1754944e-38, %v1063
    %v1065 = vsel %vm1062, %v1064, %v1060
    %v1066 = vmul.f32 1.0, %v1065
    %v1067 = vmul.f32 %v1046, %v975
    %v1068 = vmul.f32 %v1046, %v1047
    %1070 = vrot.lane.b32.xlu0 %v1068, 64
    %v1071 = vpop.permute.xlu0 %1070
    %v1073 = vadd.f32 %v1067, %v1071
    %v1074 = vtanh.pop %v1073
    %v1075 = vmul.f32 %v1066, %v1074
    %1077 = vrot.lane.b32.xlu0 %v1075, 64
    %v1078 = vpop.permute.xlu0 %1077
    %1080 = vst.msk [vmem:[#allocation2 + $0x20] sm:$0xff] %vm267, %v1078
    %1081 = vst.msk [vmem:[#allocation2 + $0x18] sm:$0xff] %vm688, %v1078
    %v1082 = vsel %vm151, %v1078, 0
    %1084 = vmatpush.msra.mxu0 0.0
    %1085 = vmatpush.msra.mxu0 0.0
    %1086 = vmatpush.msra.mxu0 0.0
    %1087 = vmatpush.msra.mxu0 0.0
    %1088 = vmatpush.msra.mxu0 0.0
    %1089 = vmatpush.msra.mxu0 0.0
    %1090 = vmatpush.msra.mxu0 0.0
    %1091 = vmatpush.msra.mxu0 0.0
    %1092 = vmatpush.msra.mxu0 %v588
    %1093 = vmatpush.msra.mxu0 %v586
    %1094 = vmatpush.msra.mxu0 %v584
    %1095 = vmatpush.msra.mxu0 %v582
    %1096 = vmatpush.msra.mxu0 %v580
    %1097 = vmatpush.msra.mxu0 %v578
    %1098 = vmatpush.msra.mxu0 %v576
    %1099 = vmatpush.msra.mxu0 %v574
    %1100 = vmatmul.f32.gmra.mxu0 %v1082
    %v1101 = vpop.f32.mrf.mxu0
    %v1102 = vadd.f32 0.0, %v1101
    %1103 = vdwg.mxu0
    %1104 = vmatpush.msra.mxu0 0.0
    %1105 = vmatpush.msra.mxu0 0.0
    %1106 = vmatpush.msra.mxu0 0.0
    %1107 = vmatpush.msra.mxu0 0.0
    %1108 = vmatpush.msra.mxu0 0.0
    %1109 = vmatpush.msra.mxu0 0.0
    %1110 = vmatpush.msra.mxu0 0.0
    %1111 = vmatpush.msra.mxu0 0.0
    %1112 = vmatpush.msra.mxu0 %v589
    %1113 = vmatpush.msra.mxu0 %v587
    %1114 = vmatpush.msra.mxu0 %v585
    %1115 = vmatpush.msra.mxu0 %v583
    %1116 = vmatpush.msra.mxu0 %v581
    %1117 = vmatpush.msra.mxu0 %v579
    %1118 = vmatpush.msra.mxu0 %v577
    %1119 = vmatpush.msra.mxu0 %v575
    %1120 = vmatmul.f32.gmra.mxu0 %v1082
    %v1121 = vpop.f32.mrf.mxu0
    %v1122 = vadd.f32 0.0, %v1121
    %1123 = vdwg.mxu0
    %v1124 = vadd.f32 %v568, %v1102
    %v1125 = vadd.f32 %v569, %v1122
    %v1126 = vxor.u32 %v1124, 2147483648
    %v1127 = vmul.f32 %v1126, 1.442695
    %v1128 = vpow.pop %v1127
    %v1129 = vadd.f32 %v1128, 1.0
    %v1130 = vrcp.pop %v1129
    %v1131 = vmul.f32 %v1129, %v1130
    %v1132 = vsub.f32 1.0, %v1131
    %v1133 = vmul.f32 %v1130, %v1132
    %v1134 = vadd.f32 %v1130, %v1133
    %vm1135 = vweird.f32 %v1129
    %vm1136 = vweird.f32 %v1130
    %vm1137 = vmor %vm1135, %vm1136
    %v1138 = vsel %vm1137, %v1130, %v1134
    %v1139 = vand.u32 2147483647, %v1129
    %vm1140 = vcmp.eq.f32.partialorder %v1139, 8.507059e+37
    %v1141 = vand.u32 %v1129, 2147483648
    %v1142 = vor.u32 1.1754944e-38, %v1141
    %v1143 = vsel %vm1140, %v1142, %v1138
    %v1144 = vmul.f32 1.0, %v1143
    %v1145 = vtanh.pop %v1125
    %v1146 = vxor.u32 %v1125, 2147483648
    %v1147 = vmul.f32 %v1146, 1.442695
    %v1148 = vpow.pop %v1147
    %v1149 = vadd.f32 %v1148, 1.0
    %v1150 = vrcp.pop %v1149
    %v1151 = vmul.f32 %v1149, %v1150
    %v1152 = vsub.f32 1.0, %v1151
    %v1153 = vmul.f32 %v1150, %v1152
    %v1154 = vadd.f32 %v1150, %v1153
    %vm1155 = vweird.f32 %v1149
    %vm1156 = vweird.f32 %v1150
    %vm1157 = vmor %vm1155, %vm1156
    %v1158 = vsel %vm1157, %v1150, %v1154
    %v1159 = vand.u32 2147483647, %v1149
    %vm1160 = vcmp.eq.f32.partialorder %v1159, 8.507059e+37
    %v1161 = vand.u32 %v1149, 2147483648
    %v1162 = vor.u32 1.1754944e-38, %v1161
    %v1163 = vsel %vm1160, %v1162, %v1158
    %v1164 = vmul.f32 1.0, %v1163
    %v1165 = vmul.f32 %v1144, %v1073
    %v1166 = vmul.f32 %v1144, %v1145
    %1168 = vrot.lane.b32.xlu0 %v1166, 64
    %v1169 = vpop.permute.xlu0 %1168
    %v1171 = vadd.f32 %v1165, %v1169
    %v1172 = vtanh.pop %v1171
    %v1173 = vmul.f32 %v1164, %v1172
    %1175 = vrot.lane.b32.xlu0 %v1173, 64
    %v1176 = vpop.permute.xlu0 %1175
    %1178 = vst.msk [vmem:[#allocation2 + $0x28] sm:$0xff] %vm267, %v1176
    %1179 = vst.msk [vmem:[#allocation2 + $0x10] sm:$0xff] %vm688, %v1176
    %v1180 = vsel %vm151, %v1176, 0
    %1182 = vmatpush.msra.mxu0 0.0
    %1183 = vmatpush.msra.mxu0 0.0
    %1184 = vmatpush.msra.mxu0 0.0
    %1185 = vmatpush.msra.mxu0 0.0
    %1186 = vmatpush.msra.mxu0 0.0
    %1187 = vmatpush.msra.mxu0 0.0
    %1188 = vmatpush.msra.mxu0 0.0
    %1189 = vmatpush.msra.mxu0 0.0
    %1190 = vmatpush.msra.mxu0 %v588
    %1191 = vmatpush.msra.mxu0 %v586
    %1192 = vmatpush.msra.mxu0 %v584
    %1193 = vmatpush.msra.mxu0 %v582
    %1194 = vmatpush.msra.mxu0 %v580
    %1195 = vmatpush.msra.mxu0 %v578
    %1196 = vmatpush.msra.mxu0 %v576
    %1197 = vmatpush.msra.mxu0 %v574
    %1198 = vmatmul.f32.gmra.mxu0 %v1180
    %v1199 = vpop.f32.mrf.mxu0
    %v1200 = vadd.f32 0.0, %v1199
    %1201 = vdwg.mxu0
    %1202 = vmatpush.msra.mxu0 0.0
    %1203 = vmatpush.msra.mxu0 0.0
    %1204 = vmatpush.msra.mxu0 0.0
    %1205 = vmatpush.msra.mxu0 0.0
    %1206 = vmatpush.msra.mxu0 0.0
    %1207 = vmatpush.msra.mxu0 0.0
    %1208 = vmatpush.msra.mxu0 0.0
    %1209 = vmatpush.msra.mxu0 0.0
    %1210 = vmatpush.msra.mxu0 %v589
    %1211 = vmatpush.msra.mxu0 %v587
    %1212 = vmatpush.msra.mxu0 %v585
    %1213 = vmatpush.msra.mxu0 %v583
    %1214 = vmatpush.msra.mxu0 %v581
    %1215 = vmatpush.msra.mxu0 %v579
    %1216 = vmatpush.msra.mxu0 %v577
    %1217 = vmatpush.msra.mxu0 %v575
    %1218 = vmatmul.f32.gmra.mxu0 %v1180
    %v1219 = vpop.f32.mrf.mxu0
    %v1220 = vadd.f32 0.0, %v1219
    %1221 = vdwg.mxu0
    %v1222 = vadd.f32 %v570, %v1200
    %v1223 = vadd.f32 %v571, %v1220
    %v1224 = vxor.u32 %v1222, 2147483648
    %v1225 = vmul.f32 %v1224, 1.442695
    %v1226 = vpow.pop %v1225
    %v1227 = vadd.f32 %v1226, 1.0
    %v1228 = vrcp.pop %v1227
    %v1229 = vmul.f32 %v1227, %v1228
    %v1230 = vsub.f32 1.0, %v1229
    %v1231 = vmul.f32 %v1228, %v1230
    %v1232 = vadd.f32 %v1228, %v1231
    %vm1233 = vweird.f32 %v1227
    %vm1234 = vweird.f32 %v1228
    %vm1235 = vmor %vm1233, %vm1234
    %v1236 = vsel %vm1235, %v1228, %v1232
    %v1237 = vand.u32 2147483647, %v1227
    %vm1238 = vcmp.eq.f32.partialorder %v1237, 8.507059e+37
    %v1239 = vand.u32 %v1227, 2147483648
    %v1240 = vor.u32 1.1754944e-38, %v1239
    %v1241 = vsel %vm1238, %v1240, %v1236
    %v1242 = vmul.f32 1.0, %v1241
    %v1243 = vtanh.pop %v1223
    %v1244 = vxor.u32 %v1223, 2147483648
    %v1245 = vmul.f32 %v1244, 1.442695
    %v1246 = vpow.pop %v1245
    %v1247 = vadd.f32 %v1246, 1.0
    %v1248 = vrcp.pop %v1247
    %v1249 = vmul.f32 %v1247, %v1248
    %v1250 = vsub.f32 1.0, %v1249
    %v1251 = vmul.f32 %v1248, %v1250
    %v1252 = vadd.f32 %v1248, %v1251
    %vm1253 = vweird.f32 %v1247
    %vm1254 = vweird.f32 %v1248
    %vm1255 = vmor %vm1253, %vm1254
    %v1256 = vsel %vm1255, %v1248, %v1252
    %v1257 = vand.u32 2147483647, %v1247
    %vm1258 = vcmp.eq.f32.partialorder %v1257, 8.507059e+37
    %v1259 = vand.u32 %v1247, 2147483648
    %v1260 = vor.u32 1.1754944e-38, %v1259
    %v1261 = vsel %vm1258, %v1260, %v1256
    %v1262 = vmul.f32 1.0, %v1261
    %v1263 = vmul.f32 %v1242, %v1171
    %v1264 = vmul.f32 %v1242, %v1243
    %1266 = vrot.lane.b32.xlu0 %v1264, 64
    %v1267 = vpop.permute.xlu0 %1266
    %v1269 = vadd.f32 %v1263, %v1267
    %v1270 = vtanh.pop %v1269
    %v1271 = vmul.f32 %v1262, %v1270
    %1273 = vrot.lane.b32.xlu0 %v1271, 64
    %v1274 = vpop.permute.xlu0 %1273
    %1276 = vst.msk [vmem:[#allocation2 + $0x30] sm:$0xff] %vm267, %v1274
    %1277 = vst.msk [vmem:[#allocation2 + $0x8] sm:$0xff] %vm688, %v1274
    %v1278 = vsel %vm151, %v1274, 0
    %1280 = vmatpush.msra.mxu0 0.0
    %1281 = vmatpush.msra.mxu0 0.0
    %1282 = vmatpush.msra.mxu0 0.0
    %1283 = vmatpush.msra.mxu0 0.0
    %1284 = vmatpush.msra.mxu0 0.0
    %1285 = vmatpush.msra.mxu0 0.0
    %1286 = vmatpush.msra.mxu0 0.0
    %1287 = vmatpush.msra.mxu0 0.0
    %1288 = vmatpush.msra.mxu0 %v588
    %1289 = vmatpush.msra.mxu0 %v586
    %1290 = vmatpush.msra.mxu0 %v584
    %1291 = vmatpush.msra.mxu0 %v582
    %1292 = vmatpush.msra.mxu0 %v580
    %1293 = vmatpush.msra.mxu0 %v578
    %1294 = vmatpush.msra.mxu0 %v576
    %1295 = vmatpush.msra.mxu0 %v574
    %1296 = vmatmul.f32.gmra.mxu0 %v1278
    %v1297 = vpop.f32.mrf.mxu0
    %v1298 = vadd.f32 0.0, %v1297
    %1299 = vdwg.mxu0
    %1300 = vmatpush.msra.mxu0 0.0
    %1301 = vmatpush.msra.mxu0 0.0
    %1302 = vmatpush.msra.mxu0 0.0
    %1303 = vmatpush.msra.mxu0 0.0
    %1304 = vmatpush.msra.mxu0 0.0
    %1305 = vmatpush.msra.mxu0 0.0
    %1306 = vmatpush.msra.mxu0 0.0
    %1307 = vmatpush.msra.mxu0 0.0
    %1308 = vmatpush.msra.mxu0 %v589
    %1309 = vmatpush.msra.mxu0 %v587
    %1310 = vmatpush.msra.mxu0 %v585
    %1311 = vmatpush.msra.mxu0 %v583
    %1312 = vmatpush.msra.mxu0 %v581
    %1313 = vmatpush.msra.mxu0 %v579
    %1314 = vmatpush.msra.mxu0 %v577
    %1315 = vmatpush.msra.mxu0 %v575
    %1316 = vmatmul.f32.gmra.mxu0 %v1278
    %v1317 = vpop.f32.mrf.mxu0
    %v1318 = vadd.f32 0.0, %v1317
    %1319 = vdwg.mxu0
    %v1320 = vadd.f32 %v572, %v1298
    %v1321 = vadd.f32 %v573, %v1318
    %v1322 = vxor.u32 %v1320, 2147483648
    %v1323 = vmul.f32 %v1322, 1.442695
    %v1324 = vpow.pop %v1323
    %v1325 = vadd.f32 %v1324, 1.0
    %v1326 = vrcp.pop %v1325
    %v1327 = vmul.f32 %v1325, %v1326
    %v1328 = vsub.f32 1.0, %v1327
    %v1329 = vmul.f32 %v1326, %v1328
    %v1330 = vadd.f32 %v1326, %v1329
    %vm1331 = vweird.f32 %v1325
    %vm1332 = vweird.f32 %v1326
    %vm1333 = vmor %vm1331, %vm1332
    %v1334 = vsel %vm1333, %v1326, %v1330
    %v1335 = vand.u32 2147483647, %v1325
    %vm1336 = vcmp.eq.f32.partialorder %v1335, 8.507059e+37
    %v1337 = vand.u32 %v1325, 2147483648
    %v1338 = vor.u32 1.1754944e-38, %v1337
    %v1339 = vsel %vm1336, %v1338, %v1334
    %v1340 = vmul.f32 1.0, %v1339
    %v1341 = vtanh.pop %v1321
    %v1342 = vxor.u32 %v1321, 2147483648
    %v1343 = vmul.f32 %v1342, 1.442695
    %v1344 = vpow.pop %v1343
    %v1345 = vadd.f32 %v1344, 1.0
    %v1346 = vrcp.pop %v1345
    %v1347 = vmul.f32 %v1345, %v1346
    %v1348 = vsub.f32 1.0, %v1347
    %v1349 = vmul.f32 %v1346, %v1348
    %v1350 = vadd.f32 %v1346, %v1349
    %vm1351 = vweird.f32 %v1345
    %vm1352 = vweird.f32 %v1346
    %vm1353 = vmor %vm1351, %vm1352
    %v1354 = vsel %vm1353, %v1346, %v1350
    %v1355 = vand.u32 2147483647, %v1345
    %vm1356 = vcmp.eq.f32.partialorder %v1355, 8.507059e+37
    %v1357 = vand.u32 %v1345, 2147483648
    %v1358 = vor.u32 1.1754944e-38, %v1357
    %v1359 = vsel %vm1356, %v1358, %v1354
    %v1360 = vmul.f32 1.0, %v1359
    %v1361 = vmul.f32 %v1340, %v1269
    %v1362 = vmul.f32 %v1340, %v1341
    %1364 = vrot.lane.b32.xlu0 %v1362, 64
    %v1365 = vpop.permute.xlu0 %1364
    %v1367 = vadd.f32 %v1361, %v1365
    %v1368 = vtanh.pop %v1367
    %v1369 = vmul.f32 %v1360, %v1368
    %1371 = vrot.lane.b32.xlu0 %v1369, 64
    %v1372 = vpop.permute.xlu0 %1371
    %1374 = vst.msk [vmem:[#allocation2 + $0x38] sm:$0xff] %vm267, %v1372
    %1375 = vst.msk [vmem:[#allocation2] sm:$0xff] %vm688, %v1372
    %v1376 = vld [vmem:[#allocation2] sm:$0xff]
    %v1377 = vld [vmem:[#allocation2 + $0x8] sm:$0xff]
    %v1378 = vld [vmem:[#allocation2 + $0x10] sm:$0xff]
    %v1379 = vld [vmem:[#allocation2 + $0x18] sm:$0xff]
    %v1380 = vld [vmem:[#allocation2 + $0x20] sm:$0xff]
    %v1381 = vld [vmem:[#allocation2 + $0x28] sm:$0xff]
    %v1382 = vld [vmem:[#allocation2 + $0x30] sm:$0xff]
    %v1383 = vld [vmem:[#allocation2 + $0x38] sm:$0xff]
    %v1384 = vld [vmem:[%s9] sm:$0xff]
    %v1385 = vld [vmem:[%s9 + $0x8] sm:$0xff]
    %v1386 = vld [vmem:[%s9 + $0x10] sm:$0xff]
    %v1387 = vld [vmem:[%s9 + $0x18] sm:$0xff]
    %v1388 = vld [vmem:[%s9 + $0x20] sm:$0xff]
    %v1389 = vld [vmem:[%s9 + $0x28] sm:$0xff]
    %v1390 = vld [vmem:[%s9 + $0x30] sm:$0xff]
    %v1391 = vld [vmem:[%s9 + $0x38] sm:$0xff]
    %v1392 = vld [vmem:[%s9 + $0x40] sm:$0xff]
    %v1393 = vld [vmem:[%s9 + $0x48] sm:$0xff]
    %v1394 = vld [vmem:[%s9 + $0x50] sm:$0xff]
    %v1395 = vld [vmem:[%s9 + $0x58] sm:$0xff]
    %v1396 = vld [vmem:[%s9 + $0x60] sm:$0xff]
    %v1397 = vld [vmem:[%s9 + $0x68] sm:$0xff]
    %v1398 = vld [vmem:[%s9 + $0x70] sm:$0xff]
    %v1399 = vld [vmem:[%s9 + $0x78] sm:$0xff]
    %v1401 = vsel %vm151, %v1376, 0
    %v1404 = vsel %vm151, %v1377, 0
    %v1407 = vsel %vm151, %v1378, 0
    %v1410 = vsel %vm151, %v1379, 0
    %v1413 = vsel %vm151, %v1380, 0
    %v1416 = vsel %vm151, %v1381, 0
    %v1419 = vsel %vm151, %v1382, 0
    %v1422 = vsel %vm151, %v1383, 0
    %1424 = vmatpush.msra.mxu0 0.0
    %1425 = vmatpush.msra.mxu0 0.0
    %1426 = vmatpush.msra.mxu0 0.0
    %1427 = vmatpush.msra.mxu0 0.0
    %1428 = vmatpush.msra.mxu0 0.0
    %1429 = vmatpush.msra.mxu0 0.0
    %1430 = vmatpush.msra.mxu0 0.0
    %1431 = vmatpush.msra.mxu0 0.0
    %1432 = vmatpush.msra.mxu0 %v1398
    %1433 = vmatpush.msra.mxu0 %v1396
    %1434 = vmatpush.msra.mxu0 %v1394
    %1435 = vmatpush.msra.mxu0 %v1392
    %1436 = vmatpush.msra.mxu0 %v1390
    %1437 = vmatpush.msra.mxu0 %v1388
    %1438 = vmatpush.msra.mxu0 %v1386
    %1439 = vmatpush.msra.mxu0 %v1384
    %1440 = vmatmul.f32.gmra.mxu0 %v1401
    %v1441 = vpop.f32.mrf.mxu0
    %v1442 = vadd.f32 0.0, %v1441
    %1443 = vmatmul.f32.gmra.mxu0 %v1404
    %v1444 = vpop.f32.mrf.mxu0
    %v1445 = vadd.f32 0.0, %v1444
    %1446 = vmatmul.f32.gmra.mxu0 %v1407
    %v1447 = vpop.f32.mrf.mxu0
    %v1448 = vadd.f32 0.0, %v1447
    %1449 = vmatmul.f32.gmra.mxu0 %v1410
    %v1450 = vpop.f32.mrf.mxu0
    %v1451 = vadd.f32 0.0, %v1450
    %1452 = vmatmul.f32.gmra.mxu0 %v1413
    %v1453 = vpop.f32.mrf.mxu0
    %v1454 = vadd.f32 0.0, %v1453
    %1455 = vmatmul.f32.gmra.mxu0 %v1416
    %v1456 = vpop.f32.mrf.mxu0
    %v1457 = vadd.f32 0.0, %v1456
    %1458 = vmatmul.f32.gmra.mxu0 %v1419
    %v1459 = vpop.f32.mrf.mxu0
    %v1460 = vadd.f32 0.0, %v1459
    %1461 = vmatmul.f32.gmra.mxu0 %v1422
    %v1462 = vpop.f32.mrf.mxu0
    %v1463 = vadd.f32 0.0, %v1462
    %1464 = vdwg.mxu0
    %1465 = vmatpush.msra.mxu0 0.0
    %1466 = vmatpush.msra.mxu0 0.0
    %1467 = vmatpush.msra.mxu0 0.0
    %1468 = vmatpush.msra.mxu0 0.0
    %1469 = vmatpush.msra.mxu0 0.0
    %1470 = vmatpush.msra.mxu0 0.0
    %1471 = vmatpush.msra.mxu0 0.0
    %1472 = vmatpush.msra.mxu0 0.0
    %1473 = vmatpush.msra.mxu0 %v1399
    %1474 = vmatpush.msra.mxu0 %v1397
    %1475 = vmatpush.msra.mxu0 %v1395
    %1476 = vmatpush.msra.mxu0 %v1393
    %1477 = vmatpush.msra.mxu0 %v1391
    %1478 = vmatpush.msra.mxu0 %v1389
    %1479 = vmatpush.msra.mxu0 %v1387
    %1480 = vmatpush.msra.mxu0 %v1385
    %1481 = vmatmul.f32.gmra.mxu0 %v1401
    %v1482 = vpop.f32.mrf.mxu0
    %v1483 = vadd.f32 0.0, %v1482
    %1484 = vmatmul.f32.gmra.mxu0 %v1404
    %v1485 = vpop.f32.mrf.mxu0
    %v1486 = vadd.f32 0.0, %v1485
    %1487 = vmatmul.f32.gmra.mxu0 %v1407
    %v1488 = vpop.f32.mrf.mxu0
    %v1489 = vadd.f32 0.0, %v1488
    %1490 = vmatmul.f32.gmra.mxu0 %v1410
    %v1491 = vpop.f32.mrf.mxu0
    %v1492 = vadd.f32 0.0, %v1491
    %1493 = vmatmul.f32.gmra.mxu0 %v1413
    %v1494 = vpop.f32.mrf.mxu0
    %v1495 = vadd.f32 0.0, %v1494
    %1496 = vmatmul.f32.gmra.mxu0 %v1416
    %v1497 = vpop.f32.mrf.mxu0
    %v1498 = vadd.f32 0.0, %v1497
    %1499 = vmatmul.f32.gmra.mxu0 %v1419
    %v1500 = vpop.f32.mrf.mxu0
    %v1501 = vadd.f32 0.0, %v1500
    %1502 = vmatmul.f32.gmra.mxu0 %v1422
    %v1503 = vpop.f32.mrf.mxu0
    %v1504 = vadd.f32 0.0, %v1503
    %1505 = vdwg.mxu0
    %v1506 = vsub.f32 %v1442, %v1463
    %v1507 = vsub.f32 %v1483, %v1504
    %v1508 = vsub.f32 %v1445, %v1460
    %v1509 = vsub.f32 %v1486, %v1501
    %v1510 = vsub.f32 %v1448, %v1457
    %v1511 = vsub.f32 %v1489, %v1498
    %v1512 = vsub.f32 %v1451, %v1454
    %v1513 = vsub.f32 %v1492, %v1495
    %v1514 = vsub.f32 %v1454, %v1451
    %v1515 = vsub.f32 %v1495, %v1492
    %v1516 = vsub.f32 %v1457, %v1448
    %v1517 = vsub.f32 %v1498, %v1489
    %v1518 = vsub.f32 %v1460, %v1445
    %v1519 = vsub.f32 %v1501, %v1486
    %v1520 = vsub.f32 %v1463, %v1442
    %v1521 = vsub.f32 %v1504, %v1483
    %v1522 = vmul.f32 %v516, %v1506
    %v1523 = vmul.f32 %v517, %v1507
    %v1524 = vmul.f32 %v516, %v1508
    %v1525 = vmul.f32 %v517, %v1509
    %v1526 = vmul.f32 %v516, %v1510
    %v1527 = vmul.f32 %v517, %v1511
    %v1528 = vmul.f32 %v516, %v1512
    %v1529 = vmul.f32 %v517, %v1513
    %v1530 = vmul.f32 %v516, %v1514
    %v1531 = vmul.f32 %v517, %v1515
    %v1532 = vmul.f32 %v516, %v1516
    %v1533 = vmul.f32 %v517, %v1517
    %v1534 = vmul.f32 %v516, %v1518
    %v1535 = vmul.f32 %v517, %v1519
    %v1536 = vmul.f32 %v516, %v1520
    %v1537 = vmul.f32 %v517, %v1521
    %v1538 = vadd.f32 %v1463, %v1522
    %v1539 = vadd.f32 %v1504, %v1523
    %v1540 = vadd.f32 %v1460, %v1524
    %v1541 = vadd.f32 %v1501, %v1525
    %v1542 = vadd.f32 %v1457, %v1526
    %v1543 = vadd.f32 %v1498, %v1527
    %v1544 = vadd.f32 %v1454, %v1528
    %v1545 = vadd.f32 %v1495, %v1529
    %v1546 = vadd.f32 %v1451, %v1530
    %v1547 = vadd.f32 %v1492, %v1531
    %v1548 = vadd.f32 %v1448, %v1532
    %v1549 = vadd.f32 %v1489, %v1533
    %v1550 = vadd.f32 %v1445, %v1534
    %v1551 = vadd.f32 %v1486, %v1535
    %v1552 = vadd.f32 %v1442, %v1536
    %v1553 = vadd.f32 %v1483, %v1537
    %v1554 = vld [vmem:[%s11] sm:$0x3]
    %v1556 = vperm.slane %v1554, 0
    %v1557 = vperm.slane %v1554, 1
    %v1560 = vadd.f32 %v1538, %v1556
    %v1561 = vadd.f32 %v1539, %v1557
    %v1562 = vadd.f32 %v1540, %v1556
    %v1563 = vadd.f32 %v1541, %v1557
    %v1564 = vadd.f32 %v1542, %v1556
    %v1565 = vadd.f32 %v1543, %v1557
    %v1566 = vadd.f32 %v1544, %v1556
    %v1567 = vadd.f32 %v1545, %v1557
    %v1568 = vadd.f32 %v1546, %v1556
    %v1569 = vadd.f32 %v1547, %v1557
    %v1570 = vadd.f32 %v1548, %v1556
    %v1571 = vadd.f32 %v1549, %v1557
    %v1572 = vadd.f32 %v1550, %v1556
    %v1573 = vadd.f32 %v1551, %v1557
    %v1574 = vadd.f32 %v1552, %v1556
    %v1575 = vadd.f32 %v1553, %v1557
    %v1576 = vld [vmem:[%s10] sm:$0xff]
    %v1577 = vld [vmem:[%s10 + $0x8] sm:$0xff]
    %v1578 = vld [vmem:[%s10 + $0x10] sm:$0xff]
    %v1579 = vld [vmem:[%s10 + $0x18] sm:$0xff]
    %v1580 = vld [vmem:[%s10 + $0x20] sm:$0xff]
    %v1581 = vld [vmem:[%s10 + $0x28] sm:$0xff]
    %v1582 = vld [vmem:[%s10 + $0x30] sm:$0xff]
    %v1583 = vld [vmem:[%s10 + $0x38] sm:$0xff]
    %v1584 = vld [vmem:[%s10 + $0x40] sm:$0xff]
    %v1585 = vld [vmem:[%s10 + $0x48] sm:$0xff]
    %v1586 = vld [vmem:[%s10 + $0x50] sm:$0xff]
    %v1587 = vld [vmem:[%s10 + $0x58] sm:$0xff]
    %v1588 = vld [vmem:[%s10 + $0x60] sm:$0xff]
    %v1589 = vld [vmem:[%s10 + $0x68] sm:$0xff]
    %v1590 = vld [vmem:[%s10 + $0x70] sm:$0xff]
    %v1591 = vld [vmem:[%s10 + $0x78] sm:$0xff]
    %1592 = vmatpush.msra.mxu0 0.0
    %1593 = vmatpush.msra.mxu0 0.0
    %1594 = vmatpush.msra.mxu0 0.0
    %1595 = vmatpush.msra.mxu0 0.0
    %1596 = vmatpush.msra.mxu0 0.0
    %1597 = vmatpush.msra.mxu0 0.0
    %1598 = vmatpush.msra.mxu0 0.0
    %1599 = vmatpush.msra.mxu0 0.0
    %1600 = vmatpush.msra.mxu0 %v1590
    %1601 = vmatpush.msra.mxu0 %v1588
    %1602 = vmatpush.msra.mxu0 %v1586
    %1603 = vmatpush.msra.mxu0 %v1584
    %1604 = vmatpush.msra.mxu0 %v1582
    %1605 = vmatpush.msra.mxu0 %v1580
    %1606 = vmatpush.msra.mxu0 %v1578
    %1607 = vmatpush.msra.mxu0 %v1576
    %1608 = vmatmul.f32.gmra.mxu0 %v591
    %v1609 = vpop.f32.mrf.mxu0
    %v1610 = vadd.f32 0.0, %v1609
    %1611 = vdwg.mxu0
    %1612 = vmatpush.msra.mxu0 0.0
    %1613 = vmatpush.msra.mxu0 0.0
    %1614 = vmatpush.msra.mxu0 0.0
    %1615 = vmatpush.msra.mxu0 0.0
    %1616 = vmatpush.msra.mxu0 0.0
    %1617 = vmatpush.msra.mxu0 0.0
    %1618 = vmatpush.msra.mxu0 0.0
    %1619 = vmatpush.msra.mxu0 0.0
    %1620 = vmatpush.msra.mxu0 %v1591
    %1621 = vmatpush.msra.mxu0 %v1589
    %1622 = vmatpush.msra.mxu0 %v1587
    %1623 = vmatpush.msra.mxu0 %v1585
    %1624 = vmatpush.msra.mxu0 %v1583
    %1625 = vmatpush.msra.mxu0 %v1581
    %1626 = vmatpush.msra.mxu0 %v1579
    %1627 = vmatpush.msra.mxu0 %v1577
    %1628 = vmatmul.f32.gmra.mxu0 %v591
    %v1629 = vpop.f32.mrf.mxu0
    %v1630 = vadd.f32 0.0, %v1629
    %1631 = vdwg.mxu0
    %v1632 = vadd.f32 %v1560, %v1610
    %v1633 = vadd.f32 %v1561, %v1630
    %v1634 = vxor.u32 %v1632, 2147483648
    %v1635 = vmul.f32 %v1634, 1.442695
    %v1636 = vpow.pop %v1635
    %v1637 = vadd.f32 %v1636, 1.0
    %v1638 = vrcp.pop %v1637
    %v1639 = vmul.f32 %v1637, %v1638
    %v1640 = vsub.f32 1.0, %v1639
    %v1641 = vmul.f32 %v1638, %v1640
    %v1642 = vadd.f32 %v1638, %v1641
    %vm1643 = vweird.f32 %v1637
    %vm1644 = vweird.f32 %v1638
    %vm1645 = vmor %vm1643, %vm1644
    %v1646 = vsel %vm1645, %v1638, %v1642
    %v1647 = vand.u32 2147483647, %v1637
    %vm1648 = vcmp.eq.f32.partialorder %v1647, 8.507059e+37
    %v1649 = vand.u32 %v1637, 2147483648
    %v1650 = vor.u32 1.1754944e-38, %v1649
    %v1651 = vsel %vm1648, %v1650, %v1646
    %v1652 = vmul.f32 1.0, %v1651
    %v1653 = vtanh.pop %v1633
    %v1654 = vxor.u32 %v1633, 2147483648
    %v1655 = vmul.f32 %v1654, 1.442695
    %v1656 = vpow.pop %v1655
    %v1657 = vadd.f32 %v1656, 1.0
    %v1658 = vrcp.pop %v1657
    %v1659 = vmul.f32 %v1657, %v1658
    %v1660 = vsub.f32 1.0, %v1659
    %v1661 = vmul.f32 %v1658, %v1660
    %v1662 = vadd.f32 %v1658, %v1661
    %vm1663 = vweird.f32 %v1657
    %vm1664 = vweird.f32 %v1658
    %vm1665 = vmor %vm1663, %vm1664
    %v1666 = vsel %vm1665, %v1658, %v1662
    %v1667 = vand.u32 2147483647, %v1657
    %vm1668 = vcmp.eq.f32.partialorder %v1667, 8.507059e+37
    %v1669 = vand.u32 %v1657, 2147483648
    %v1670 = vor.u32 1.1754944e-38, %v1669
    %v1671 = vsel %vm1668, %v1670, %v1666
    %v1672 = vmul.f32 1.0, %v1671
    %v1673 = vmul.f32 %v1652, 0.0
    %v1674 = vmul.f32 %v1652, %v1653
    %1676 = vrot.lane.b32.xlu0 %v1674, 64
    %v1677 = vpop.permute.xlu0 %1676
    %v1679 = vadd.f32 %v1673, %v1677
    %v1680 = vtanh.pop %v1679
    %v1681 = vmul.f32 %v1672, %v1680
    %1683 = vrot.lane.b32.xlu0 %v1681, 64
    %v1684 = vpop.permute.xlu0 %1683
    %1686 = vst.msk [vmem:[#allocation3] sm:$0xff] %vm267, %v1684
    %1687 = vst.msk [vmem:[#allocation3 + $0x38] sm:$0xff] %vm688, %v1684
    %v1688 = vsel %vm151, %v1684, 0
    %1690 = vmatpush.msra.mxu0 0.0
    %1691 = vmatpush.msra.mxu0 0.0
    %1692 = vmatpush.msra.mxu0 0.0
    %1693 = vmatpush.msra.mxu0 0.0
    %1694 = vmatpush.msra.mxu0 0.0
    %1695 = vmatpush.msra.mxu0 0.0
    %1696 = vmatpush.msra.mxu0 0.0
    %1697 = vmatpush.msra.mxu0 0.0
    %1698 = vmatpush.msra.mxu0 %v1590
    %1699 = vmatpush.msra.mxu0 %v1588
    %1700 = vmatpush.msra.mxu0 %v1586
    %1701 = vmatpush.msra.mxu0 %v1584
    %1702 = vmatpush.msra.mxu0 %v1582
    %1703 = vmatpush.msra.mxu0 %v1580
    %1704 = vmatpush.msra.mxu0 %v1578
    %1705 = vmatpush.msra.mxu0 %v1576
    %1706 = vmatmul.f32.gmra.mxu0 %v1688
    %v1707 = vpop.f32.mrf.mxu0
    %v1708 = vadd.f32 0.0, %v1707
    %1709 = vdwg.mxu0
    %1710 = vmatpush.msra.mxu0 0.0
    %1711 = vmatpush.msra.mxu0 0.0
    %1712 = vmatpush.msra.mxu0 0.0
    %1713 = vmatpush.msra.mxu0 0.0
    %1714 = vmatpush.msra.mxu0 0.0
    %1715 = vmatpush.msra.mxu0 0.0
    %1716 = vmatpush.msra.mxu0 0.0
    %1717 = vmatpush.msra.mxu0 0.0
    %1718 = vmatpush.msra.mxu0 %v1591
    %1719 = vmatpush.msra.mxu0 %v1589
    %1720 = vmatpush.msra.mxu0 %v1587
    %1721 = vmatpush.msra.mxu0 %v1585
    %1722 = vmatpush.msra.mxu0 %v1583
    %1723 = vmatpush.msra.mxu0 %v1581
    %1724 = vmatpush.msra.mxu0 %v1579
    %1725 = vmatpush.msra.mxu0 %v1577
    %1726 = vmatmul.f32.gmra.mxu0 %v1688
    %v1727 = vpop.f32.mrf.mxu0
    %v1728 = vadd.f32 0.0, %v1727
    %1729 = vdwg.mxu0
    %v1730 = vadd.f32 %v1562, %v1708
    %v1731 = vadd.f32 %v1563, %v1728
    %v1732 = vxor.u32 %v1730, 2147483648
    %v1733 = vmul.f32 %v1732, 1.442695
    %v1734 = vpow.pop %v1733
    %v1735 = vadd.f32 %v1734, 1.0
    %v1736 = vrcp.pop %v1735
    %v1737 = vmul.f32 %v1735, %v1736
    %v1738 = vsub.f32 1.0, %v1737
    %v1739 = vmul.f32 %v1736, %v1738
    %v1740 = vadd.f32 %v1736, %v1739
    %vm1741 = vweird.f32 %v1735
    %vm1742 = vweird.f32 %v1736
    %vm1743 = vmor %vm1741, %vm1742
    %v1744 = vsel %vm1743, %v1736, %v1740
    %v1745 = vand.u32 2147483647, %v1735
    %vm1746 = vcmp.eq.f32.partialorder %v1745, 8.507059e+37
    %v1747 = vand.u32 %v1735, 2147483648
    %v1748 = vor.u32 1.1754944e-38, %v1747
    %v1749 = vsel %vm1746, %v1748, %v1744
    %v1750 = vmul.f32 1.0, %v1749
    %v1751 = vtanh.pop %v1731
    %v1752 = vxor.u32 %v1731, 2147483648
    %v1753 = vmul.f32 %v1752, 1.442695
    %v1754 = vpow.pop %v1753
    %v1755 = vadd.f32 %v1754, 1.0
    %v1756 = vrcp.pop %v1755
    %v1757 = vmul.f32 %v1755, %v1756
    %v1758 = vsub.f32 1.0, %v1757
    %v1759 = vmul.f32 %v1756, %v1758
    %v1760 = vadd.f32 %v1756, %v1759
    %vm1761 = vweird.f32 %v1755
    %vm1762 = vweird.f32 %v1756
    %vm1763 = vmor %vm1761, %vm1762
    %v1764 = vsel %vm1763, %v1756, %v1760
    %v1765 = vand.u32 2147483647, %v1755
    %vm1766 = vcmp.eq.f32.partialorder %v1765, 8.507059e+37
    %v1767 = vand.u32 %v1755, 2147483648
    %v1768 = vor.u32 1.1754944e-38, %v1767
    %v1769 = vsel %vm1766, %v1768, %v1764
    %v1770 = vmul.f32 1.0, %v1769
    %v1771 = vmul.f32 %v1750, %v1679
    %v1772 = vmul.f32 %v1750, %v1751
    %1774 = vrot.lane.b32.xlu0 %v1772, 64
    %v1775 = vpop.permute.xlu0 %1774
    %v1777 = vadd.f32 %v1771, %v1775
    %v1778 = vtanh.pop %v1777
    %v1779 = vmul.f32 %v1770, %v1778
    %1781 = vrot.lane.b32.xlu0 %v1779, 64
    %v1782 = vpop.permute.xlu0 %1781
    %1784 = vst.msk [vmem:[#allocation3 + $0x8] sm:$0xff] %vm267, %v1782
    %1785 = vst.msk [vmem:[#allocation3 + $0x30] sm:$0xff] %vm688, %v1782
    %v1786 = vsel %vm151, %v1782, 0
    %1788 = vmatpush.msra.mxu0 0.0
    %1789 = vmatpush.msra.mxu0 0.0
    %1790 = vmatpush.msra.mxu0 0.0
    %1791 = vmatpush.msra.mxu0 0.0
    %1792 = vmatpush.msra.mxu0 0.0
    %1793 = vmatpush.msra.mxu0 0.0
    %1794 = vmatpush.msra.mxu0 0.0
    %1795 = vmatpush.msra.mxu0 0.0
    %1796 = vmatpush.msra.mxu0 %v1590
    %1797 = vmatpush.msra.mxu0 %v1588
    %1798 = vmatpush.msra.mxu0 %v1586
    %1799 = vmatpush.msra.mxu0 %v1584
    %1800 = vmatpush.msra.mxu0 %v1582
    %1801 = vmatpush.msra.mxu0 %v1580
    %1802 = vmatpush.msra.mxu0 %v1578
    %1803 = vmatpush.msra.mxu0 %v1576
    %1804 = vmatmul.f32.gmra.mxu0 %v1786
    %v1805 = vpop.f32.mrf.mxu0
    %v1806 = vadd.f32 0.0, %v1805
    %1807 = vdwg.mxu0
    %1808 = vmatpush.msra.mxu0 0.0
    %1809 = vmatpush.msra.mxu0 0.0
    %1810 = vmatpush.msra.mxu0 0.0
    %1811 = vmatpush.msra.mxu0 0.0
    %1812 = vmatpush.msra.mxu0 0.0
    %1813 = vmatpush.msra.mxu0 0.0
    %1814 = vmatpush.msra.mxu0 0.0
    %1815 = vmatpush.msra.mxu0 0.0
    %1816 = vmatpush.msra.mxu0 %v1591
    %1817 = vmatpush.msra.mxu0 %v1589
    %1818 = vmatpush.msra.mxu0 %v1587
    %1819 = vmatpush.msra.mxu0 %v1585
    %1820 = vmatpush.msra.mxu0 %v1583
    %1821 = vmatpush.msra.mxu0 %v1581
    %1822 = vmatpush.msra.mxu0 %v1579
    %1823 = vmatpush.msra.mxu0 %v1577
    %1824 = vmatmul.f32.gmra.mxu0 %v1786
    %v1825 = vpop.f32.mrf.mxu0
    %v1826 = vadd.f32 0.0, %v1825
    %1827 = vdwg.mxu0
    %v1828 = vadd.f32 %v1564, %v1806
    %v1829 = vadd.f32 %v1565, %v1826
    %v1830 = vxor.u32 %v1828, 2147483648
    %v1831 = vmul.f32 %v1830, 1.442695
    %v1832 = vpow.pop %v1831
    %v1833 = vadd.f32 %v1832, 1.0
    %v1834 = vrcp.pop %v1833
    %v1835 = vmul.f32 %v1833, %v1834
    %v1836 = vsub.f32 1.0, %v1835
    %v1837 = vmul.f32 %v1834, %v1836
    %v1838 = vadd.f32 %v1834, %v1837
    %vm1839 = vweird.f32 %v1833
    %vm1840 = vweird.f32 %v1834
    %vm1841 = vmor %vm1839, %vm1840
    %v1842 = vsel %vm1841, %v1834, %v1838
    %v1843 = vand.u32 2147483647, %v1833
    %vm1844 = vcmp.eq.f32.partialorder %v1843, 8.507059e+37
    %v1845 = vand.u32 %v1833, 2147483648
    %v1846 = vor.u32 1.1754944e-38, %v1845
    %v1847 = vsel %vm1844, %v1846, %v1842
    %v1848 = vmul.f32 1.0, %v1847
    %v1849 = vtanh.pop %v1829
    %v1850 = vxor.u32 %v1829, 2147483648
    %v1851 = vmul.f32 %v1850, 1.442695
    %v1852 = vpow.pop %v1851
    %v1853 = vadd.f32 %v1852, 1.0
    %v1854 = vrcp.pop %v1853
    %v1855 = vmul.f32 %v1853, %v1854
    %v1856 = vsub.f32 1.0, %v1855
    %v1857 = vmul.f32 %v1854, %v1856
    %v1858 = vadd.f32 %v1854, %v1857
    %vm1859 = vweird.f32 %v1853
    %vm1860 = vweird.f32 %v1854
    %vm1861 = vmor %vm1859, %vm1860
    %v1862 = vsel %vm1861, %v1854, %v1858
    %v1863 = vand.u32 2147483647, %v1853
    %vm1864 = vcmp.eq.f32.partialorder %v1863, 8.507059e+37
    %v1865 = vand.u32 %v1853, 2147483648
    %v1866 = vor.u32 1.1754944e-38, %v1865
    %v1867 = vsel %vm1864, %v1866, %v1862
    %v1868 = vmul.f32 1.0, %v1867
    %v1869 = vmul.f32 %v1848, %v1777
    %v1870 = vmul.f32 %v1848, %v1849
    %1872 = vrot.lane.b32.xlu0 %v1870, 64
    %v1873 = vpop.permute.xlu0 %1872
    %v1875 = vadd.f32 %v1869, %v1873
    %v1876 = vtanh.pop %v1875
    %v1877 = vmul.f32 %v1868, %v1876
    %1879 = vrot.lane.b32.xlu0 %v1877, 64
    %v1880 = vpop.permute.xlu0 %1879
    %1882 = vst.msk [vmem:[#allocation3 + $0x10] sm:$0xff] %vm267, %v1880
    %1883 = vst.msk [vmem:[#allocation3 + $0x28] sm:$0xff] %vm688, %v1880
    %v1884 = vsel %vm151, %v1880, 0
    %1886 = vmatpush.msra.mxu0 0.0
    %1887 = vmatpush.msra.mxu0 0.0
    %1888 = vmatpush.msra.mxu0 0.0
    %1889 = vmatpush.msra.mxu0 0.0
    %1890 = vmatpush.msra.mxu0 0.0
    %1891 = vmatpush.msra.mxu0 0.0
    %1892 = vmatpush.msra.mxu0 0.0
    %1893 = vmatpush.msra.mxu0 0.0
    %1894 = vmatpush.msra.mxu0 %v1590
    %1895 = vmatpush.msra.mxu0 %v1588
    %1896 = vmatpush.msra.mxu0 %v1586
    %1897 = vmatpush.msra.mxu0 %v1584
    %1898 = vmatpush.msra.mxu0 %v1582
    %1899 = vmatpush.msra.mxu0 %v1580
    %1900 = vmatpush.msra.mxu0 %v1578
    %1901 = vmatpush.msra.mxu0 %v1576
    %1902 = vmatmul.f32.gmra.mxu0 %v1884
    %v1903 = vpop.f32.mrf.mxu0
    %v1904 = vadd.f32 0.0, %v1903
    %1905 = vdwg.mxu0
    %1906 = vmatpush.msra.mxu0 0.0
    %1907 = vmatpush.msra.mxu0 0.0
    %1908 = vmatpush.msra.mxu0 0.0
    %1909 = vmatpush.msra.mxu0 0.0
    %1910 = vmatpush.msra.mxu0 0.0
    %1911 = vmatpush.msra.mxu0 0.0
    %1912 = vmatpush.msra.mxu0 0.0
    %1913 = vmatpush.msra.mxu0 0.0
    %1914 = vmatpush.msra.mxu0 %v1591
    %1915 = vmatpush.msra.mxu0 %v1589
    %1916 = vmatpush.msra.mxu0 %v1587
    %1917 = vmatpush.msra.mxu0 %v1585
    %1918 = vmatpush.msra.mxu0 %v1583
    %1919 = vmatpush.msra.mxu0 %v1581
    %1920 = vmatpush.msra.mxu0 %v1579
    %1921 = vmatpush.msra.mxu0 %v1577
    %1922 = vmatmul.f32.gmra.mxu0 %v1884
    %v1923 = vpop.f32.mrf.mxu0
    %v1924 = vadd.f32 0.0, %v1923
    %1925 = vdwg.mxu0
    %v1926 = vadd.f32 %v1566, %v1904
    %v1927 = vadd.f32 %v1567, %v1924
    %v1928 = vxor.u32 %v1926, 2147483648
    %v1929 = vmul.f32 %v1928, 1.442695
    %v1930 = vpow.pop %v1929
    %v1931 = vadd.f32 %v1930, 1.0
    %v1932 = vrcp.pop %v1931
    %v1933 = vmul.f32 %v1931, %v1932
    %v1934 = vsub.f32 1.0, %v1933
    %v1935 = vmul.f32 %v1932, %v1934
    %v1936 = vadd.f32 %v1932, %v1935
    %vm1937 = vweird.f32 %v1931
    %vm1938 = vweird.f32 %v1932
    %vm1939 = vmor %vm1937, %vm1938
    %v1940 = vsel %vm1939, %v1932, %v1936
    %v1941 = vand.u32 2147483647, %v1931
    %vm1942 = vcmp.eq.f32.partialorder %v1941, 8.507059e+37
    %v1943 = vand.u32 %v1931, 2147483648
    %v1944 = vor.u32 1.1754944e-38, %v1943
    %v1945 = vsel %vm1942, %v1944, %v1940
    %v1946 = vmul.f32 1.0, %v1945
    %v1947 = vtanh.pop %v1927
    %v1948 = vxor.u32 %v1927, 2147483648
    %v1949 = vmul.f32 %v1948, 1.442695
    %v1950 = vpow.pop %v1949
    %v1951 = vadd.f32 %v1950, 1.0
    %v1952 = vrcp.pop %v1951
    %v1953 = vmul.f32 %v1951, %v1952
    %v1954 = vsub.f32 1.0, %v1953
    %v1955 = vmul.f32 %v1952, %v1954
    %v1956 = vadd.f32 %v1952, %v1955
    %vm1957 = vweird.f32 %v1951
    %vm1958 = vweird.f32 %v1952
    %vm1959 = vmor %vm1957, %vm1958
    %v1960 = vsel %vm1959, %v1952, %v1956
    %v1961 = vand.u32 2147483647, %v1951
    %vm1962 = vcmp.eq.f32.partialorder %v1961, 8.507059e+37
    %v1963 = vand.u32 %v1951, 2147483648
    %v1964 = vor.u32 1.1754944e-38, %v1963
    %v1965 = vsel %vm1962, %v1964, %v1960
    %v1966 = vmul.f32 1.0, %v1965
    %v1967 = vmul.f32 %v1946, %v1875
    %v1968 = vmul.f32 %v1946, %v1947
    %1970 = vrot.lane.b32.xlu0 %v1968, 64
    %v1971 = vpop.permute.xlu0 %1970
    %v1973 = vadd.f32 %v1967, %v1971
    %v1974 = vtanh.pop %v1973
    %v1975 = vmul.f32 %v1966, %v1974
    %1977 = vrot.lane.b32.xlu0 %v1975, 64
    %v1978 = vpop.permute.xlu0 %1977
    %1980 = vst.msk [vmem:[#allocation3 + $0x18] sm:$0xff] %vm267, %v1978
    %1981 = vst.msk [vmem:[#allocation3 + $0x20] sm:$0xff] %vm688, %v1978
    %v1982 = vsel %vm151, %v1978, 0
    %1984 = vmatpush.msra.mxu0 0.0
    %1985 = vmatpush.msra.mxu0 0.0
    %1986 = vmatpush.msra.mxu0 0.0
    %1987 = vmatpush.msra.mxu0 0.0
    %1988 = vmatpush.msra.mxu0 0.0
    %1989 = vmatpush.msra.mxu0 0.0
    %1990 = vmatpush.msra.mxu0 0.0
    %1991 = vmatpush.msra.mxu0 0.0
    %1992 = vmatpush.msra.mxu0 %v1590
    %1993 = vmatpush.msra.mxu0 %v1588
    %1994 = vmatpush.msra.mxu0 %v1586
    %1995 = vmatpush.msra.mxu0 %v1584
    %1996 = vmatpush.msra.mxu0 %v1582
    %1997 = vmatpush.msra.mxu0 %v1580
    %1998 = vmatpush.msra.mxu0 %v1578
    %1999 = vmatpush.msra.mxu0 %v1576
    %2000 = vmatmul.f32.gmra.mxu0 %v1982
    %v2001 = vpop.f32.mrf.mxu0
    %v2002 = vadd.f32 0.0, %v2001
    %2003 = vdwg.mxu0
    %2004 = vmatpush.msra.mxu0 0.0
    %2005 = vmatpush.msra.mxu0 0.0
    %2006 = vmatpush.msra.mxu0 0.0
    %2007 = vmatpush.msra.mxu0 0.0
    %2008 = vmatpush.msra.mxu0 0.0
    %2009 = vmatpush.msra.mxu0 0.0
    %2010 = vmatpush.msra.mxu0 0.0
    %2011 = vmatpush.msra.mxu0 0.0
    %2012 = vmatpush.msra.mxu0 %v1591
    %2013 = vmatpush.msra.mxu0 %v1589
    %2014 = vmatpush.msra.mxu0 %v1587
    %2015 = vmatpush.msra.mxu0 %v1585
    %2016 = vmatpush.msra.mxu0 %v1583
    %2017 = vmatpush.msra.mxu0 %v1581
    %2018 = vmatpush.msra.mxu0 %v1579
    %2019 = vmatpush.msra.mxu0 %v1577
    %2020 = vmatmul.f32.gmra.mxu0 %v1982
    %v2021 = vpop.f32.mrf.mxu0
    %v2022 = vadd.f32 0.0, %v2021
    %2023 = vdwg.mxu0
    %v2024 = vadd.f32 %v1568, %v2002
    %v2025 = vadd.f32 %v1569, %v2022
    %v2026 = vxor.u32 %v2024, 2147483648
    %v2027 = vmul.f32 %v2026, 1.442695
    %v2028 = vpow.pop %v2027
    %v2029 = vadd.f32 %v2028, 1.0
    %v2030 = vrcp.pop %v2029
    %v2031 = vmul.f32 %v2029, %v2030
    %v2032 = vsub.f32 1.0, %v2031
    %v2033 = vmul.f32 %v2030, %v2032
    %v2034 = vadd.f32 %v2030, %v2033
    %vm2035 = vweird.f32 %v2029
    %vm2036 = vweird.f32 %v2030
    %vm2037 = vmor %vm2035, %vm2036
    %v2038 = vsel %vm2037, %v2030, %v2034
    %v2039 = vand.u32 2147483647, %v2029
    %vm2040 = vcmp.eq.f32.partialorder %v2039, 8.507059e+37
    %v2041 = vand.u32 %v2029, 2147483648
    %v2042 = vor.u32 1.1754944e-38, %v2041
    %v2043 = vsel %vm2040, %v2042, %v2038
    %v2044 = vmul.f32 1.0, %v2043
    %v2045 = vtanh.pop %v2025
    %v2046 = vxor.u32 %v2025, 2147483648
    %v2047 = vmul.f32 %v2046, 1.442695
    %v2048 = vpow.pop %v2047
    %v2049 = vadd.f32 %v2048, 1.0
    %v2050 = vrcp.pop %v2049
    %v2051 = vmul.f32 %v2049, %v2050
    %v2052 = vsub.f32 1.0, %v2051
    %v2053 = vmul.f32 %v2050, %v2052
    %v2054 = vadd.f32 %v2050, %v2053
    %vm2055 = vweird.f32 %v2049
    %vm2056 = vweird.f32 %v2050
    %vm2057 = vmor %vm2055, %vm2056
    %v2058 = vsel %vm2057, %v2050, %v2054
    %v2059 = vand.u32 2147483647, %v2049
    %vm2060 = vcmp.eq.f32.partialorder %v2059, 8.507059e+37
    %v2061 = vand.u32 %v2049, 2147483648
    %v2062 = vor.u32 1.1754944e-38, %v2061
    %v2063 = vsel %vm2060, %v2062, %v2058
    %v2064 = vmul.f32 1.0, %v2063
    %v2065 = vmul.f32 %v2044, %v1973
    %v2066 = vmul.f32 %v2044, %v2045
    %2068 = vrot.lane.b32.xlu0 %v2066, 64
    %v2069 = vpop.permute.xlu0 %2068
    %v2071 = vadd.f32 %v2065, %v2069
    %v2072 = vtanh.pop %v2071
    %v2073 = vmul.f32 %v2064, %v2072
    %2075 = vrot.lane.b32.xlu0 %v2073, 64
    %v2076 = vpop.permute.xlu0 %2075
    %2078 = vst.msk [vmem:[#allocation3 + $0x20] sm:$0xff] %vm267, %v2076
    %2079 = vst.msk [vmem:[#allocation3 + $0x18] sm:$0xff] %vm688, %v2076
    %v2080 = vsel %vm151, %v2076, 0
    %2082 = vmatpush.msra.mxu0 0.0
    %2083 = vmatpush.msra.mxu0 0.0
    %2084 = vmatpush.msra.mxu0 0.0
    %2085 = vmatpush.msra.mxu0 0.0
    %2086 = vmatpush.msra.mxu0 0.0
    %2087 = vmatpush.msra.mxu0 0.0
    %2088 = vmatpush.msra.mxu0 0.0
    %2089 = vmatpush.msra.mxu0 0.0
    %2090 = vmatpush.msra.mxu0 %v1590
    %2091 = vmatpush.msra.mxu0 %v1588
    %2092 = vmatpush.msra.mxu0 %v1586
    %2093 = vmatpush.msra.mxu0 %v1584
    %2094 = vmatpush.msra.mxu0 %v1582
    %2095 = vmatpush.msra.mxu0 %v1580
    %2096 = vmatpush.msra.mxu0 %v1578
    %2097 = vmatpush.msra.mxu0 %v1576
    %2098 = vmatmul.f32.gmra.mxu0 %v2080
    %v2099 = vpop.f32.mrf.mxu0
    %v2100 = vadd.f32 0.0, %v2099
    %2101 = vdwg.mxu0
    %2102 = vmatpush.msra.mxu0 0.0
    %2103 = vmatpush.msra.mxu0 0.0
    %2104 = vmatpush.msra.mxu0 0.0
    %2105 = vmatpush.msra.mxu0 0.0
    %2106 = vmatpush.msra.mxu0 0.0
    %2107 = vmatpush.msra.mxu0 0.0
    %2108 = vmatpush.msra.mxu0 0.0
    %2109 = vmatpush.msra.mxu0 0.0
    %2110 = vmatpush.msra.mxu0 %v1591
    %2111 = vmatpush.msra.mxu0 %v1589
    %2112 = vmatpush.msra.mxu0 %v1587
    %2113 = vmatpush.msra.mxu0 %v1585
    %2114 = vmatpush.msra.mxu0 %v1583
    %2115 = vmatpush.msra.mxu0 %v1581
    %2116 = vmatpush.msra.mxu0 %v1579
    %2117 = vmatpush.msra.mxu0 %v1577
    %2118 = vmatmul.f32.gmra.mxu0 %v2080
    %v2119 = vpop.f32.mrf.mxu0
    %v2120 = vadd.f32 0.0, %v2119
    %2121 = vdwg.mxu0
    %v2122 = vadd.f32 %v1570, %v2100
    %v2123 = vadd.f32 %v1571, %v2120
    %v2124 = vxor.u32 %v2122, 2147483648
    %v2125 = vmul.f32 %v2124, 1.442695
    %v2126 = vpow.pop %v2125
    %v2127 = vadd.f32 %v2126, 1.0
    %v2128 = vrcp.pop %v2127
    %v2129 = vmul.f32 %v2127, %v2128
    %v2130 = vsub.f32 1.0, %v2129
    %v2131 = vmul.f32 %v2128, %v2130
    %v2132 = vadd.f32 %v2128, %v2131
    %vm2133 = vweird.f32 %v2127
    %vm2134 = vweird.f32 %v2128
    %vm2135 = vmor %vm2133, %vm2134
    %v2136 = vsel %vm2135, %v2128, %v2132
    %v2137 = vand.u32 2147483647, %v2127
    %vm2138 = vcmp.eq.f32.partialorder %v2137, 8.507059e+37
    %v2139 = vand.u32 %v2127, 2147483648
    %v2140 = vor.u32 1.1754944e-38, %v2139
    %v2141 = vsel %vm2138, %v2140, %v2136
    %v2142 = vmul.f32 1.0, %v2141
    %v2143 = vtanh.pop %v2123
    %v2144 = vxor.u32 %v2123, 2147483648
    %v2145 = vmul.f32 %v2144, 1.442695
    %v2146 = vpow.pop %v2145
    %v2147 = vadd.f32 %v2146, 1.0
    %v2148 = vrcp.pop %v2147
    %v2149 = vmul.f32 %v2147, %v2148
    %v2150 = vsub.f32 1.0, %v2149
    %v2151 = vmul.f32 %v2148, %v2150
    %v2152 = vadd.f32 %v2148, %v2151
    %vm2153 = vweird.f32 %v2147
    %vm2154 = vweird.f32 %v2148
    %vm2155 = vmor %vm2153, %vm2154
    %v2156 = vsel %vm2155, %v2148, %v2152
    %v2157 = vand.u32 2147483647, %v2147
    %vm2158 = vcmp.eq.f32.partialorder %v2157, 8.507059e+37
    %v2159 = vand.u32 %v2147, 2147483648
    %v2160 = vor.u32 1.1754944e-38, %v2159
    %v2161 = vsel %vm2158, %v2160, %v2156
    %v2162 = vmul.f32 1.0, %v2161
    %v2163 = vmul.f32 %v2142, %v2071
    %v2164 = vmul.f32 %v2142, %v2143
    %2166 = vrot.lane.b32.xlu0 %v2164, 64
    %v2167 = vpop.permute.xlu0 %2166
    %v2169 = vadd.f32 %v2163, %v2167
    %v2170 = vtanh.pop %v2169
    %v2171 = vmul.f32 %v2162, %v2170
    %2173 = vrot.lane.b32.xlu0 %v2171, 64
    %v2174 = vpop.permute.xlu0 %2173
    %2176 = vst.msk [vmem:[#allocation3 + $0x28] sm:$0xff] %vm267, %v2174
    %2177 = vst.msk [vmem:[#allocation3 + $0x10] sm:$0xff] %vm688, %v2174
    %v2178 = vsel %vm151, %v2174, 0
    %2180 = vmatpush.msra.mxu0 0.0
    %2181 = vmatpush.msra.mxu0 0.0
    %2182 = vmatpush.msra.mxu0 0.0
    %2183 = vmatpush.msra.mxu0 0.0
    %2184 = vmatpush.msra.mxu0 0.0
    %2185 = vmatpush.msra.mxu0 0.0
    %2186 = vmatpush.msra.mxu0 0.0
    %2187 = vmatpush.msra.mxu0 0.0
    %2188 = vmatpush.msra.mxu0 %v1590
    %2189 = vmatpush.msra.mxu0 %v1588
    %2190 = vmatpush.msra.mxu0 %v1586
    %2191 = vmatpush.msra.mxu0 %v1584
    %2192 = vmatpush.msra.mxu0 %v1582
    %2193 = vmatpush.msra.mxu0 %v1580
    %2194 = vmatpush.msra.mxu0 %v1578
    %2195 = vmatpush.msra.mxu0 %v1576
    %2196 = vmatmul.f32.gmra.mxu0 %v2178
    %v2197 = vpop.f32.mrf.mxu0
    %v2198 = vadd.f32 0.0, %v2197
    %2199 = vdwg.mxu0
    %2200 = vmatpush.msra.mxu0 0.0
    %2201 = vmatpush.msra.mxu0 0.0
    %2202 = vmatpush.msra.mxu0 0.0
    %2203 = vmatpush.msra.mxu0 0.0
    %2204 = vmatpush.msra.mxu0 0.0
    %2205 = vmatpush.msra.mxu0 0.0
    %2206 = vmatpush.msra.mxu0 0.0
    %2207 = vmatpush.msra.mxu0 0.0
    %2208 = vmatpush.msra.mxu0 %v1591
    %2209 = vmatpush.msra.mxu0 %v1589
    %2210 = vmatpush.msra.mxu0 %v1587
    %2211 = vmatpush.msra.mxu0 %v1585
    %2212 = vmatpush.msra.mxu0 %v1583
    %2213 = vmatpush.msra.mxu0 %v1581
    %2214 = vmatpush.msra.mxu0 %v1579
    %2215 = vmatpush.msra.mxu0 %v1577
    %2216 = vmatmul.f32.gmra.mxu0 %v2178
    %v2217 = vpop.f32.mrf.mxu0
    %v2218 = vadd.f32 0.0, %v2217
    %2219 = vdwg.mxu0
    %v2220 = vadd.f32 %v1572, %v2198
    %v2221 = vadd.f32 %v1573, %v2218
    %v2222 = vxor.u32 %v2220, 2147483648
    %v2223 = vmul.f32 %v2222, 1.442695
    %v2224 = vpow.pop %v2223
    %v2225 = vadd.f32 %v2224, 1.0
    %v2226 = vrcp.pop %v2225
    %v2227 = vmul.f32 %v2225, %v2226
    %v2228 = vsub.f32 1.0, %v2227
    %v2229 = vmul.f32 %v2226, %v2228
    %v2230 = vadd.f32 %v2226, %v2229
    %vm2231 = vweird.f32 %v2225
    %vm2232 = vweird.f32 %v2226
    %vm2233 = vmor %vm2231, %vm2232
    %v2234 = vsel %vm2233, %v2226, %v2230
    %v2235 = vand.u32 2147483647, %v2225
    %vm2236 = vcmp.eq.f32.partialorder %v2235, 8.507059e+37
    %v2237 = vand.u32 %v2225, 2147483648
    %v2238 = vor.u32 1.1754944e-38, %v2237
    %v2239 = vsel %vm2236, %v2238, %v2234
    %v2240 = vmul.f32 1.0, %v2239
    %v2241 = vtanh.pop %v2221
    %v2242 = vxor.u32 %v2221, 2147483648
    %v2243 = vmul.f32 %v2242, 1.442695
    %v2244 = vpow.pop %v2243
    %v2245 = vadd.f32 %v2244, 1.0
    %v2246 = vrcp.pop %v2245
    %v2247 = vmul.f32 %v2245, %v2246
    %v2248 = vsub.f32 1.0, %v2247
    %v2249 = vmul.f32 %v2246, %v2248
    %v2250 = vadd.f32 %v2246, %v2249
    %vm2251 = vweird.f32 %v2245
    %vm2252 = vweird.f32 %v2246
    %vm2253 = vmor %vm2251, %vm2252
    %v2254 = vsel %vm2253, %v2246, %v2250
    %v2255 = vand.u32 2147483647, %v2245
    %vm2256 = vcmp.eq.f32.partialorder %v2255, 8.507059e+37
    %v2257 = vand.u32 %v2245, 2147483648
    %v2258 = vor.u32 1.1754944e-38, %v2257
    %v2259 = vsel %vm2256, %v2258, %v2254
    %v2260 = vmul.f32 1.0, %v2259
    %v2261 = vmul.f32 %v2240, %v2169
    %v2262 = vmul.f32 %v2240, %v2241
    %2264 = vrot.lane.b32.xlu0 %v2262, 64
    %v2265 = vpop.permute.xlu0 %2264
    %v2267 = vadd.f32 %v2261, %v2265
    %v2268 = vtanh.pop %v2267
    %v2269 = vmul.f32 %v2260, %v2268
    %2271 = vrot.lane.b32.xlu0 %v2269, 64
    %v2272 = vpop.permute.xlu0 %2271
    %2274 = vst.msk [vmem:[#allocation3 + $0x30] sm:$0xff] %vm267, %v2272
    %2275 = vst.msk [vmem:[#allocation3 + $0x8] sm:$0xff] %vm688, %v2272
    %v2276 = vsel %vm151, %v2272, 0
    %2278 = vmatpush.msra.mxu0 0.0
    %2279 = vmatpush.msra.mxu0 0.0
    %2280 = vmatpush.msra.mxu0 0.0
    %2281 = vmatpush.msra.mxu0 0.0
    %2282 = vmatpush.msra.mxu0 0.0
    %2283 = vmatpush.msra.mxu0 0.0
    %2284 = vmatpush.msra.mxu0 0.0
    %2285 = vmatpush.msra.mxu0 0.0
    %2286 = vmatpush.msra.mxu0 %v1590
    %2287 = vmatpush.msra.mxu0 %v1588
    %2288 = vmatpush.msra.mxu0 %v1586
    %2289 = vmatpush.msra.mxu0 %v1584
    %2290 = vmatpush.msra.mxu0 %v1582
    %2291 = vmatpush.msra.mxu0 %v1580
    %2292 = vmatpush.msra.mxu0 %v1578
    %2293 = vmatpush.msra.mxu0 %v1576
    %2294 = vmatmul.f32.gmra.mxu0 %v2276
    %v2295 = vpop.f32.mrf.mxu0
    %v2296 = vadd.f32 0.0, %v2295
    %2297 = vdwg.mxu0
    %2298 = vmatpush.msra.mxu0 0.0
    %2299 = vmatpush.msra.mxu0 0.0
    %2300 = vmatpush.msra.mxu0 0.0
    %2301 = vmatpush.msra.mxu0 0.0
    %2302 = vmatpush.msra.mxu0 0.0
    %2303 = vmatpush.msra.mxu0 0.0
    %2304 = vmatpush.msra.mxu0 0.0
    %2305 = vmatpush.msra.mxu0 0.0
    %2306 = vmatpush.msra.mxu0 %v1591
    %2307 = vmatpush.msra.mxu0 %v1589
    %2308 = vmatpush.msra.mxu0 %v1587
    %2309 = vmatpush.msra.mxu0 %v1585
    %2310 = vmatpush.msra.mxu0 %v1583
    %2311 = vmatpush.msra.mxu0 %v1581
    %2312 = vmatpush.msra.mxu0 %v1579
    %2313 = vmatpush.msra.mxu0 %v1577
    %2314 = vmatmul.f32.gmra.mxu0 %v2276
    %v2315 = vpop.f32.mrf.mxu0
    %v2316 = vadd.f32 0.0, %v2315
    %2317 = vdwg.mxu0
    %v2318 = vadd.f32 %v1574, %v2296
    %v2319 = vadd.f32 %v1575, %v2316
    %v2320 = vxor.u32 %v2318, 2147483648
    %v2321 = vmul.f32 %v2320, 1.442695
    %v2322 = vpow.pop %v2321
    %v2323 = vadd.f32 %v2322, 1.0
    %v2324 = vrcp.pop %v2323
    %v2325 = vmul.f32 %v2323, %v2324
    %v2326 = vsub.f32 1.0, %v2325
    %v2327 = vmul.f32 %v2324, %v2326
    %v2328 = vadd.f32 %v2324, %v2327
    %vm2329 = vweird.f32 %v2323
    %vm2330 = vweird.f32 %v2324
    %vm2331 = vmor %vm2329, %vm2330
    %v2332 = vsel %vm2331, %v2324, %v2328
    %v2333 = vand.u32 2147483647, %v2323
    %vm2334 = vcmp.eq.f32.partialorder %v2333, 8.507059e+37
    %v2335 = vand.u32 %v2323, 2147483648
    %v2336 = vor.u32 1.1754944e-38, %v2335
    %v2337 = vsel %vm2334, %v2336, %v2332
    %v2338 = vmul.f32 1.0, %v2337
    %v2339 = vtanh.pop %v2319
    %v2340 = vxor.u32 %v2319, 2147483648
    %v2341 = vmul.f32 %v2340, 1.442695
    %v2342 = vpow.pop %v2341
    %v2343 = vadd.f32 %v2342, 1.0
    %v2344 = vrcp.pop %v2343
    %v2345 = vmul.f32 %v2343, %v2344
    %v2346 = vsub.f32 1.0, %v2345
    %v2347 = vmul.f32 %v2344, %v2346
    %v2348 = vadd.f32 %v2344, %v2347
    %vm2349 = vweird.f32 %v2343
    %vm2350 = vweird.f32 %v2344
    %vm2351 = vmor %vm2349, %vm2350
    %v2352 = vsel %vm2351, %v2344, %v2348
    %v2353 = vand.u32 2147483647, %v2343
    %vm2354 = vcmp.eq.f32.partialorder %v2353, 8.507059e+37
    %v2355 = vand.u32 %v2343, 2147483648
    %v2356 = vor.u32 1.1754944e-38, %v2355
    %v2357 = vsel %vm2354, %v2356, %v2352
    %v2358 = vmul.f32 1.0, %v2357
    %v2359 = vmul.f32 %v2338, %v2267
    %v2360 = vmul.f32 %v2338, %v2339
    %2362 = vrot.lane.b32.xlu0 %v2360, 64
    %v2363 = vpop.permute.xlu0 %2362
    %v2365 = vadd.f32 %v2359, %v2363
    %v2366 = vtanh.pop %v2365
    %v2367 = vmul.f32 %v2358, %v2366
    %2369 = vrot.lane.b32.xlu0 %v2367, 64
    %v2370 = vpop.permute.xlu0 %2369
    %2372 = vst.msk [vmem:[#allocation3 + $0x38] sm:$0xff] %vm267, %v2370
    %2373 = vst.msk [vmem:[#allocation3] sm:$0xff] %vm688, %v2370
    %v2374 = vld [vmem:[#allocation3] sm:$0xff]
    %v2375 = vld [vmem:[#allocation3 + $0x8] sm:$0xff]
    %v2376 = vld [vmem:[#allocation3 + $0x10] sm:$0xff]
    %v2377 = vld [vmem:[#allocation3 + $0x18] sm:$0xff]
    %v2378 = vld [vmem:[#allocation3 + $0x20] sm:$0xff]
    %v2379 = vld [vmem:[#allocation3 + $0x28] sm:$0xff]
    %v2380 = vld [vmem:[#allocation3 + $0x30] sm:$0xff]
    %v2381 = vld [vmem:[#allocation3 + $0x38] sm:$0xff]
    %v2382 = vld [vmem:[%s12] sm:$0x1]
    %v2383 = vld [vmem:[%s13] sm:$0x1]
    %v2384 = vmul.f32 %v2374, %v222
    %v2385 = vmul.f32 %v2375, %v227
    %v2386 = vmul.f32 %v2376, %v232
    %v2387 = vmul.f32 %v2377, %v237
    %v2388 = vmul.f32 %v2378, %v242
    %v2389 = vmul.f32 %v2379, %v247
    %v2390 = vmul.f32 %v2380, %v252
    %v2391 = vmul.f32 %v2381, %v257
    %v2392 = vsel %vm151, %v2384, 0.0
    %v2393 = vsel %vm151, %v2385, 0.0
    %v2394 = vadd.f32 %v2392, %v2393
    %v2395 = vsel %vm151, %v2386, 0.0
    %v2396 = vadd.f32 %v2394, %v2395
    %v2397 = vsel %vm151, %v2387, 0.0
    %v2398 = vadd.f32 %v2396, %v2397
    %v2399 = vsel %vm151, %v2388, 0.0
    %v2400 = vadd.f32 %v2398, %v2399
    %v2401 = vsel %vm151, %v2389, 0.0
    %v2402 = vadd.f32 %v2400, %v2401
    %v2403 = vsel %vm151, %v2390, 0.0
    %v2404 = vadd.f32 %v2402, %v2403
    %v2405 = vsel %vm151, %v2391, 0.0
    %v2406 = vadd.f32 %v2404, %v2405
    %v2407 = vrot.slane %v2406, 4
    %v2408 = vadd.f32 %v2406, %v2407
    %v2409 = vrot.slane %v2408, 2
    %v2410 = vadd.f32 %v2408, %v2409
    %v2411 = vrot.slane %v2410, 1
    %v2412 = vadd.f32 %v2410, %v2411
    %v2413 = vmul.f32 %v2412, %v295
    %v2414 = vsub.f32 %v2374, %v2413
    %v2415 = vsub.f32 %v2375, %v2413
    %v2416 = vsub.f32 %v2376, %v2413
    %v2417 = vsub.f32 %v2377, %v2413
    %v2418 = vsub.f32 %v2378, %v2413
    %v2419 = vsub.f32 %v2379, %v2413
    %v2420 = vsub.f32 %v2380, %v2413
    %v2421 = vsub.f32 %v2381, %v2413
    %v2422 = vmul.f32 %v2414, %v2414
    %v2423 = vmul.f32 %v2415, %v2415
    %v2424 = vmul.f32 %v2416, %v2416
    %v2425 = vmul.f32 %v2417, %v2417
    %v2426 = vmul.f32 %v2418, %v2418
    %v2427 = vmul.f32 %v2419, %v2419
    %v2428 = vmul.f32 %v2420, %v2420
    %v2429 = vmul.f32 %v2421, %v2421
    %v2430 = vmul.f32 %v2422, %v222
    %v2431 = vmul.f32 %v2423, %v227
    %v2432 = vmul.f32 %v2424, %v232
    %v2433 = vmul.f32 %v2425, %v237
    %v2434 = vmul.f32 %v2426, %v242
    %v2435 = vmul.f32 %v2427, %v247
    %v2436 = vmul.f32 %v2428, %v252
    %v2437 = vmul.f32 %v2429, %v257
    %v2438 = vsel %vm151, %v2430, 0.0
    %v2439 = vsel %vm151, %v2431, 0.0
    %v2440 = vadd.f32 %v2438, %v2439
    %v2441 = vsel %vm151, %v2432, 0.0
    %v2442 = vadd.f32 %v2440, %v2441
    %v2443 = vsel %vm151, %v2433, 0.0
    %v2444 = vadd.f32 %v2442, %v2443
    %v2445 = vsel %vm151, %v2434, 0.0
    %v2446 = vadd.f32 %v2444, %v2445
    %v2447 = vsel %vm151, %v2435, 0.0
    %v2448 = vadd.f32 %v2446, %v2447
    %v2449 = vsel %vm151, %v2436, 0.0
    %v2450 = vadd.f32 %v2448, %v2449
    %v2451 = vsel %vm151, %v2437, 0.0
    %v2452 = vadd.f32 %v2450, %v2451
    %v2453 = vrot.slane %v2452, 4
    %v2454 = vadd.f32 %v2452, %v2453
    %v2455 = vrot.slane %v2454, 2
    %v2456 = vadd.f32 %v2454, %v2455
    %v2457 = vrot.slane %v2456, 1
    %v2458 = vadd.f32 %v2456, %v2457
    %v2459 = vmul.f32 %v2458, %v295
    %v2460 = vadd.f32 %v2459, 1e-05
    %v2461 = vrsqrt.pop %v2460
    %v2462 = vmul.f32 %v2461, %v2460
    %v2463 = vmul.f32 %v2462, %v2461
    %v2464 = vmul.f32 0.5, %v2463
    %v2465 = vsub.f32 1.5, %v2464
    %v2466 = vmul.f32 %v2461, %v2465
    %vm2467 = vweird.f32 %v2460
    %vm2468 = vweird.f32 %v2461
    %vm2469 = vmor %vm2467, %vm2468
    %v2470 = vsel %vm2469, %v2461, %v2466
    %v2471 = vmul.f32 %v2414, %v2470
    %v2472 = vmul.f32 %v2415, %v2470
    %v2473 = vmul.f32 %v2416, %v2470
    %v2474 = vmul.f32 %v2417, %v2470
    %v2475 = vmul.f32 %v2418, %v2470
    %v2476 = vmul.f32 %v2419, %v2470
    %v2477 = vmul.f32 %v2420, %v2470
    %v2478 = vmul.f32 %v2421, %v2470
    %v2480 = vperm.slane %v2382, 0
    %v2482 = vmul.f32 %v2471, %v2480
    %v2483 = vmul.f32 %v2472, %v2480
    %v2484 = vmul.f32 %v2473, %v2480
    %v2485 = vmul.f32 %v2474, %v2480
    %v2486 = vmul.f32 %v2475, %v2480
    %v2487 = vmul.f32 %v2476, %v2480
    %v2488 = vmul.f32 %v2477, %v2480
    %v2489 = vmul.f32 %v2478, %v2480
    %v2491 = vperm.slane %v2383, 0
    %v2493 = vadd.f32 %v2482, %v2491
    %v2494 = vadd.f32 %v2483, %v2491
    %v2495 = vadd.f32 %v2484, %v2491
    %v2496 = vadd.f32 %v2485, %v2491
    %v2497 = vadd.f32 %v2486, %v2491
    %v2498 = vadd.f32 %v2487, %v2491
    %v2499 = vadd.f32 %v2488, %v2491
    %v2500 = vadd.f32 %v2489, %v2491
    %v2501 = vld [vmem:[%s14] sm:$0x1]
    %v2503 = vperm.slane %v2501, 0
    %v2505 = vmul.f32 %v2493, %v2503
    %v2506 = vmul.f32 %v2494, %v2503
    %v2507 = vmul.f32 %v2495, %v2503
    %v2508 = vmul.f32 %v2496, %v2503
    %v2509 = vmul.f32 %v2497, %v2503
    %v2510 = vmul.f32 %v2498, %v2503
    %v2511 = vmul.f32 %v2499, %v2503
    %v2512 = vmul.f32 %v2500, %v2503
    %v2513 = vsel %vm151, %v2505, 0.0
    %2514 = vadd.xlane.f32.xlu0 %v2513
    %v2515 = vpop.xlane.xlu0 %2514
    %v2516 = vsel %vm151, %v2506, 0.0
    %2517 = vadd.xlane.f32.xlu0 %v2516
    %v2518 = vpop.xlane.xlu0 %2517
    %v2519 = vsel %vm151, %v2507, 0.0
    %2520 = vadd.xlane.f32.xlu0 %v2519
    %v2521 = vpop.xlane.xlu0 %2520
    %v2522 = vsel %vm151, %v2508, 0.0
    %2523 = vadd.xlane.f32.xlu0 %v2522
    %v2524 = vpop.xlane.xlu0 %2523
    %v2525 = vsel %vm151, %v2509, 0.0
    %2526 = vadd.xlane.f32.xlu0 %v2525
    %v2527 = vpop.xlane.xlu0 %2526
    %v2528 = vsel %vm151, %v2510, 0.0
    %2529 = vadd.xlane.f32.xlu0 %v2528
    %v2530 = vpop.xlane.xlu0 %2529
    %v2531 = vsel %vm151, %v2511, 0.0
    %2532 = vadd.xlane.f32.xlu0 %v2531
    %v2533 = vpop.xlane.xlu0 %2532
    %v2534 = vsel %vm151, %v2512, 0.0
    %2535 = vadd.xlane.f32.xlu0 %v2534
    %v2536 = vpop.xlane.xlu0 %2535
    %v2537 = vld [vmem:[#allocation4] sm:$0x1]
    %v2539 = vperm.slane %v2537, 0
    %v2541 = vadd.f32 %v2515, %v2539
    %v2542 = vadd.f32 %v2518, %v2539
    %v2543 = vadd.f32 %v2521, %v2539
    %v2544 = vadd.f32 %v2524, %v2539
    %v2545 = vadd.f32 %v2527, %v2539
    %v2546 = vadd.f32 %v2530, %v2539
    %v2547 = vadd.f32 %v2533, %v2539
    %v2548 = vadd.f32 %v2536, %v2539
    %v2549 = vmax.f32 %v2541, %v2542
    %v2550 = vmax.f32 %v2549, %v2543
    %v2551 = vmax.f32 %v2550, %v2544
    %v2552 = vmax.f32 %v2551, %v2545
    %v2553 = vmax.f32 %v2552, %v2546
    %v2554 = vmax.f32 %v2553, %v2547
    %v2555 = vmax.f32 %v2554, %v2548
    %v2556 = vsub.f32 %v2541, %v2555
    %v2557 = vmul.f32 %v2556, 1.442695
    %v2558 = vpow.pop %v2557
    %v2559 = vsub.f32 %v2542, %v2555
    %v2560 = vmul.f32 %v2559, 1.442695
    %v2561 = vpow.pop %v2560
    %v2562 = vsub.f32 %v2543, %v2555
    %v2563 = vmul.f32 %v2562, 1.442695
    %v2564 = vpow.pop %v2563
    %v2565 = vsub.f32 %v2544, %v2555
    %v2566 = vmul.f32 %v2565, 1.442695
    %v2567 = vpow.pop %v2566
    %v2568 = vsub.f32 %v2545, %v2555
    %v2569 = vmul.f32 %v2568, 1.442695
    %v2570 = vpow.pop %v2569
    %v2571 = vsub.f32 %v2546, %v2555
    %v2572 = vmul.f32 %v2571, 1.442695
    %v2573 = vpow.pop %v2572
    %v2574 = vsub.f32 %v2547, %v2555
    %v2575 = vmul.f32 %v2574, 1.442695
    %v2576 = vpow.pop %v2575
    %v2577 = vsub.f32 %v2548, %v2555
    %v2578 = vmul.f32 %v2577, 1.442695
    %v2579 = vpow.pop %v2578
    %2581 = vset.pattern.permute.xlu0 0
    %2582 = vperm.xlu0 %2581, %v2558
    %v2583 = vpop.permute.xlu0 %2582
    %v2585 = vmul.f32 %v2583, %v2493
    %v2586 = vadd.f32 %v2558, %v2561
    %2588 = vset.pattern.permute.xlu0 0
    %2589 = vperm.xlu0 %2588, %v2561
    %v2590 = vpop.permute.xlu0 %2589
    %v2592 = vmul.f32 %v2590, %v2494
    %v2593 = vadd.f32 %v2585, %v2592
    %v2594 = vadd.f32 %v2586, %v2564
    %2596 = vset.pattern.permute.xlu0 0
    %2597 = vperm.xlu0 %2596, %v2564
    %v2598 = vpop.permute.xlu0 %2597
    %v2600 = vmul.f32 %v2598, %v2495
    %v2601 = vadd.f32 %v2593, %v2600
    %v2602 = vadd.f32 %v2594, %v2567
    %2604 = vset.pattern.permute.xlu0 0
    %2605 = vperm.xlu0 %2604, %v2567
    %v2606 = vpop.permute.xlu0 %2605
    %v2608 = vmul.f32 %v2606, %v2496
    %v2609 = vadd.f32 %v2601, %v2608
    %v2610 = vadd.f32 %v2602, %v2570
    %2612 = vset.pattern.permute.xlu0 0
    %2613 = vperm.xlu0 %2612, %v2570
    %v2614 = vpop.permute.xlu0 %2613
    %v2616 = vmul.f32 %v2614, %v2497
    %v2617 = vadd.f32 %v2609, %v2616
    %v2618 = vadd.f32 %v2610, %v2573
    %2620 = vset.pattern.permute.xlu0 0
    %2621 = vperm.xlu0 %2620, %v2573
    %v2622 = vpop.permute.xlu0 %2621
    %v2624 = vmul.f32 %v2622, %v2498
    %v2625 = vadd.f32 %v2617, %v2624
    %v2626 = vadd.f32 %v2618, %v2576
    %2628 = vset.pattern.permute.xlu0 0
    %2629 = vperm.xlu0 %2628, %v2576
    %v2630 = vpop.permute.xlu0 %2629
    %v2632 = vmul.f32 %v2630, %v2499
    %v2633 = vadd.f32 %v2625, %v2632
    %v2634 = vadd.f32 %v2626, %v2579
    %2636 = vset.pattern.permute.xlu0 0
    %2637 = vperm.xlu0 %2636, %v2579
    %v2638 = vpop.permute.xlu0 %2637
    %v2640 = vmul.f32 %v2638, %v2500
    %v2641 = vadd.f32 %v2633, %v2640
    %2643 = vset.pattern.permute.xlu0 0
    %2644 = vperm.xlu0 %2643, %v2634
    %v2645 = vpop.permute.xlu0 %2644
    %v2647 = vrcp.pop %v2645
    %v2648 = vmul.f32 %v2645, %v2647
    %v2649 = vsub.f32 1.0, %v2648
    %v2650 = vmul.f32 %v2647, %v2649
    %v2651 = vadd.f32 %v2647, %v2650
    %vm2652 = vweird.f32 %v2645
    %vm2653 = vweird.f32 %v2647
    %vm2654 = vmor %vm2652, %vm2653
    %v2655 = vsel %vm2654, %v2647, %v2651
    %v2656 = vand.u32 2147483647, %v2645
    %vm2657 = vcmp.eq.f32.partialorder %v2656, 8.507059e+37
    %v2658 = vand.u32 %v2645, 2147483648
    %v2659 = vor.u32 1.1754944e-38, %v2658
    %v2660 = vsel %vm2657, %v2659, %v2655
    %v2661 = vmul.f32 %v2641, %v2660
    %v2662 = vld [vmem:[%s16] sm:$0xff]
    %v2663 = vld [vmem:[%s16 + $0x8] sm:$0xff]
    %v2664 = vld [vmem:[%s16 + $0x10] sm:$0xff]
    %v2665 = vld [vmem:[%s16 + $0x18] sm:$0xff]
    %v2666 = vld [vmem:[%s16 + $0x20] sm:$0xff]
    %v2667 = vld [vmem:[%s16 + $0x28] sm:$0xff]
    %v2668 = vld [vmem:[%s16 + $0x30] sm:$0xff]
    %v2669 = vld [vmem:[%s16 + $0x38] sm:$0xff]
    %v2670 = vld [vmem:[%s17] sm:$0x1]
    %v2672 = vperm.slane %v2670, 0
    %v2675 = vsel %vm151, %v2661, 0
    %2677 = vmatpush.msra.mxu0 0.0
    %2678 = vmatpush.msra.mxu0 0.0
    %2679 = vmatpush.msra.mxu0 0.0
    %2680 = vmatpush.msra.mxu0 0.0
    %2681 = vmatpush.msra.mxu0 0.0
    %2682 = vmatpush.msra.mxu0 0.0
    %2683 = vmatpush.msra.mxu0 0.0
    %2684 = vmatpush.msra.mxu0 0.0
    %2685 = vmatpush.msra.mxu0 %v2669
    %2686 = vmatpush.msra.mxu0 %v2668
    %2687 = vmatpush.msra.mxu0 %v2667
    %2688 = vmatpush.msra.mxu0 %v2666
    %2689 = vmatpush.msra.mxu0 %v2665
    %2690 = vmatpush.msra.mxu0 %v2664
    %2691 = vmatpush.msra.mxu0 %v2663
    %2692 = vmatpush.msra.mxu0 %v2662
    %2693 = vmatmul.f32.gmra.mxu0 %v2675
    %v2694 = vpop.f32.mrf.mxu0
    %v2695 = vadd.f32 %v2672, %v2694
    %2696 = vdwg.mxu0
    %2697 = vst [vmem:[%s18] sm:$0xff] %v2695
    // Predicated region
    $region78: #{poetry_rnn_forward.1} parent=1 // pred_check
      _
    $region79: #{poetry_rnn_forward.1} parent=1 // pred_check_branch
      %2699 = sbr.rel (0) target = $region81
    $region80: #{poetry_rnn_forward.1} parent=1 // pred_region
      _
    $region81: #{poetry_rnn_forward.1} parent=1 // pred_fallthru
      _
    // Predicated region
    $region82: #{poetry_rnn_forward.1} parent=1 // pred_check
      _
    $region83: #{poetry_rnn_forward.1} parent=1 // pred_check_branch
      %2701 = sbr.rel (0) target = $region85
    $region84: #{poetry_rnn_forward.1} parent=1 // pred_region
      _
    $region85: #{poetry_rnn_forward.1} parent=1 // pred_fallthru
      _
    %2702 = vsyncpa [#allocation6], 1

</llo_original>
